<compile_context>
chip_gen: v5e
topology: v5e:2x2
jax: 0.10.0
libtpu: 0.0.40
codegen_flags: <defaults>
</compile_context>

<pallas_src>
import functools

import jax
import jax.numpy as jnp
from jax import lax
from jax.experimental import pallas as pl
from jax.experimental.pallas import tpu as pltpu

EPS = 1e-5
NEG_SLOPE = 0.01          # nn.LeakyReLU() default
LANE = 128
TILE_ROWS = 512           # row-tile target; shrunk automatically for small layers

_CPARAMS = pltpu.CompilerParams(
    dimension_semantics=("parallel",),            # shards R tiles across v7x's 2 TCs
    vmem_limit_bytes=48 * 1024 * 1024,            # fits v7x's 64 MiB VMEM with headroom
)


def _round_up(x, m):
    return (x + m - 1) // m * m


# ------------------------------- Pallas kernels -------------------------------

def _matmul_stats_kernel(p_ref, w_ref, o_ref, st_ref, *, act):
    """conv-as-matmul on the MXU (bf16 in / f32 acc) + per-tile BN partial stats."""
    acc = jnp.dot(p_ref[...], w_ref[...], preferred_element_type=jnp.float32)
    if act == "sigmoid":
        o_ref[...] = jax.nn.sigmoid(acc)
    else:
        o_ref[...] = acc
    # per-tile partial sum / sum-of-squares over rows (zero-padded rows contribute 0)
    st_ref[...] = jnp.zeros_like(st_ref)
    st_ref[0:1, :] = jnp.sum(acc, axis=0, keepdims=True)
    st_ref[1:2, :] = jnp.sum(acc * acc, axis=0, keepdims=True)


def _scale_shift_lrelu_kernel(x_ref, a_ref, o_ref):
    """Fused BatchNorm (precomputed per-channel scale/shift) + LeakyReLU."""
    y = x_ref[...] * a_ref[0:1, :] + a_ref[1:2, :]
    o_ref[...] = jnp.where(y >= 0.0, y, NEG_SLOPE * y)


def conv_matmul(patches, wmat, act, tile_rows):
    """patches (Rp,Kp) bf16 @ wmat (Kp,Cp) bf16 -> (out (Rp,Cp) f32, sum (Cp,), sumsq (Cp,))."""
    Rp, Kp = patches.shape
    Cp = wmat.shape[1]
    nt = Rp // tile_rows
    out, stats = pl.pallas_call(
        functools.partial(_matmul_stats_kernel, act=act),
        out_shape=(jax.ShapeDtypeStruct((Rp, Cp), jnp.float32),
                   jax.ShapeDtypeStruct((nt * 8, Cp), jnp.float32)),
        grid=(nt,),
        in_specs=[pl.BlockSpec((tile_rows, Kp), lambda i: (i, 0)),
                  pl.BlockSpec((Kp, Cp), lambda i: (0, 0))],     # resident weights
        out_specs=(pl.BlockSpec((tile_rows, Cp), lambda i: (i, 0)),
                   pl.BlockSpec((8, Cp), lambda i: (i, 0))),
        compiler_params=_CPARAMS,
    )(patches, wmat)
    st = stats.reshape(nt, 8, Cp)
    return out, st[:, 0, :].sum(axis=0), st[:, 1, :].sum(axis=0)


def bn_lrelu(x, scale, shift, tile_rows):
    """x (Rp, Cp) f32, scale/shift (Cp,)  ->  LeakyReLU(x * scale + shift)."""
    Rp, Cp = x.shape
    nt = Rp // tile_rows
    aff = jnp.concatenate([scale[None, :], shift[None, :]], axis=0)   # packed (2, Cp)
    return pl.pallas_call(
        _scale_shift_lrelu_kernel,
        out_shape=jax.ShapeDtypeStruct((Rp, Cp), jnp.float32),
        grid=(nt,),
        in_specs=[pl.BlockSpec((tile_rows, Cp), lambda i: (i, 0)),
                  pl.BlockSpec((2, Cp), lambda i: (0, 0))],
        out_specs=pl.BlockSpec((tile_rows, Cp), lambda i: (i, 0)),
        compiler_params=_CPARAMS,
    )(x, aff)


# ------------------------------- JAX glue ------------------------------------

def conv_patches(x_nhwc, k, stride, pad):
    """im2col for a regular (cross-correlation) conv on an NHWC tensor."""
    N, H, W, C = x_nhwc.shape
    OH = (H + 2 * pad - k) // stride + 1
    OW = (W + 2 * pad - k) // stride + 1
    xp = jnp.pad(x_nhwc, ((0, 0), (pad, pad), (pad, pad), (0, 0)))
    cols = []
    for kh in range(k):
        for kw in range(k):
            cols.append(xp[:, kh:kh + (OH - 1) * stride + 1:stride,
                           kw:kw + (OW - 1) * stride + 1:stride, :])
    pat = jnp.stack(cols, axis=3)                      # (N, OH, OW, k*k, C)
    return pat.reshape(N * OH * OW, k * k * C), OH, OW


def conv_weight_matrix(w):
    """Conv2d weight (Cout, Cin, k, k) -> bf16 (Kpad, Cpad) matmul matrix."""
    cout, cin, kh, kw = w.shape
    wm = jnp.transpose(w, (2, 3, 1, 0)).reshape(kh * kw * cin, cout)
    wm = jnp.pad(wm, ((0, _round_up(wm.shape[0], LANE) - wm.shape[0]),
                      (0, _round_up(cout, LANE) - cout)))
    return wm.astype(jnp.bfloat16)


def convt_weight_matrix(w):
    """ConvTranspose2d weight (Cin, Cout, k, k) -> equivalent-conv bf16 (Kpad, Cpad)."""
    cin, cout, kh, kw = w.shape
    wf = w[:, :, ::-1, ::-1]                           # spatial flip
    wm = jnp.transpose(wf, (2, 3, 0, 1)).reshape(kh * kw * cin, cout)
    wm = jnp.pad(wm, ((0, _round_up(wm.shape[0], LANE) - wm.shape[0]),
                      (0, _round_up(cout, LANE) - cout)))
    return wm.astype(jnp.bfloat16)


def run_conv(x_nhwc, wmat, k, stride, pad, act="none"):
    patches, OH, OW = conv_patches(x_nhwc, k, stride, pad)
    R, K = patches.shape
    Kp = wmat.shape[0]
    tile = min(TILE_ROWS, _round_up(R, 8))
    Rp = _round_up(R, tile)
    patches = jnp.pad(patches, ((0, Rp - R), (0, Kp - K))).astype(jnp.bfloat16)
    out, ssum, ssq = conv_matmul(patches, wmat, act, tile)
    return out, ssum, ssq, R, OH, OW, tile


def bn_affine(ssum, ssq, count, gamma, beta, cpad):
    """Fold batch statistics + BN affine params into a single scale/shift pair."""
    mean = ssum / count
    var = jnp.maximum(ssq / count - mean * mean, 0.0)   # biased var, training-mode BN
    scale = gamma * lax.rsqrt(var + EPS)
    shift = beta - mean * scale
    c = gamma.shape[0]
    return jnp.pad(scale, (0, cpad - c)), jnp.pad(shift, (0, cpad - c))


def make_forward(nc, ndf):
    """Layer config (strides / pads / channel counts) is static Python here."""

    def forward(x_nchw, cond, p):
        N = x_nchw.shape[0]
        x = jnp.transpose(x_nchw, (0, 2, 3, 1))                     # NCHW -> NHWC

        # in_cond: ConvTranspose2d(10, ndf, 4, 1) on a 1x1 input == conv with pad k-1=3
        c_nhwc = cond.reshape(N, 1, 1, cond.shape[-1])
        c_out, c_sum, c_ssq, Rc, _, _, _ = run_conv(c_nhwc, p["w_cond"], 4, 1, 3)

        # in_conv: Conv2d(nc, ndf, 4, 2, 1)   (no BN / activation)
        h, _, _, R, OH, OW, _ = run_conv(x, p["w_in"], 4, 2, 1)
        h = h[:R, :ndf].reshape(N, OH, OW, ndf)

        # mid_conv1 -> bn1 -> LeakyReLU
        h, s, q, R, OH, OW, t = run_conv(h, p["w_m1"], 4, 2, 1)
        C = 2 * ndf
        sc, sh = bn_affine(s[:C], q[:C], R, p["g1"], p["b1"], h.shape[1])
        h = bn_lrelu(h, sc, sh, t)[:R, :C].reshape(N, OH, OW, C)

        # mid_conv2 (no activation), concat cond features, bn2, LeakyReLU
        h, s, q, R, OH, OW, _ = run_conv(h, p["w_m2"], 3, 2, 1)
        assert Rc == R, (Rc, R)                 # cond spatial map must be 4x4 like x
        hcat = jnp.concatenate([h[:R, :3 * ndf], c_out[:Rc, :ndf]], axis=1)
        ssum = jnp.concatenate([s[:3 * ndf], c_sum[:ndf]])
        ssq = jnp.concatenate([q[:3 * ndf], c_ssq[:ndf]])
        C = 4 * ndf
        Cp = _round_up(C, LANE)
        t = min(TILE_ROWS, _round_up(R, 8))
        Rp = _round_up(R, t)
        hcat = jnp.pad(hcat, ((0, Rp - R), (0, Cp - C)))
        sc, sh = bn_affine(ssum, ssq, R, p["g2"], p["b2"], Cp)
        h = bn_lrelu(hcat, sc, sh, t)[:R, :C].reshape(N, OH, OW, C)

        # mid_conv3 -> bn3 -> LeakyReLU
        h, s, q, R, OH, OW, t = run_conv(h, p["w_m3"], 3, 1, 1)
        C = 8 * ndf
        sc, sh = bn_affine(s[:C], q[:C], R, p["g3"], p["b3"], h.shape[1])
        h = bn_lrelu(h, sc, sh, t)[:R, :C].reshape(N, OH, OW, C)

        # mid_conv4 -> bn4 -> LeakyReLU
        h, s, q, R, OH, OW, t = run_conv(h, p["w_m4"], 3, 1, 1)
        C = 2 * ndf
        sc, sh = bn_affine(s[:C], q[:C], R, p["g4"], p["b4"], h.shape[1])
        h = bn_lrelu(h, sc, sh, t)[:R, :C].reshape(N, OH, OW, C)

        # out_conv: Conv2d(2*ndf, 1, 4, 1, 0) + sigmoid (fused into the matmul kernel)
        h, _, _, R, OH, OW, _ = run_conv(h, p["w_out"], 4, 1, 0, act="sigmoid")
        out = h[:R, :1].reshape(N, OH, OW, 1)
        return jnp.transpose(out, (0, 3, 1, 2))                     # NHWC -> NCHW

    return forward


def prepare_params(raw):
    """Precompute matmul-form (bf16, lane-padded) weights once, outside the jitted fwd."""
    return {
        "w_cond": convt_weight_matrix(raw["in_cond_w"]),
        "w_in": conv_weight_matrix(raw["in_conv_w"]),
        "w_m1": conv_weight_matrix(raw["mid_conv1_w"]),
        "w_m2": conv_weight_matrix(raw["mid_conv2_w"]),
        "w_m3": conv_weight_matrix(raw["mid_conv3_w"]),
        "w_m4": conv_weight_matrix(raw["mid_conv4_w"]),
        "w_out": conv_weight_matrix(raw["out_conv_w"]),
        "g1": raw["g1"], "b1": raw["b1"], "g2": raw["g2"], "b2": raw["b2"],
        "g3": raw["g3"], "b3": raw["b3"], "g4": raw["g4"], "b4": raw["b4"],
    }


# --------------------------- pure-JAX reference -------------------------------

def reference_forward(x, cond, raw):
    """lax-conv (NCHW) reference with the same bf16-operand / f32-accum precision."""
    def conv(h, w, s, p):
        return lax.conv_general_dilated(
            h.astype(jnp.bfloat16), w.astype(jnp.bfloat16),
            window_strides=(s, s), padding=((p, p), (p, p)),
            dimension_numbers=("NCHW", "OIHW", "NCHW"),
            preferred_element_type=jnp.float32)

    def bn_act(h, g, b):
        mean = h.mean(axis=(0, 2, 3), keepdims=True)
        var = ((h - mean) ** 2).mean(axis=(0, 2, 3), keepdims=True)
        y = (h - mean) * lax.rsqrt(var + EPS) * g.reshape(1, -1, 1, 1) + b.reshape(1, -1, 1, 1)
        return jnp.where(y >= 0.0, y, NEG_SLOPE * y)

    # ConvTranspose2d(10, ndf, 4, 1) on a 1x1 input is a plain contraction over Cin.
    c = jnp.einsum("ni,iohw->nohw",
                   cond.astype(jnp.bfloat16).astype(jnp.float32),
                   raw["in_cond_w"].astype(jnp.bfloat16).astype(jnp.float32))
    h = conv(x, raw["in_conv_w"], 2, 1)
    h = bn_act(conv(h, raw["mid_conv1_w"], 2, 1), raw["g1"], raw["b1"])
    h = conv(h, raw["mid_conv2_w"], 2, 1)
    h = bn_act(jnp.concatenate([h, c], axis=1), raw["g2"], raw["b2"])
    h = bn_act(conv(h, raw["mid_conv3_w"], 1, 1), raw["g3"], raw["b3"])
    h = bn_act(conv(h, raw["mid_conv4_w"], 1, 1), raw["g4"], raw["b4"])
    h = conv(h, raw["out_conv_w"], 1, 0)
    return jax.nn.sigmoid(h)


# ----------------------------------- main -------------------------------------

if __name__ == "__main__":
    nc, ndf, N, H = 3, 16, 2, 32          # 32x32 input -> 4x4 feature map at the concat
    key = jax.random.PRNGKey(0)
    ks = jax.random.split(key, 16)

    raw = {
        "in_cond_w":   0.05 * jax.random.normal(ks[0], (10, ndf, 4, 4), jnp.float32),
        "in_conv_w":   0.05 * jax.random.normal(ks[1], (ndf, nc, 4, 4), jnp.float32),
        "mid_conv1_w": 0.05 * jax.random.normal(ks[2], (2 * ndf, ndf, 4, 4), jnp.float32),
        "mid_conv2_w": 0.05 * jax.random.normal(ks[3], (3 * ndf, 2 * ndf, 3, 3), jnp.float32),
        "mid_conv3_w": 0.05 * jax.random.normal(ks[4], (8 * ndf, 4 * ndf, 3, 3), jnp.float32),
        "mid_conv4_w": 0.05 * jax.random.normal(ks[5], (2 * ndf, 8 * ndf, 3, 3), jnp.float32),
        "out_conv_w":  0.05 * jax.random.normal(ks[6], (1, 2 * ndf, 4, 4), jnp.float32),
        "g1": 1.0 + 0.1 * jax.random.normal(ks[7], (2 * ndf,), jnp.float32),
        "b1": 0.1 * jax.random.normal(ks[8], (2 * ndf,), jnp.float32),
        "g2": 1.0 + 0.1 * jax.random.normal(ks[9], (4 * ndf,), jnp.float32),
        "b2": 0.1 * jax.random.normal(ks[10], (4 * ndf,), jnp.float32),
        "g3": 1.0 + 0.1 * jax.random.normal(ks[11], (8 * ndf,), jnp.float32),
        "b3": 0.1 * jax.random.normal(ks[12], (8 * ndf,), jnp.float32),
        "g4": 1.0 + 0.1 * jax.random.normal(ks[13], (2 * ndf,), jnp.float32),
        "b4": 0.1 * jax.random.normal(ks[14], (2 * ndf,), jnp.float32),
    }
    x = jax.random.normal(ks[15], (N, nc, H, H), jnp.float32)
    cond = jax.random.normal(jax.random.fold_in(key, 123), (N, 10), jnp.float32)

    params = prepare_params(raw)
    fwd = jax.jit(make_forward(nc, ndf))
    out = jax.block_until_ready(fwd(x, cond, params))
    assert out.shape == (N, 1, 1, 1), out.shape

    ref = reference_forward(x, cond, raw)
    err = float(jnp.max(jnp.abs(out - ref)))
    if not (err < 5e-3):
        raise SystemExit(f"mismatch vs reference, max abs err = {err}")
    print("KERNEL_OK")

# TODO(synk): BatchNorm2d running-mean/var updates (a training-time side effect) are not
# reproduced; they do not affect the forward output computed here.
</pallas_src>

<mosaic_0001>
module attributes {stable_mosaic.version = 11 : i64} {
  func.func @_matmul_stats_kernel(%arg0: i32, %arg1: memref<512x128xbf16, #tpu.memory_space<vmem>>, %arg2: memref<128x128xbf16, #tpu.memory_space<vmem>>, %arg3: memref<512x128xf32, #tpu.memory_space<vmem>>, %arg4: memref<8x128xf32, #tpu.memory_space<vmem>>) attributes {dimension_semantics = [#tpu.dimension_semantics<parallel>], iteration_bounds = array<i64: 1>, scalar_prefetch = 0 : i64, scratch_operands = 0 : i64, tpu.core_type = #tpu.core_type<tc>, window_params = [{transform_indices = @transform_0, window_bounds = array<i64: 512, 128>}, {pipeline_mode = #tpu.pipeline_mode<synchronous>, transform_indices = @transform_1, window_bounds = array<i64: 128, 128>}, {transform_indices = @transform_2, window_bounds = array<i64: 512, 128>}, {transform_indices = @transform_3, window_bounds = array<i64: 8, 128>}]} {
    %c0 = arith.constant 0 : index
    %c0_0 = arith.constant 0 : index
    %0 = vector.load %arg1[%c0, %c0_0] : memref<512x128xbf16, #tpu.memory_space<vmem>>, vector<512x128xbf16>
    %c0_1 = arith.constant 0 : index
    %c0_2 = arith.constant 0 : index
    %1 = vector.load %arg2[%c0_1, %c0_2] : memref<128x128xbf16, #tpu.memory_space<vmem>>, vector<128x128xbf16>
    %cst = arith.constant dense<0.000000e+00> : vector<512x128xf32>
    %2 = tpu.matmul %0, %1, %cst {dimension_numbers = #tpu.dot_dimension_numbers<[1], [0], [0], [1], [0, 0, 1, 1], [], []>} : vector<512x128xbf16>, vector<128x128xbf16>, vector<512x128xf32> -> vector<512x128xf32>
    %c0_3 = arith.constant 0 : index
    %c0_4 = arith.constant 0 : index
    %3 = vector.load %arg3[%c0_3, %c0_4] : memref<512x128xf32, #tpu.memory_space<vmem>>, vector<512x128xf32>
    tpu.vector_store %arg3[%c0_3, %c0_4], %2 {strides = array<i32>} : memref<512x128xf32, #tpu.memory_space<vmem>>, vector<512x128xf32>,
    %cst_5 = arith.constant 0.000000e+00 : f32
    %4 = vector.broadcast %cst_5 : f32 to vector<8x128xf32>
    %c0_6 = arith.constant 0 : index
    %c0_7 = arith.constant 0 : index
    %5 = vector.load %arg4[%c0_6, %c0_7] : memref<8x128xf32, #tpu.memory_space<vmem>>, vector<8x128xf32>
    tpu.vector_store %arg4[%c0_6, %c0_7], %4 {strides = array<i32>} : memref<8x128xf32, #tpu.memory_space<vmem>>, vector<8x128xf32>,
    %cst_8 = arith.constant dense<0.000000e+00> : vector<128xf32>
    %6 = vector.multi_reduction <add>, %2, %cst_8 [0] : vector<512x128xf32> to vector<128xf32>
    %7 = vector.shape_cast %6 : vector<128xf32> to vector<1x128xf32>
    %c0_9 = arith.constant 0 : index
    %c0_10 = arith.constant 0 : index
    %8 = vector.load %arg4[%c0_9, %c0_10] : memref<8x128xf32, #tpu.memory_space<vmem>>, vector<1x128xf32>
    tpu.vector_store %arg4[%c0_9, %c0_10], %7 {strides = array<i32>} : memref<8x128xf32, #tpu.memory_space<vmem>>, vector<1x128xf32>,
    %9 = arith.mulf %2, %2 : vector<512x128xf32>
    %cst_11 = arith.constant dense<0.000000e+00> : vector<128xf32>
    %10 = vector.multi_reduction <add>, %9, %cst_11 [0] : vector<512x128xf32> to vector<128xf32>
    %11 = vector.shape_cast %10 : vector<128xf32> to vector<1x128xf32>
    %c1 = arith.constant 1 : index
    %c0_12 = arith.constant 0 : index
    %12 = vector.load %arg4[%c1, %c0_12] : memref<8x128xf32, #tpu.memory_space<vmem>>, vector<1x128xf32>
    tpu.vector_store %arg4[%c1, %c0_12], %11 {strides = array<i32>} : memref<8x128xf32, #tpu.memory_space<vmem>>, vector<1x128xf32>,
    return
  }
  func.func @transform_0(%arg0: i32) -> (i32, i32) {
    %c0_i32 = arith.constant 0 : i32
    %c0_i32_0 = arith.constant 0 : i32
    return %arg0, %c0_i32 : i32, i32
  }
  func.func @transform_1(%arg0: i32) -> (i32, i32) {
    %c0_i32 = arith.constant 0 : i32
    %c0_i32_0 = arith.constant 0 : i32
    %c0_i32_1 = arith.constant 0 : i32
    return %c0_i32, %c0_i32_0 : i32, i32
  }
  func.func @transform_2(%arg0: i32) -> (i32, i32) {
    %c0_i32 = arith.constant 0 : i32
    %c0_i32_0 = arith.constant 0 : i32
    return %arg0, %c0_i32 : i32, i32
  }
  func.func @transform_3(%arg0: i32) -> (i32, i32) {
    %c0_i32 = arith.constant 0 : i32
    %c0_i32_0 = arith.constant 0 : i32
    return %arg0, %c0_i32 : i32, i32
  }
}

module attributes {stable_mosaic.version = 11 : i64} {
  func.func @_matmul_stats_kernel(%arg0: i32, %arg1: memref<128x256xbf16, #tpu.memory_space<vmem>>, %arg2: memref<256x128xbf16, #tpu.memory_space<vmem>>, %arg3: memref<128x128xf32, #tpu.memory_space<vmem>>, %arg4: memref<8x128xf32, #tpu.memory_space<vmem>>) attributes {dimension_semantics = [#tpu.dimension_semantics<parallel>], iteration_bounds = array<i64: 1>, scalar_prefetch = 0 : i64, scratch_operands = 0 : i64, tpu.core_type = #tpu.core_type<tc>, window_params = [{transform_indices = @transform_0, window_bounds = array<i64: 128, 256>}, {pipeline_mode = #tpu.pipeline_mode<synchronous>, transform_indices = @transform_1, window_bounds = array<i64: 256, 128>}, {transform_indices = @transform_2, window_bounds = array<i64: 128, 128>}, {transform_indices = @transform_3, window_bounds = array<i64: 8, 128>}]} {
    %c0 = arith.constant 0 : index
    %c0_0 = arith.constant 0 : index
    %0 = vector.load %arg1[%c0, %c0_0] : memref<128x256xbf16, #tpu.memory_space<vmem>>, vector<128x256xbf16>
    %c0_1 = arith.constant 0 : index
    %c0_2 = arith.constant 0 : index
    %1 = vector.load %arg2[%c0_1, %c0_2] : memref<256x128xbf16, #tpu.memory_space<vmem>>, vector<256x128xbf16>
    %cst = arith.constant dense<0.000000e+00> : vector<128x128xf32>
    %2 = tpu.matmul %0, %1, %cst {dimension_numbers = #tpu.dot_dimension_numbers<[1], [0], [0], [1], [0, 0, 1, 1], [], []>} : vector<128x256xbf16>, vector<256x128xbf16>, vector<128x128xf32> -> vector<128x128xf32>
    %c0_3 = arith.constant 0 : index
    %c0_4 = arith.constant 0 : index
    %3 = vector.load %arg3[%c0_3, %c0_4] : memref<128x128xf32, #tpu.memory_space<vmem>>, vector<128x128xf32>
    tpu.vector_store %arg3[%c0_3, %c0_4], %2 {strides = array<i32>} : memref<128x128xf32, #tpu.memory_space<vmem>>, vector<128x128xf32>,
    %cst_5 = arith.constant 0.000000e+00 : f32
    %4 = vector.broadcast %cst_5 : f32 to vector<8x128xf32>
    %c0_6 = arith.constant 0 : index
    %c0_7 = arith.constant 0 : index
    %5 = vector.load %arg4[%c0_6, %c0_7] : memref<8x128xf32, #tpu.memory_space<vmem>>, vector<8x128xf32>
    tpu.vector_store %arg4[%c0_6, %c0_7], %4 {strides = array<i32>} : memref<8x128xf32, #tpu.memory_space<vmem>>, vector<8x128xf32>,
    %cst_8 = arith.constant dense<0.000000e+00> : vector<128xf32>
    %6 = vector.multi_reduction <add>, %2, %cst_8 [0] : vector<128x128xf32> to vector<128xf32>
    %7 = vector.shape_cast %6 : vector<128xf32> to vector<1x128xf32>
    %c0_9 = arith.constant 0 : index
    %c0_10 = arith.constant 0 : index
    %8 = vector.load %arg4[%c0_9, %c0_10] : memref<8x128xf32, #tpu.memory_space<vmem>>, vector<1x128xf32>
    tpu.vector_store %arg4[%c0_9, %c0_10], %7 {strides = array<i32>} : memref<8x128xf32, #tpu.memory_space<vmem>>, vector<1x128xf32>,
    %9 = arith.mulf %2, %2 : vector<128x128xf32>
    %cst_11 = arith.constant dense<0.000000e+00> : vector<128xf32>
    %10 = vector.multi_reduction <add>, %9, %cst_11 [0] : vector<128x128xf32> to vector<128xf32>
    %11 = vector.shape_cast %10 : vector<128xf32> to vector<1x128xf32>
    %c1 = arith.constant 1 : index
    %c0_12 = arith.constant 0 : index
    %12 = vector.load %arg4[%c1, %c0_12] : memref<8x128xf32, #tpu.memory_space<vmem>>, vector<1x128xf32>
    tpu.vector_store %arg4[%c1, %c0_12], %11 {strides = array<i32>} : memref<8x128xf32, #tpu.memory_space<vmem>>, vector<1x128xf32>,
    return
  }
  func.func @transform_0(%arg0: i32) -> (i32, i32) {
    %c0_i32 = arith.constant 0 : i32
    %c0_i32_0 = arith.constant 0 : i32
    return %arg0, %c0_i32 : i32, i32
  }
  func.func @transform_1(%arg0: i32) -> (i32, i32) {
    %c0_i32 = arith.constant 0 : i32
    %c0_i32_0 = arith.constant 0 : i32
    %c0_i32_1 = arith.constant 0 : i32
    return %c0_i32, %c0_i32_0 : i32, i32
  }
  func.func @transform_2(%arg0: i32) -> (i32, i32) {
    %c0_i32 = arith.constant 0 : i32
    %c0_i32_0 = arith.constant 0 : i32
    return %arg0, %c0_i32 : i32, i32
  }
  func.func @transform_3(%arg0: i32) -> (i32, i32) {
    %c0_i32 = arith.constant 0 : i32
    %c0_i32_0 = arith.constant 0 : i32
    return %arg0, %c0_i32 : i32, i32
  }
}

module attributes {stable_mosaic.version = 11 : i64} {
  func.func @_scale_shift_lrelu_kernel(%arg0: i32, %arg1: memref<128x128xf32, #tpu.memory_space<vmem>>, %arg2: memref<2x128xf32, #tpu.memory_space<vmem>>, %arg3: memref<128x128xf32, #tpu.memory_space<vmem>>) attributes {dimension_semantics = [#tpu.dimension_semantics<parallel>], iteration_bounds = array<i64: 1>, scalar_prefetch = 0 : i64, scratch_operands = 0 : i64, tpu.core_type = #tpu.core_type<tc>, window_params = [{transform_indices = @transform_0, window_bounds = array<i64: 128, 128>}, {pipeline_mode = #tpu.pipeline_mode<synchronous>, transform_indices = @transform_1, window_bounds = array<i64: 2, 128>}, {transform_indices = @transform_2, window_bounds = array<i64: 128, 128>}]} {
    %c0 = arith.constant 0 : index
    %c0_0 = arith.constant 0 : index
    %0 = vector.load %arg1[%c0, %c0_0] : memref<128x128xf32, #tpu.memory_space<vmem>>, vector<128x128xf32>
    %c0_1 = arith.constant 0 : index
    %c0_2 = arith.constant 0 : index
    %1 = vector.load %arg2[%c0_1, %c0_2] : memref<2x128xf32, #tpu.memory_space<vmem>>, vector<1x128xf32>
    %2 = vector.broadcast %1 : vector<1x128xf32> to vector<128x128xf32>
    %3 = arith.mulf %0, %2 : vector<128x128xf32>
    %c1 = arith.constant 1 : index
    %c0_3 = arith.constant 0 : index
    %4 = vector.load %arg2[%c1, %c0_3] : memref<2x128xf32, #tpu.memory_space<vmem>>, vector<1x128xf32>
    %5 = vector.broadcast %4 : vector<1x128xf32> to vector<128x128xf32>
    %6 = arith.addf %3, %5 : vector<128x128xf32>
    %cst = arith.constant 0.000000e+00 : f32
    %7 = vector.broadcast %cst : f32 to vector<128x128xf32>
    %8 = arith.cmpf oge, %6, %7 : vector<128x128xf32>
    %cst_4 = arith.constant 0.00999999977 : f32
    %9 = vector.broadcast %cst_4 : f32 to vector<128x128xf32>
    %10 = arith.mulf %9, %6 : vector<128x128xf32>
    %11 = arith.select %8, %6, %10 : vector<128x128xi1>, vector<128x128xf32>
    %c0_5 = arith.constant 0 : index
    %c0_6 = arith.constant 0 : index
    %12 = vector.load %arg3[%c0_5, %c0_6] : memref<128x128xf32, #tpu.memory_space<vmem>>, vector<128x128xf32>
    tpu.vector_store %arg3[%c0_5, %c0_6], %11 {strides = array<i32>} : memref<128x128xf32, #tpu.memory_space<vmem>>, vector<128x128xf32>,
    return
  }
  func.func @transform_0(%arg0: i32) -> (i32, i32) {
    %c0_i32 = arith.constant 0 : i32
    %c0_i32_0 = arith.constant 0 : i32
    return %arg0, %c0_i32 : i32, i32
  }
  func.func @transform_1(%arg0: i32) -> (i32, i32) {
    %c0_i32 = arith.constant 0 : i32
    %c0_i32_0 = arith.constant 0 : i32
    %c0_i32_1 = arith.constant 0 : i32
    return %c0_i32, %c0_i32_0 : i32, i32
  }
  func.func @transform_2(%arg0: i32) -> (i32, i32) {
    %c0_i32 = arith.constant 0 : i32
    %c0_i32_0 = arith.constant 0 : i32
    return %arg0, %c0_i32 : i32, i32
  }
}

module attributes {stable_mosaic.version = 11 : i64} {
  func.func @_matmul_stats_kernel(%arg0: i32, %arg1: memref<32x384xbf16, #tpu.memory_space<vmem>>, %arg2: memref<384x128xbf16, #tpu.memory_space<vmem>>, %arg3: memref<32x128xf32, #tpu.memory_space<vmem>>, %arg4: memref<8x128xf32, #tpu.memory_space<vmem>>) attributes {dimension_semantics = [#tpu.dimension_semantics<parallel>], iteration_bounds = array<i64: 1>, scalar_prefetch = 0 : i64, scratch_operands = 0 : i64, tpu.core_type = #tpu.core_type<tc>, window_params = [{transform_indices = @transform_0, window_bounds = array<i64: 32, 384>}, {pipeline_mode = #tpu.pipeline_mode<synchronous>, transform_indices = @transform_1, window_bounds = array<i64: 384, 128>}, {transform_indices = @transform_2, window_bounds = array<i64: 32, 128>}, {transform_indices = @transform_3, window_bounds = array<i64: 8, 128>}]} {
    %c0 = arith.constant 0 : index
    %c0_0 = arith.constant 0 : index
    %0 = vector.load %arg1[%c0, %c0_0] : memref<32x384xbf16, #tpu.memory_space<vmem>>, vector<32x384xbf16>
    %c0_1 = arith.constant 0 : index
    %c0_2 = arith.constant 0 : index
    %1 = vector.load %arg2[%c0_1, %c0_2] : memref<384x128xbf16, #tpu.memory_space<vmem>>, vector<384x128xbf16>
    %cst = arith.constant dense<0.000000e+00> : vector<32x128xf32>
    %2 = tpu.matmul %0, %1, %cst {dimension_numbers = #tpu.dot_dimension_numbers<[1], [0], [0], [1], [0, 0, 1, 1], [], []>} : vector<32x384xbf16>, vector<384x128xbf16>, vector<32x128xf32> -> vector<32x128xf32>
    %c0_3 = arith.constant 0 : index
    %c0_4 = arith.constant 0 : index
    %3 = vector.load %arg3[%c0_3, %c0_4] : memref<32x128xf32, #tpu.memory_space<vmem>>, vector<32x128xf32>
    tpu.vector_store %arg3[%c0_3, %c0_4], %2 {strides = array<i32>} : memref<32x128xf32, #tpu.memory_space<vmem>>, vector<32x128xf32>,
    %cst_5 = arith.constant 0.000000e+00 : f32
    %4 = vector.broadcast %cst_5 : f32 to vector<8x128xf32>
    %c0_6 = arith.constant 0 : index
    %c0_7 = arith.constant 0 : index
    %5 = vector.load %arg4[%c0_6, %c0_7] : memref<8x128xf32, #tpu.memory_space<vmem>>, vector<8x128xf32>
    tpu.vector_store %arg4[%c0_6, %c0_7], %4 {strides = array<i32>} : memref<8x128xf32, #tpu.memory_space<vmem>>, vector<8x128xf32>,
    %cst_8 = arith.constant dense<0.000000e+00> : vector<128xf32>
    %6 = vector.multi_reduction <add>, %2, %cst_8 [0] : vector<32x128xf32> to vector<128xf32>
    %7 = vector.shape_cast %6 : vector<128xf32> to vector<1x128xf32>
    %c0_9 = arith.constant 0 : index
    %c0_10 = arith.constant 0 : index
    %8 = vector.load %arg4[%c0_9, %c0_10] : memref<8x128xf32, #tpu.memory_space<vmem>>, vector<1x128xf32>
    tpu.vector_store %arg4[%c0_9, %c0_10], %7 {strides = array<i32>} : memref<8x128xf32, #tpu.memory_space<vmem>>, vector<1x128xf32>,
    %9 = arith.mulf %2, %2 : vector<32x128xf32>
    %cst_11 = arith.constant dense<0.000000e+00> : vector<128xf32>
    %10 = vector.multi_reduction <add>, %9, %cst_11 [0] : vector<32x128xf32> to vector<128xf32>
    %11 = vector.shape_cast %10 : vector<128xf32> to vector<1x128xf32>
    %c1 = arith.constant 1 : index
    %c0_12 = arith.constant 0 : index
    %12 = vector.load %arg4[%c1, %c0_12] : memref<8x128xf32, #tpu.memory_space<vmem>>, vector<1x128xf32>
    tpu.vector_store %arg4[%c1, %c0_12], %11 {strides = array<i32>} : memref<8x128xf32, #tpu.memory_space<vmem>>, vector<1x128xf32>,
    return
  }
  func.func @transform_0(%arg0: i32) -> (i32, i32) {
    %c0_i32 = arith.constant 0 : i32
    %c0_i32_0 = arith.constant 0 : i32
    return %arg0, %c0_i32 : i32, i32
  }
  func.func @transform_1(%arg0: i32) -> (i32, i32) {
    %c0_i32 = arith.constant 0 : i32
    %c0_i32_0 = arith.constant 0 : i32
    %c0_i32_1 = arith.constant 0 : i32
    return %c0_i32, %c0_i32_0 : i32, i32
  }
  func.func @transform_2(%arg0: i32) -> (i32, i32) {
    %c0_i32 = arith.constant 0 : i32
    %c0_i32_0 = arith.constant 0 : i32
    return %arg0, %c0_i32 : i32, i32
  }
  func.func @transform_3(%arg0: i32) -> (i32, i32) {
    %c0_i32 = arith.constant 0 : i32
    %c0_i32_0 = arith.constant 0 : i32
    return %arg0, %c0_i32 : i32, i32
  }
}

module attributes {stable_mosaic.version = 11 : i64} {
  func.func @_matmul_stats_kernel(%arg0: i32, %arg1: memref<32x256xbf16, #tpu.memory_space<vmem>>, %arg2: memref<256x128xbf16, #tpu.memory_space<vmem>>, %arg3: memref<32x128xf32, #tpu.memory_space<vmem>>, %arg4: memref<8x128xf32, #tpu.memory_space<vmem>>) attributes {dimension_semantics = [#tpu.dimension_semantics<parallel>], iteration_bounds = array<i64: 1>, scalar_prefetch = 0 : i64, scratch_operands = 0 : i64, tpu.core_type = #tpu.core_type<tc>, window_params = [{transform_indices = @transform_0, window_bounds = array<i64: 32, 256>}, {pipeline_mode = #tpu.pipeline_mode<synchronous>, transform_indices = @transform_1, window_bounds = array<i64: 256, 128>}, {transform_indices = @transform_2, window_bounds = array<i64: 32, 128>}, {transform_indices = @transform_3, window_bounds = array<i64: 8, 128>}]} {
    %c0 = arith.constant 0 : index
    %c0_0 = arith.constant 0 : index
    %0 = vector.load %arg1[%c0, %c0_0] : memref<32x256xbf16, #tpu.memory_space<vmem>>, vector<32x256xbf16>
    %c0_1 = arith.constant 0 : index
    %c0_2 = arith.constant 0 : index
    %1 = vector.load %arg2[%c0_1, %c0_2] : memref<256x128xbf16, #tpu.memory_space<vmem>>, vector<256x128xbf16>
    %cst = arith.constant dense<0.000000e+00> : vector<32x128xf32>
    %2 = tpu.matmul %0, %1, %cst {dimension_numbers = #tpu.dot_dimension_numbers<[1], [0], [0], [1], [0, 0, 1, 1], [], []>} : vector<32x256xbf16>, vector<256x128xbf16>, vector<32x128xf32> -> vector<32x128xf32>
    %c0_3 = arith.constant 0 : index
    %c0_4 = arith.constant 0 : index
    %3 = vector.load %arg3[%c0_3, %c0_4] : memref<32x128xf32, #tpu.memory_space<vmem>>, vector<32x128xf32>
    tpu.vector_store %arg3[%c0_3, %c0_4], %2 {strides = array<i32>} : memref<32x128xf32, #tpu.memory_space<vmem>>, vector<32x128xf32>,
    %cst_5 = arith.constant 0.000000e+00 : f32
    %4 = vector.broadcast %cst_5 : f32 to vector<8x128xf32>
    %c0_6 = arith.constant 0 : index
    %c0_7 = arith.constant 0 : index
    %5 = vector.load %arg4[%c0_6, %c0_7] : memref<8x128xf32, #tpu.memory_space<vmem>>, vector<8x128xf32>
    tpu.vector_store %arg4[%c0_6, %c0_7], %4 {strides = array<i32>} : memref<8x128xf32, #tpu.memory_space<vmem>>, vector<8x128xf32>,
    %cst_8 = arith.constant dense<0.000000e+00> : vector<128xf32>
    %6 = vector.multi_reduction <add>, %2, %cst_8 [0] : vector<32x128xf32> to vector<128xf32>
    %7 = vector.shape_cast %6 : vector<128xf32> to vector<1x128xf32>
    %c0_9 = arith.constant 0 : index
    %c0_10 = arith.constant 0 : index
    %8 = vector.load %arg4[%c0_9, %c0_10] : memref<8x128xf32, #tpu.memory_space<vmem>>, vector<1x128xf32>
    tpu.vector_store %arg4[%c0_9, %c0_10], %7 {strides = array<i32>} : memref<8x128xf32, #tpu.memory_space<vmem>>, vector<1x128xf32>,
    %9 = arith.mulf %2, %2 : vector<32x128xf32>
    %cst_11 = arith.constant dense<0.000000e+00> : vector<128xf32>
    %10 = vector.multi_reduction <add>, %9, %cst_11 [0] : vector<32x128xf32> to vector<128xf32>
    %11 = vector.shape_cast %10 : vector<128xf32> to vector<1x128xf32>
    %c1 = arith.constant 1 : index
    %c0_12 = arith.constant 0 : index
    %12 = vector.load %arg4[%c1, %c0_12] : memref<8x128xf32, #tpu.memory_space<vmem>>, vector<1x128xf32>
    tpu.vector_store %arg4[%c1, %c0_12], %11 {strides = array<i32>} : memref<8x128xf32, #tpu.memory_space<vmem>>, vector<1x128xf32>,
    return
  }
  func.func @transform_0(%arg0: i32) -> (i32, i32) {
    %c0_i32 = arith.constant 0 : i32
    %c0_i32_0 = arith.constant 0 : i32
    return %arg0, %c0_i32 : i32, i32
  }
  func.func @transform_1(%arg0: i32) -> (i32, i32) {
    %c0_i32 = arith.constant 0 : i32
    %c0_i32_0 = arith.constant 0 : i32
    %c0_i32_1 = arith.constant 0 : i32
    return %c0_i32, %c0_i32_0 : i32, i32
  }
  func.func @transform_2(%arg0: i32) -> (i32, i32) {
    %c0_i32 = arith.constant 0 : i32
    %c0_i32_0 = arith.constant 0 : i32
    return %arg0, %c0_i32 : i32, i32
  }
  func.func @transform_3(%arg0: i32) -> (i32, i32) {
    %c0_i32 = arith.constant 0 : i32
    %c0_i32_0 = arith.constant 0 : i32
    return %arg0, %c0_i32 : i32, i32
  }
}

module attributes {stable_mosaic.version = 11 : i64} {
  func.func @_scale_shift_lrelu_kernel(%arg0: i32, %arg1: memref<32x128xf32, #tpu.memory_space<vmem>>, %arg2: memref<2x128xf32, #tpu.memory_space<vmem>>, %arg3: memref<32x128xf32, #tpu.memory_space<vmem>>) attributes {dimension_semantics = [#tpu.dimension_semantics<parallel>], iteration_bounds = array<i64: 1>, scalar_prefetch = 0 : i64, scratch_operands = 0 : i64, tpu.core_type = #tpu.core_type<tc>, window_params = [{transform_indices = @transform_0, window_bounds = array<i64: 32, 128>}, {pipeline_mode = #tpu.pipeline_mode<synchronous>, transform_indices = @transform_1, window_bounds = array<i64: 2, 128>}, {transform_indices = @transform_2, window_bounds = array<i64: 32, 128>}]} {
    %c0 = arith.constant 0 : index
    %c0_0 = arith.constant 0 : index
    %0 = vector.load %arg1[%c0, %c0_0] : memref<32x128xf32, #tpu.memory_space<vmem>>, vector<32x128xf32>
    %c0_1 = arith.constant 0 : index
    %c0_2 = arith.constant 0 : index
    %1 = vector.load %arg2[%c0_1, %c0_2] : memref<2x128xf32, #tpu.memory_space<vmem>>, vector<1x128xf32>
    %2 = vector.broadcast %1 : vector<1x128xf32> to vector<32x128xf32>
    %3 = arith.mulf %0, %2 : vector<32x128xf32>
    %c1 = arith.constant 1 : index
    %c0_3 = arith.constant 0 : index
    %4 = vector.load %arg2[%c1, %c0_3] : memref<2x128xf32, #tpu.memory_space<vmem>>, vector<1x128xf32>
    %5 = vector.broadcast %4 : vector<1x128xf32> to vector<32x128xf32>
    %6 = arith.addf %3, %5 : vector<32x128xf32>
    %cst = arith.constant 0.000000e+00 : f32
    %7 = vector.broadcast %cst : f32 to vector<32x128xf32>
    %8 = arith.cmpf oge, %6, %7 : vector<32x128xf32>
    %cst_4 = arith.constant 0.00999999977 : f32
    %9 = vector.broadcast %cst_4 : f32 to vector<32x128xf32>
    %10 = arith.mulf %9, %6 : vector<32x128xf32>
    %11 = arith.select %8, %6, %10 : vector<32x128xi1>, vector<32x128xf32>
    %c0_5 = arith.constant 0 : index
    %c0_6 = arith.constant 0 : index
    %12 = vector.load %arg3[%c0_5, %c0_6] : memref<32x128xf32, #tpu.memory_space<vmem>>, vector<32x128xf32>
    tpu.vector_store %arg3[%c0_5, %c0_6], %11 {strides = array<i32>} : memref<32x128xf32, #tpu.memory_space<vmem>>, vector<32x128xf32>,
    return
  }
  func.func @transform_0(%arg0: i32) -> (i32, i32) {
    %c0_i32 = arith.constant 0 : i32
    %c0_i32_0 = arith.constant 0 : i32
    return %arg0, %c0_i32 : i32, i32
  }
  func.func @transform_1(%arg0: i32) -> (i32, i32) {
    %c0_i32 = arith.constant 0 : i32
    %c0_i32_0 = arith.constant 0 : i32
    %c0_i32_1 = arith.constant 0 : i32
    return %c0_i32, %c0_i32_0 : i32, i32
  }
  func.func @transform_2(%arg0: i32) -> (i32, i32) {
    %c0_i32 = arith.constant 0 : i32
    %c0_i32_0 = arith.constant 0 : i32
    return %arg0, %c0_i32 : i32, i32
  }
}

module attributes {stable_mosaic.version = 11 : i64} {
  func.func @_matmul_stats_kernel(%arg0: i32, %arg1: memref<32x640xbf16, #tpu.memory_space<vmem>>, %arg2: memref<640x128xbf16, #tpu.memory_space<vmem>>, %arg3: memref<32x128xf32, #tpu.memory_space<vmem>>, %arg4: memref<8x128xf32, #tpu.memory_space<vmem>>) attributes {dimension_semantics = [#tpu.dimension_semantics<parallel>], iteration_bounds = array<i64: 1>, scalar_prefetch = 0 : i64, scratch_operands = 0 : i64, tpu.core_type = #tpu.core_type<tc>, window_params = [{transform_indices = @transform_0, window_bounds = array<i64: 32, 640>}, {pipeline_mode = #tpu.pipeline_mode<synchronous>, transform_indices = @transform_1, window_bounds = array<i64: 640, 128>}, {transform_indices = @transform_2, window_bounds = array<i64: 32, 128>}, {transform_indices = @transform_3, window_bounds = array<i64: 8, 128>}]} {
    %c0 = arith.constant 0 : index
    %c0_0 = arith.constant 0 : index
    %0 = vector.load %arg1[%c0, %c0_0] : memref<32x640xbf16, #tpu.memory_space<vmem>>, vector<32x640xbf16>
    %c0_1 = arith.constant 0 : index
    %c0_2 = arith.constant 0 : index
    %1 = vector.load %arg2[%c0_1, %c0_2] : memref<640x128xbf16, #tpu.memory_space<vmem>>, vector<640x128xbf16>
    %cst = arith.constant dense<0.000000e+00> : vector<32x128xf32>
    %2 = tpu.matmul %0, %1, %cst {dimension_numbers = #tpu.dot_dimension_numbers<[1], [0], [0], [1], [0, 0, 1, 1], [], []>} : vector<32x640xbf16>, vector<640x128xbf16>, vector<32x128xf32> -> vector<32x128xf32>
    %c0_3 = arith.constant 0 : index
    %c0_4 = arith.constant 0 : index
    %3 = vector.load %arg3[%c0_3, %c0_4] : memref<32x128xf32, #tpu.memory_space<vmem>>, vector<32x128xf32>
    tpu.vector_store %arg3[%c0_3, %c0_4], %2 {strides = array<i32>} : memref<32x128xf32, #tpu.memory_space<vmem>>, vector<32x128xf32>,
    %cst_5 = arith.constant 0.000000e+00 : f32
    %4 = vector.broadcast %cst_5 : f32 to vector<8x128xf32>
    %c0_6 = arith.constant 0 : index
    %c0_7 = arith.constant 0 : index
    %5 = vector.load %arg4[%c0_6, %c0_7] : memref<8x128xf32, #tpu.memory_space<vmem>>, vector<8x128xf32>
    tpu.vector_store %arg4[%c0_6, %c0_7], %4 {strides = array<i32>} : memref<8x128xf32, #tpu.memory_space<vmem>>, vector<8x128xf32>,
    %cst_8 = arith.constant dense<0.000000e+00> : vector<128xf32>
    %6 = vector.multi_reduction <add>, %2, %cst_8 [0] : vector<32x128xf32> to vector<128xf32>
    %7 = vector.shape_cast %6 : vector<128xf32> to vector<1x128xf32>
    %c0_9 = arith.constant 0 : index
    %c0_10 = arith.constant 0 : index
    %8 = vector.load %arg4[%c0_9, %c0_10] : memref<8x128xf32, #tpu.memory_space<vmem>>, vector<1x128xf32>
    tpu.vector_store %arg4[%c0_9, %c0_10], %7 {strides = array<i32>} : memref<8x128xf32, #tpu.memory_space<vmem>>, vector<1x128xf32>,
    %9 = arith.mulf %2, %2 : vector<32x128xf32>
    %cst_11 = arith.constant dense<0.000000e+00> : vector<128xf32>
    %10 = vector.multi_reduction <add>, %9, %cst_11 [0] : vector<32x128xf32> to vector<128xf32>
    %11 = vector.shape_cast %10 : vector<128xf32> to vector<1x128xf32>
    %c1 = arith.constant 1 : index
    %c0_12 = arith.constant 0 : index
    %12 = vector.load %arg4[%c1, %c0_12] : memref<8x128xf32, #tpu.memory_space<vmem>>, vector<1x128xf32>
    tpu.vector_store %arg4[%c1, %c0_12], %11 {strides = array<i32>} : memref<8x128xf32, #tpu.memory_space<vmem>>, vector<1x128xf32>,
    return
  }
  func.func @transform_0(%arg0: i32) -> (i32, i32) {
    %c0_i32 = arith.constant 0 : i32
    %c0_i32_0 = arith.constant 0 : i32
    return %arg0, %c0_i32 : i32, i32
  }
  func.func @transform_1(%arg0: i32) -> (i32, i32) {
    %c0_i32 = arith.constant 0 : i32
    %c0_i32_0 = arith.constant 0 : i32
    %c0_i32_1 = arith.constant 0 : i32
    return %c0_i32, %c0_i32_0 : i32, i32
  }
  func.func @transform_2(%arg0: i32) -> (i32, i32) {
    %c0_i32 = arith.constant 0 : i32
    %c0_i32_0 = arith.constant 0 : i32
    return %arg0, %c0_i32 : i32, i32
  }
  func.func @transform_3(%arg0: i32) -> (i32, i32) {
    %c0_i32 = arith.constant 0 : i32
    %c0_i32_0 = arith.constant 0 : i32
    return %arg0, %c0_i32 : i32, i32
  }
}

module attributes {stable_mosaic.version = 11 : i64} {
  func.func @_matmul_stats_kernel(%arg0: i32, %arg1: memref<32x1152xbf16, #tpu.memory_space<vmem>>, %arg2: memref<1152x128xbf16, #tpu.memory_space<vmem>>, %arg3: memref<32x128xf32, #tpu.memory_space<vmem>>, %arg4: memref<8x128xf32, #tpu.memory_space<vmem>>) attributes {dimension_semantics = [#tpu.dimension_semantics<parallel>], iteration_bounds = array<i64: 1>, scalar_prefetch = 0 : i64, scratch_operands = 0 : i64, tpu.core_type = #tpu.core_type<tc>, window_params = [{transform_indices = @transform_0, window_bounds = array<i64: 32, 1152>}, {pipeline_mode = #tpu.pipeline_mode<synchronous>, transform_indices = @transform_1, window_bounds = array<i64: 1152, 128>}, {transform_indices = @transform_2, window_bounds = array<i64: 32, 128>}, {transform_indices = @transform_3, window_bounds = array<i64: 8, 128>}]} {
    %c0 = arith.constant 0 : index
    %c0_0 = arith.constant 0 : index
    %0 = vector.load %arg1[%c0, %c0_0] : memref<32x1152xbf16, #tpu.memory_space<vmem>>, vector<32x1152xbf16>
    %c0_1 = arith.constant 0 : index
    %c0_2 = arith.constant 0 : index
    %1 = vector.load %arg2[%c0_1, %c0_2] : memref<1152x128xbf16, #tpu.memory_space<vmem>>, vector<1152x128xbf16>
    %cst = arith.constant dense<0.000000e+00> : vector<32x128xf32>
    %2 = tpu.matmul %0, %1, %cst {dimension_numbers = #tpu.dot_dimension_numbers<[1], [0], [0], [1], [0, 0, 1, 1], [], []>} : vector<32x1152xbf16>, vector<1152x128xbf16>, vector<32x128xf32> -> vector<32x128xf32>
    %c0_3 = arith.constant 0 : index
    %c0_4 = arith.constant 0 : index
    %3 = vector.load %arg3[%c0_3, %c0_4] : memref<32x128xf32, #tpu.memory_space<vmem>>, vector<32x128xf32>
    tpu.vector_store %arg3[%c0_3, %c0_4], %2 {strides = array<i32>} : memref<32x128xf32, #tpu.memory_space<vmem>>, vector<32x128xf32>,
    %cst_5 = arith.constant 0.000000e+00 : f32
    %4 = vector.broadcast %cst_5 : f32 to vector<8x128xf32>
    %c0_6 = arith.constant 0 : index
    %c0_7 = arith.constant 0 : index
    %5 = vector.load %arg4[%c0_6, %c0_7] : memref<8x128xf32, #tpu.memory_space<vmem>>, vector<8x128xf32>
    tpu.vector_store %arg4[%c0_6, %c0_7], %4 {strides = array<i32>} : memref<8x128xf32, #tpu.memory_space<vmem>>, vector<8x128xf32>,
    %cst_8 = arith.constant dense<0.000000e+00> : vector<128xf32>
    %6 = vector.multi_reduction <add>, %2, %cst_8 [0] : vector<32x128xf32> to vector<128xf32>
    %7 = vector.shape_cast %6 : vector<128xf32> to vector<1x128xf32>
    %c0_9 = arith.constant 0 : index
    %c0_10 = arith.constant 0 : index
    %8 = vector.load %arg4[%c0_9, %c0_10] : memref<8x128xf32, #tpu.memory_space<vmem>>, vector<1x128xf32>
    tpu.vector_store %arg4[%c0_9, %c0_10], %7 {strides = array<i32>} : memref<8x128xf32, #tpu.memory_space<vmem>>, vector<1x128xf32>,
    %9 = arith.mulf %2, %2 : vector<32x128xf32>
    %cst_11 = arith.constant dense<0.000000e+00> : vector<128xf32>
    %10 = vector.multi_reduction <add>, %9, %cst_11 [0] : vector<32x128xf32> to vector<128xf32>
    %11 = vector.shape_cast %10 : vector<128xf32> to vector<1x128xf32>
    %c1 = arith.constant 1 : index
    %c0_12 = arith.constant 0 : index
    %12 = vector.load %arg4[%c1, %c0_12] : memref<8x128xf32, #tpu.memory_space<vmem>>, vector<1x128xf32>
    tpu.vector_store %arg4[%c1, %c0_12], %11 {strides = array<i32>} : memref<8x128xf32, #tpu.memory_space<vmem>>, vector<1x128xf32>,
    return
  }
  func.func @transform_0(%arg0: i32) -> (i32, i32) {
    %c0_i32 = arith.constant 0 : i32
    %c0_i32_0 = arith.constant 0 : i32
    return %arg0, %c0_i32 : i32, i32
  }
  func.func @transform_1(%arg0: i32) -> (i32, i32) {
    %c0_i32 = arith.constant 0 : i32
    %c0_i32_0 = arith.constant 0 : i32
    %c0_i32_1 = arith.constant 0 : i32
    return %c0_i32, %c0_i32_0 : i32, i32
  }
  func.func @transform_2(%arg0: i32) -> (i32, i32) {
    %c0_i32 = arith.constant 0 : i32
    %c0_i32_0 = arith.constant 0 : i32
    return %arg0, %c0_i32 : i32, i32
  }
  func.func @transform_3(%arg0: i32) -> (i32, i32) {
    %c0_i32 = arith.constant 0 : i32
    %c0_i32_0 = arith.constant 0 : i32
    return %arg0, %c0_i32 : i32, i32
  }
}

module attributes {stable_mosaic.version = 11 : i64} {
  func.func @_matmul_stats_kernel(%arg0: i32, %arg1: memref<8x512xbf16, #tpu.memory_space<vmem>>, %arg2: memref<512x128xbf16, #tpu.memory_space<vmem>>, %arg3: memref<8x128xf32, #tpu.memory_space<vmem>>, %arg4: memref<8x128xf32, #tpu.memory_space<vmem>>) attributes {dimension_semantics = [#tpu.dimension_semantics<parallel>], iteration_bounds = array<i64: 1>, scalar_prefetch = 0 : i64, scratch_operands = 0 : i64, tpu.core_type = #tpu.core_type<tc>, window_params = [{transform_indices = @transform_0, window_bounds = array<i64: 8, 512>}, {pipeline_mode = #tpu.pipeline_mode<synchronous>, transform_indices = @transform_1, window_bounds = array<i64: 512, 128>}, {transform_indices = @transform_2, window_bounds = array<i64: 8, 128>}, {transform_indices = @transform_3, window_bounds = array<i64: 8, 128>}]} {
    %c0 = arith.constant 0 : index
    %c0_0 = arith.constant 0 : index
    %0 = vector.load %arg1[%c0, %c0_0] : memref<8x512xbf16, #tpu.memory_space<vmem>>, vector<8x512xbf16>
    %c0_1 = arith.constant 0 : index
    %c0_2 = arith.constant 0 : index
    %1 = vector.load %arg2[%c0_1, %c0_2] : memref<512x128xbf16, #tpu.memory_space<vmem>>, vector<512x128xbf16>
    %cst = arith.constant dense<0.000000e+00> : vector<8x128xf32>
    %2 = tpu.matmul %0, %1, %cst {dimension_numbers = #tpu.dot_dimension_numbers<[1], [0], [0], [1], [0, 0, 1, 1], [], []>} : vector<8x512xbf16>, vector<512x128xbf16>, vector<8x128xf32> -> vector<8x128xf32>
    %3 = arith.negf %2 : vector<8x128xf32>
    %4 = math.exp %3 : vector<8x128xf32>
    %cst_3 = arith.constant 1.000000e+00 : f32
    %5 = vector.broadcast %cst_3 : f32 to vector<8x128xf32>
    %6 = arith.addf %5, %4 : vector<8x128xf32>
    %7 = arith.divf %5, %6 : vector<8x128xf32>
    %c0_4 = arith.constant 0 : index
    %c0_5 = arith.constant 0 : index
    %8 = vector.load %arg3[%c0_4, %c0_5] : memref<8x128xf32, #tpu.memory_space<vmem>>, vector<8x128xf32>
    tpu.vector_store %arg3[%c0_4, %c0_5], %7 {strides = array<i32>} : memref<8x128xf32, #tpu.memory_space<vmem>>, vector<8x128xf32>,
    %cst_6 = arith.constant 0.000000e+00 : f32
    %9 = vector.broadcast %cst_6 : f32 to vector<8x128xf32>
    %c0_7 = arith.constant 0 : index
    %c0_8 = arith.constant 0 : index
    %10 = vector.load %arg4[%c0_7, %c0_8] : memref<8x128xf32, #tpu.memory_space<vmem>>, vector<8x128xf32>
    tpu.vector_store %arg4[%c0_7, %c0_8], %9 {strides = array<i32>} : memref<8x128xf32, #tpu.memory_space<vmem>>, vector<8x128xf32>,
    %cst_9 = arith.constant dense<0.000000e+00> : vector<128xf32>
    %11 = vector.multi_reduction <add>, %2, %cst_9 [0] : vector<8x128xf32> to vector<128xf32>
    %12 = vector.shape_cast %11 : vector<128xf32> to vector<1x128xf32>
    %c0_10 = arith.constant 0 : index
    %c0_11 = arith.constant 0 : index
    %13 = vector.load %arg4[%c0_10, %c0_11] : memref<8x128xf32, #tpu.memory_space<vmem>>, vector<1x128xf32>
    tpu.vector_store %arg4[%c0_10, %c0_11], %12 {strides = array<i32>} : memref<8x128xf32, #tpu.memory_space<vmem>>, vector<1x128xf32>,
    %14 = arith.mulf %2, %2 : vector<8x128xf32>
    %cst_12 = arith.constant dense<0.000000e+00> : vector<128xf32>
    %15 = vector.multi_reduction <add>, %14, %cst_12 [0] : vector<8x128xf32> to vector<128xf32>
    %16 = vector.shape_cast %15 : vector<128xf32> to vector<1x128xf32>
    %c1 = arith.constant 1 : index
    %c0_13 = arith.constant 0 : index
    %17 = vector.load %arg4[%c1, %c0_13] : memref<8x128xf32, #tpu.memory_space<vmem>>, vector<1x128xf32>
    tpu.vector_store %arg4[%c1, %c0_13], %16 {strides = array<i32>} : memref<8x128xf32, #tpu.memory_space<vmem>>, vector<1x128xf32>,
    return
  }
  func.func @transform_0(%arg0: i32) -> (i32, i32) {
    %c0_i32 = arith.constant 0 : i32
    %c0_i32_0 = arith.constant 0 : i32
    return %arg0, %c0_i32 : i32, i32
  }
  func.func @transform_1(%arg0: i32) -> (i32, i32) {
    %c0_i32 = arith.constant 0 : i32
    %c0_i32_0 = arith.constant 0 : i32
    %c0_i32_1 = arith.constant 0 : i32
    return %c0_i32, %c0_i32_0 : i32, i32
  }
  func.func @transform_2(%arg0: i32) -> (i32, i32) {
    %c0_i32 = arith.constant 0 : i32
    %c0_i32_0 = arith.constant 0 : i32
    return %arg0, %c0_i32 : i32, i32
  }
  func.func @transform_3(%arg0: i32) -> (i32, i32) {
    %c0_i32 = arith.constant 0 : i32
    %c0_i32_0 = arith.constant 0 : i32
    return %arg0, %c0_i32 : i32, i32
  }
}

</mosaic_0001>

<llo_original>
// kernel: forward.12
$region0: #{forward.12}
  #allocation0 [shape = 'u32[]', space=smem, size = 0x4, offset = 0x4, fixed_abs, tag = 'smem constant byte address 0x4 - core index']
  #allocation1 [shape = 'u32[72,128]{1,0:T(1,128)}', space=vmem, size = 0x9000, scoped, tag = 'internal scratch']
  %s0 = inlined_call_operand.vmem [shape: bf16[512,128], index: 0, kind: input, shape index: {}]
  %s1 = inlined_call_operand.vmem [shape: bf16[128,128], index: 1, kind: input, shape index: {}]
  %s2 = inlined_call_operand.vmem [shape: f32[512,128], index: 2, kind: output, shape index: {0}]
  %s3 = inlined_call_operand.hbm [shape: f32[8,128], index: 3, kind: output, shape index: {1}]
  %4 = xla_tuple %s2, %s3
  %s5 = sld [smem:[#allocation0]]
  $region26: #{forward.12} parent=0
    _
  %s7 = ssub.s32 1, %s5
  %s8 = scalar_select 0, %s7, %s5
  $region1: #{forward.12} parent=0
    #allocation2 [shape = 'u8[4096]{0}', space=vmem, size = 0x1000, scoped, tag = 'output window, operand 1, single buffered']
    #allocation3 [shape = 's32[1]{0}', space=sflag, size = 0x4, scoped, tag = 'scoped memory for forward.12']
    %9 = vsyncpa [#allocation3], 0
    // Predicated region
    $region2: #{forward.12} parent=1 // pred_check
      _
    $region3: #{forward.12} parent=1 // pred_check_branch
      %11 = sbr.rel (0) target = $region5
    $region4: #{forward.12} parent=1 // pred_region
      _
    $region5: #{forward.12} parent=1 // pred_fallthru
      _
    // Predicated region
    $region6: #{forward.12} parent=1 // pred_check
      _
    $region7: #{forward.12} parent=1 // pred_check_branch
      %13 = sbr.rel (0) target = $region9
    $region8: #{forward.12} parent=1 // pred_region
      _
    $region9: #{forward.12} parent=1 // pred_fallthru
      _
    %v14 = vld [vmem:[%s0] sm:$0xf]
    %v15 = vld [vmem:[%s0 + $0x4] sm:$0xf]
    %v16 = vld [vmem:[%s0 + $0x8] sm:$0xf]
    %v17 = vld [vmem:[%s0 + $0xc] sm:$0xf]
    %v18 = vld [vmem:[%s0 + $0x10] sm:$0xf]
    %v19 = vld [vmem:[%s0 + $0x14] sm:$0xf]
    %v20 = vld [vmem:[%s0 + $0x18] sm:$0xf]
    %v21 = vld [vmem:[%s0 + $0x1c] sm:$0xf]
    %v22 = vld [vmem:[%s0 + $0x20] sm:$0xf]
    %v23 = vld [vmem:[%s0 + $0x24] sm:$0xf]
    %v24 = vld [vmem:[%s0 + $0x28] sm:$0xf]
    %v25 = vld [vmem:[%s0 + $0x2c] sm:$0xf]
    %v26 = vld [vmem:[%s0 + $0x30] sm:$0xf]
    %v27 = vld [vmem:[%s0 + $0x34] sm:$0xf]
    %v28 = vld [vmem:[%s0 + $0x38] sm:$0xf]
    %v29 = vld [vmem:[%s0 + $0x3c] sm:$0xf]
    %v30 = vld [vmem:[%s0 + $0x40] sm:$0xf]
    %v31 = vld [vmem:[%s0 + $0x44] sm:$0xf]
    %v32 = vld [vmem:[%s0 + $0x48] sm:$0xf]
    %v33 = vld [vmem:[%s0 + $0x4c] sm:$0xf]
    %v34 = vld [vmem:[%s0 + $0x50] sm:$0xf]
    %v35 = vld [vmem:[%s0 + $0x54] sm:$0xf]
    %v36 = vld [vmem:[%s0 + $0x58] sm:$0xf]
    %v37 = vld [vmem:[%s0 + $0x5c] sm:$0xf]
    %v38 = vld [vmem:[%s0 + $0x60] sm:$0xf]
    %v39 = vld [vmem:[%s0 + $0x64] sm:$0xf]
    %v40 = vld [vmem:[%s0 + $0x68] sm:$0xf]
    %v41 = vld [vmem:[%s0 + $0x6c] sm:$0xf]
    %v42 = vld [vmem:[%s0 + $0x70] sm:$0xf]
    %v43 = vld [vmem:[%s0 + $0x74] sm:$0xf]
    %v44 = vld [vmem:[%s0 + $0x78] sm:$0xf]
    %v45 = vld [vmem:[%s0 + $0x7c] sm:$0xf]
    %v46 = vld [vmem:[%s0 + $0x80] sm:$0xf]
    %v47 = vld [vmem:[%s0 + $0x84] sm:$0xf]
    %v48 = vld [vmem:[%s0 + $0x88] sm:$0xf]
    %v49 = vld [vmem:[%s0 + $0x8c] sm:$0xf]
    %v50 = vld [vmem:[%s0 + $0x90] sm:$0xf]
    %v51 = vld [vmem:[%s0 + $0x94] sm:$0xf]
    %v52 = vld [vmem:[%s0 + $0x98] sm:$0xf]
    %v53 = vld [vmem:[%s0 + $0x9c] sm:$0xf]
    %v54 = vld [vmem:[%s0 + $0xa0] sm:$0xf]
    %v55 = vld [vmem:[%s0 + $0xa4] sm:$0xf]
    %v56 = vld [vmem:[%s0 + $0xa8] sm:$0xf]
    %v57 = vld [vmem:[%s0 + $0xac] sm:$0xf]
    %v58 = vld [vmem:[%s0 + $0xb0] sm:$0xf]
    %v59 = vld [vmem:[%s0 + $0xb4] sm:$0xf]
    %v60 = vld [vmem:[%s0 + $0xb8] sm:$0xf]
    %v61 = vld [vmem:[%s0 + $0xbc] sm:$0xf]
    %v62 = vld [vmem:[%s0 + $0xc0] sm:$0xf]
    %v63 = vld [vmem:[%s0 + $0xc4] sm:$0xf]
    %v64 = vld [vmem:[%s0 + $0xc8] sm:$0xf]
    %v65 = vld [vmem:[%s0 + $0xcc] sm:$0xf]
    %v66 = vld [vmem:[%s0 + $0xd0] sm:$0xf]
    %v67 = vld [vmem:[%s0 + $0xd4] sm:$0xf]
    %v68 = vld [vmem:[%s0 + $0xd8] sm:$0xf]
    %v69 = vld [vmem:[%s0 + $0xdc] sm:$0xf]
    %v70 = vld [vmem:[%s0 + $0xe0] sm:$0xf]
    %v71 = vld [vmem:[%s0 + $0xe4] sm:$0xf]
    %v72 = vld [vmem:[%s0 + $0xe8] sm:$0xf]
    %v73 = vld [vmem:[%s0 + $0xec] sm:$0xf]
    %v74 = vld [vmem:[%s0 + $0xf0] sm:$0xf]
    %v75 = vld [vmem:[%s0 + $0xf4] sm:$0xf]
    %v76 = vld [vmem:[%s0 + $0xf8] sm:$0xf]
    %v77 = vld [vmem:[%s0 + $0xfc] sm:$0xf]
    %v78 = vld [vmem:[%s1] sm:$0xf]
    %v79 = vld [vmem:[%s1 + $0x4] sm:$0xf]
    %v80 = vld [vmem:[%s1 + $0x8] sm:$0xf]
    %v81 = vld [vmem:[%s1 + $0xc] sm:$0xf]
    %v82 = vld [vmem:[%s1 + $0x10] sm:$0xf]
    %v83 = vld [vmem:[%s1 + $0x14] sm:$0xf]
    %v84 = vld [vmem:[%s1 + $0x18] sm:$0xf]
    %v85 = vld [vmem:[%s1 + $0x1c] sm:$0xf]
    %v86 = vld [vmem:[%s1 + $0x20] sm:$0xf]
    %v87 = vld [vmem:[%s1 + $0x24] sm:$0xf]
    %v88 = vld [vmem:[%s1 + $0x28] sm:$0xf]
    %v89 = vld [vmem:[%s1 + $0x2c] sm:$0xf]
    %v90 = vld [vmem:[%s1 + $0x30] sm:$0xf]
    %v91 = vld [vmem:[%s1 + $0x34] sm:$0xf]
    %v92 = vld [vmem:[%s1 + $0x38] sm:$0xf]
    %v93 = vld [vmem:[%s1 + $0x3c] sm:$0xf]
    %v158 = vunpack.c.l.b16 %v14
    %v159 = vunpack.c.l.b16 %v15
    %v160 = vunpack.c.l.b16 %v16
    %v161 = vunpack.c.l.b16 %v17
    %v162 = vunpack.c.l.b16 %v18
    %v163 = vunpack.c.l.b16 %v19
    %v164 = vunpack.c.l.b16 %v20
    %v165 = vunpack.c.l.b16 %v21
    %v166 = vunpack.c.l.b16 %v22
    %v167 = vunpack.c.l.b16 %v23
    %v168 = vunpack.c.l.b16 %v24
    %v169 = vunpack.c.l.b16 %v25
    %v170 = vunpack.c.l.b16 %v26
    %v171 = vunpack.c.l.b16 %v27
    %v172 = vunpack.c.l.b16 %v28
    %v173 = vunpack.c.l.b16 %v29
    %v174 = vunpack.c.l.b16 %v30
    %v175 = vunpack.c.l.b16 %v31
    %v176 = vunpack.c.l.b16 %v32
    %v177 = vunpack.c.l.b16 %v33
    %v178 = vunpack.c.l.b16 %v34
    %v179 = vunpack.c.l.b16 %v35
    %v180 = vunpack.c.l.b16 %v36
    %v181 = vunpack.c.l.b16 %v37
    %v182 = vunpack.c.l.b16 %v38
    %v183 = vunpack.c.l.b16 %v39
    %v184 = vunpack.c.l.b16 %v40
    %v185 = vunpack.c.l.b16 %v41
    %v186 = vunpack.c.l.b16 %v42
    %v187 = vunpack.c.l.b16 %v43
    %v188 = vunpack.c.l.b16 %v44
    %v189 = vunpack.c.l.b16 %v45
    %v190 = vunpack.c.l.b16 %v46
    %v191 = vunpack.c.l.b16 %v47
    %v192 = vunpack.c.l.b16 %v48
    %v193 = vunpack.c.l.b16 %v49
    %v194 = vunpack.c.l.b16 %v50
    %v195 = vunpack.c.l.b16 %v51
    %v196 = vunpack.c.l.b16 %v52
    %v197 = vunpack.c.l.b16 %v53
    %v198 = vunpack.c.l.b16 %v54
    %v199 = vunpack.c.l.b16 %v55
    %v200 = vunpack.c.l.b16 %v56
    %v201 = vunpack.c.l.b16 %v57
    %v202 = vunpack.c.l.b16 %v58
    %v203 = vunpack.c.l.b16 %v59
    %v204 = vunpack.c.l.b16 %v60
    %v205 = vunpack.c.l.b16 %v61
    %v206 = vunpack.c.l.b16 %v62
    %v207 = vunpack.c.l.b16 %v63
    %v208 = vunpack.c.l.b16 %v64
    %v209 = vunpack.c.l.b16 %v65
    %v210 = vunpack.c.l.b16 %v66
    %v211 = vunpack.c.l.b16 %v67
    %v212 = vunpack.c.l.b16 %v68
    %v213 = vunpack.c.l.b16 %v69
    %v214 = vunpack.c.l.b16 %v70
    %v215 = vunpack.c.l.b16 %v71
    %v216 = vunpack.c.l.b16 %v72
    %v217 = vunpack.c.l.b16 %v73
    %v218 = vunpack.c.l.b16 %v74
    %v219 = vunpack.c.l.b16 %v75
    %v220 = vunpack.c.l.b16 %v76
    %v221 = vunpack.c.l.b16 %v77
    %v222 = vpack.c.b16 %v159, %v158
    %v223 = vpack.c.b16 %v161, %v160
    %v224 = vpack.c.b16 %v163, %v162
    %v225 = vpack.c.b16 %v165, %v164
    %v226 = vpack.c.b16 %v167, %v166
    %v227 = vpack.c.b16 %v169, %v168
    %v228 = vpack.c.b16 %v171, %v170
    %v229 = vpack.c.b16 %v173, %v172
    %v230 = vpack.c.b16 %v175, %v174
    %v231 = vpack.c.b16 %v177, %v176
    %v232 = vpack.c.b16 %v179, %v178
    %v233 = vpack.c.b16 %v181, %v180
    %v234 = vpack.c.b16 %v183, %v182
    %v235 = vpack.c.b16 %v185, %v184
    %v236 = vpack.c.b16 %v187, %v186
    %v237 = vpack.c.b16 %v189, %v188
    %v238 = vpack.c.b16 %v191, %v190
    %v239 = vpack.c.b16 %v193, %v192
    %v240 = vpack.c.b16 %v195, %v194
    %v241 = vpack.c.b16 %v197, %v196
    %v242 = vpack.c.b16 %v199, %v198
    %v243 = vpack.c.b16 %v201, %v200
    %v244 = vpack.c.b16 %v203, %v202
    %v245 = vpack.c.b16 %v205, %v204
    %v246 = vpack.c.b16 %v207, %v206
    %v247 = vpack.c.b16 %v209, %v208
    %v248 = vpack.c.b16 %v211, %v210
    %v249 = vpack.c.b16 %v213, %v212
    %v250 = vpack.c.b16 %v215, %v214
    %v251 = vpack.c.b16 %v217, %v216
    %v252 = vpack.c.b16 %v219, %v218
    %v253 = vpack.c.b16 %v221, %v220
    %v302 = vunpack.c.l.b16 %v78
    %v303 = vunpack.c.l.b16 %v79
    %v304 = vunpack.c.l.b16 %v80
    %v305 = vunpack.c.l.b16 %v81
    %v306 = vunpack.c.l.b16 %v82
    %v307 = vunpack.c.l.b16 %v83
    %v308 = vunpack.c.l.b16 %v84
    %v309 = vunpack.c.l.b16 %v85
    %v310 = vunpack.c.l.b16 %v86
    %v311 = vunpack.c.l.b16 %v87
    %v312 = vunpack.c.l.b16 %v88
    %v313 = vunpack.c.l.b16 %v89
    %v314 = vunpack.c.l.b16 %v90
    %v315 = vunpack.c.l.b16 %v91
    %v316 = vunpack.c.l.b16 %v92
    %v317 = vunpack.c.l.b16 %v93
    %v318 = vpack.c.b16 %v303, %v302
    %v319 = vpack.c.b16 %v305, %v304
    %v320 = vpack.c.b16 %v307, %v306
    %v321 = vpack.c.b16 %v309, %v308
    %v322 = vpack.c.b16 %v311, %v310
    %v323 = vpack.c.b16 %v313, %v312
    %v324 = vpack.c.b16 %v315, %v314
    %v325 = vpack.c.b16 %v317, %v316
    %334 = vmatpush.bf16.msra.mxu0 %v325
    %335 = vmatpush.bf16.msra.mxu0 %v324
    %336 = vmatpush.bf16.msra.mxu0 %v323
    %337 = vmatpush.bf16.msra.mxu0 %v322
    %338 = vmatpush.bf16.msra.mxu0 %v321
    %339 = vmatpush.bf16.msra.mxu0 %v320
    %340 = vmatpush.bf16.msra.mxu0 %v319
    %341 = vmatpush.bf16.msra.mxu0 %v318
    %342 = vmatmul.bf16.gmra.mxu0 %v222
    %v343 = vpop.f32.mrf.mxu0
    %v344 = vadd.f32 0.0, %v343
    %v345 = vpop.f32.mrf.mxu0
    %v346 = vadd.f32 0.0, %v345
    %347 = vmatmul.bf16.gmra.mxu0 %v223
    %v348 = vpop.f32.mrf.mxu0
    %v349 = vadd.f32 0.0, %v348
    %v350 = vpop.f32.mrf.mxu0
    %v351 = vadd.f32 0.0, %v350
    %352 = vmatmul.bf16.gmra.mxu0 %v224
    %v353 = vpop.f32.mrf.mxu0
    %v354 = vadd.f32 0.0, %v353
    %v355 = vpop.f32.mrf.mxu0
    %v356 = vadd.f32 0.0, %v355
    %357 = vmatmul.bf16.gmra.mxu0 %v225
    %v358 = vpop.f32.mrf.mxu0
    %v359 = vadd.f32 0.0, %v358
    %v360 = vpop.f32.mrf.mxu0
    %v361 = vadd.f32 0.0, %v360
    %362 = vmatmul.bf16.gmra.mxu0 %v226
    %v363 = vpop.f32.mrf.mxu0
    %v364 = vadd.f32 0.0, %v363
    %v365 = vpop.f32.mrf.mxu0
    %v366 = vadd.f32 0.0, %v365
    %367 = vmatmul.bf16.gmra.mxu0 %v227
    %v368 = vpop.f32.mrf.mxu0
    %v369 = vadd.f32 0.0, %v368
    %v370 = vpop.f32.mrf.mxu0
    %v371 = vadd.f32 0.0, %v370
    %372 = vmatmul.bf16.gmra.mxu0 %v228
    %v373 = vpop.f32.mrf.mxu0
    %v374 = vadd.f32 0.0, %v373
    %v375 = vpop.f32.mrf.mxu0
    %v376 = vadd.f32 0.0, %v375
    %377 = vmatmul.bf16.gmra.mxu0 %v229
    %v378 = vpop.f32.mrf.mxu0
    %v379 = vadd.f32 0.0, %v378
    %v380 = vpop.f32.mrf.mxu0
    %v381 = vadd.f32 0.0, %v380
    %382 = vmatmul.bf16.gmra.mxu0 %v230
    %v383 = vpop.f32.mrf.mxu0
    %v384 = vadd.f32 0.0, %v383
    %v385 = vpop.f32.mrf.mxu0
    %v386 = vadd.f32 0.0, %v385
    %387 = vmatmul.bf16.gmra.mxu0 %v231
    %v388 = vpop.f32.mrf.mxu0
    %v389 = vadd.f32 0.0, %v388
    %v390 = vpop.f32.mrf.mxu0
    %v391 = vadd.f32 0.0, %v390
    %392 = vmatmul.bf16.gmra.mxu0 %v232
    %v393 = vpop.f32.mrf.mxu0
    %v394 = vadd.f32 0.0, %v393
    %v395 = vpop.f32.mrf.mxu0
    %v396 = vadd.f32 0.0, %v395
    %397 = vmatmul.bf16.gmra.mxu0 %v233
    %v398 = vpop.f32.mrf.mxu0
    %v399 = vadd.f32 0.0, %v398
    %v400 = vpop.f32.mrf.mxu0
    %v401 = vadd.f32 0.0, %v400
    %402 = vmatmul.bf16.gmra.mxu0 %v234
    %v403 = vpop.f32.mrf.mxu0
    %v404 = vadd.f32 0.0, %v403
    %v405 = vpop.f32.mrf.mxu0
    %v406 = vadd.f32 0.0, %v405
    %407 = vmatmul.bf16.gmra.mxu0 %v235
    %v408 = vpop.f32.mrf.mxu0
    %v409 = vadd.f32 0.0, %v408
    %v410 = vpop.f32.mrf.mxu0
    %v411 = vadd.f32 0.0, %v410
    %412 = vmatmul.bf16.gmra.mxu0 %v236
    %v413 = vpop.f32.mrf.mxu0
    %v414 = vadd.f32 0.0, %v413
    %v415 = vpop.f32.mrf.mxu0
    %v416 = vadd.f32 0.0, %v415
    %417 = vmatmul.bf16.gmra.mxu0 %v237
    %v418 = vpop.f32.mrf.mxu0
    %v419 = vadd.f32 0.0, %v418
    %v420 = vpop.f32.mrf.mxu0
    %v421 = vadd.f32 0.0, %v420
    %422 = vmatmul.bf16.gmra.mxu0 %v238
    %v423 = vpop.f32.mrf.mxu0
    %v424 = vadd.f32 0.0, %v423
    %v425 = vpop.f32.mrf.mxu0
    %v426 = vadd.f32 0.0, %v425
    %427 = vmatmul.bf16.gmra.mxu0 %v239
    %v428 = vpop.f32.mrf.mxu0
    %v429 = vadd.f32 0.0, %v428
    %v430 = vpop.f32.mrf.mxu0
    %v431 = vadd.f32 0.0, %v430
    %432 = vmatmul.bf16.gmra.mxu0 %v240
    %v433 = vpop.f32.mrf.mxu0
    %v434 = vadd.f32 0.0, %v433
    %v435 = vpop.f32.mrf.mxu0
    %v436 = vadd.f32 0.0, %v435
    %437 = vmatmul.bf16.gmra.mxu0 %v241
    %v438 = vpop.f32.mrf.mxu0
    %v439 = vadd.f32 0.0, %v438
    %v440 = vpop.f32.mrf.mxu0
    %v441 = vadd.f32 0.0, %v440
    %442 = vmatmul.bf16.gmra.mxu0 %v242
    %v443 = vpop.f32.mrf.mxu0
    %v444 = vadd.f32 0.0, %v443
    %v445 = vpop.f32.mrf.mxu0
    %v446 = vadd.f32 0.0, %v445
    %447 = vmatmul.bf16.gmra.mxu0 %v243
    %v448 = vpop.f32.mrf.mxu0
    %v449 = vadd.f32 0.0, %v448
    %v450 = vpop.f32.mrf.mxu0
    %v451 = vadd.f32 0.0, %v450
    %452 = vmatmul.bf16.gmra.mxu0 %v244
    %v453 = vpop.f32.mrf.mxu0
    %v454 = vadd.f32 0.0, %v453
    %v455 = vpop.f32.mrf.mxu0
    %v456 = vadd.f32 0.0, %v455
    %457 = vmatmul.bf16.gmra.mxu0 %v245
    %v458 = vpop.f32.mrf.mxu0
    %v459 = vadd.f32 0.0, %v458
    %v460 = vpop.f32.mrf.mxu0
    %v461 = vadd.f32 0.0, %v460
    %462 = vmatmul.bf16.gmra.mxu0 %v246
    %v463 = vpop.f32.mrf.mxu0
    %v464 = vadd.f32 0.0, %v463
    %v465 = vpop.f32.mrf.mxu0
    %v466 = vadd.f32 0.0, %v465
    %467 = vmatmul.bf16.gmra.mxu0 %v247
    %v468 = vpop.f32.mrf.mxu0
    %v469 = vadd.f32 0.0, %v468
    %v470 = vpop.f32.mrf.mxu0
    %v471 = vadd.f32 0.0, %v470
    %472 = vmatmul.bf16.gmra.mxu0 %v248
    %v473 = vpop.f32.mrf.mxu0
    %v474 = vadd.f32 0.0, %v473
    %v475 = vpop.f32.mrf.mxu0
    %v476 = vadd.f32 0.0, %v475
    %477 = vmatmul.bf16.gmra.mxu0 %v249
    %v478 = vpop.f32.mrf.mxu0
    %v479 = vadd.f32 0.0, %v478
    %v480 = vpop.f32.mrf.mxu0
    %v481 = vadd.f32 0.0, %v480
    %482 = vmatmul.bf16.gmra.mxu0 %v250
    %v483 = vpop.f32.mrf.mxu0
    %v484 = vadd.f32 0.0, %v483
    %v485 = vpop.f32.mrf.mxu0
    %v486 = vadd.f32 0.0, %v485
    %487 = vmatmul.bf16.gmra.mxu0 %v251
    %v488 = vpop.f32.mrf.mxu0
    %v489 = vadd.f32 0.0, %v488
    %v490 = vpop.f32.mrf.mxu0
    %v491 = vadd.f32 0.0, %v490
    %492 = vmatmul.bf16.gmra.mxu0 %v252
    %v493 = vpop.f32.mrf.mxu0
    %v494 = vadd.f32 0.0, %v493
    %v495 = vpop.f32.mrf.mxu0
    %v496 = vadd.f32 0.0, %v495
    %497 = vmatmul.bf16.gmra.mxu0 %v253
    %v498 = vpop.f32.mrf.mxu0
    %v499 = vadd.f32 0.0, %v498
    %v500 = vpop.f32.mrf.mxu0
    %v501 = vadd.f32 0.0, %v500
    %502 = vdwg.mxu0
    %503 = vst [vmem:[%s2] sm:$0xff] %v344
    %504 = vst [vmem:[%s2 + $0x8] sm:$0xff] %v346
    %505 = vst [vmem:[%s2 + $0x10] sm:$0xff] %v349
    %506 = vst [vmem:[%s2 + $0x18] sm:$0xff] %v351
    %507 = vst [vmem:[%s2 + $0x20] sm:$0xff] %v354
    %508 = vst [vmem:[%s2 + $0x28] sm:$0xff] %v356
    %509 = vst [vmem:[%s2 + $0x30] sm:$0xff] %v359
    %510 = vst [vmem:[%s2 + $0x38] sm:$0xff] %v361
    %511 = vst [vmem:[%s2 + $0x40] sm:$0xff] %v364
    %512 = vst [vmem:[%s2 + $0x48] sm:$0xff] %v366
    %513 = vst [vmem:[%s2 + $0x50] sm:$0xff] %v369
    %514 = vst [vmem:[%s2 + $0x58] sm:$0xff] %v371
    %515 = vst [vmem:[%s2 + $0x60] sm:$0xff] %v374
    %516 = vst [vmem:[%s2 + $0x68] sm:$0xff] %v376
    %517 = vst [vmem:[%s2 + $0x70] sm:$0xff] %v379
    %518 = vst [vmem:[%s2 + $0x78] sm:$0xff] %v381
    %519 = vst [vmem:[%s2 + $0x80] sm:$0xff] %v384
    %520 = vst [vmem:[%s2 + $0x88] sm:$0xff] %v386
    %521 = vst [vmem:[%s2 + $0x90] sm:$0xff] %v389
    %522 = vst [vmem:[%s2 + $0x98] sm:$0xff] %v391
    %523 = vst [vmem:[%s2 + $0xa0] sm:$0xff] %v394
    %524 = vst [vmem:[%s2 + $0xa8] sm:$0xff] %v396
    %525 = vst [vmem:[%s2 + $0xb0] sm:$0xff] %v399
    %526 = vst [vmem:[%s2 + $0xb8] sm:$0xff] %v401
    %527 = vst [vmem:[%s2 + $0xc0] sm:$0xff] %v404
    %528 = vst [vmem:[%s2 + $0xc8] sm:$0xff] %v406
    %529 = vst [vmem:[%s2 + $0xd0] sm:$0xff] %v409
    %530 = vst [vmem:[%s2 + $0xd8] sm:$0xff] %v411
    %531 = vst [vmem:[%s2 + $0xe0] sm:$0xff] %v414
    %532 = vst [vmem:[%s2 + $0xe8] sm:$0xff] %v416
    %533 = vst [vmem:[%s2 + $0xf0] sm:$0xff] %v419
    %534 = vst [vmem:[%s2 + $0xf8] sm:$0xff] %v421
    %535 = vst [vmem:[%s2 + $0x100] sm:$0xff] %v424
    %536 = vst [vmem:[%s2 + $0x108] sm:$0xff] %v426
    %537 = vst [vmem:[%s2 + $0x110] sm:$0xff] %v429
    %538 = vst [vmem:[%s2 + $0x118] sm:$0xff] %v431
    %539 = vst [vmem:[%s2 + $0x120] sm:$0xff] %v434
    %540 = vst [vmem:[%s2 + $0x128] sm:$0xff] %v436
    %541 = vst [vmem:[%s2 + $0x130] sm:$0xff] %v439
    %542 = vst [vmem:[%s2 + $0x138] sm:$0xff] %v441
    %543 = vst [vmem:[%s2 + $0x140] sm:$0xff] %v444
    %544 = vst [vmem:[%s2 + $0x148] sm:$0xff] %v446
    %545 = vst [vmem:[%s2 + $0x150] sm:$0xff] %v449
    %546 = vst [vmem:[%s2 + $0x158] sm:$0xff] %v451
    %547 = vst [vmem:[%s2 + $0x160] sm:$0xff] %v454
    %548 = vst [vmem:[%s2 + $0x168] sm:$0xff] %v456
    %549 = vst [vmem:[%s2 + $0x170] sm:$0xff] %v459
    %550 = vst [vmem:[%s2 + $0x178] sm:$0xff] %v461
    %551 = vst [vmem:[%s2 + $0x180] sm:$0xff] %v464
    %552 = vst [vmem:[%s2 + $0x188] sm:$0xff] %v466
    %553 = vst [vmem:[%s2 + $0x190] sm:$0xff] %v469
    %554 = vst [vmem:[%s2 + $0x198] sm:$0xff] %v471
    %555 = vst [vmem:[%s2 + $0x1a0] sm:$0xff] %v474
    %556 = vst [vmem:[%s2 + $0x1a8] sm:$0xff] %v476
    %557 = vst [vmem:[%s2 + $0x1b0] sm:$0xff] %v479
    %558 = vst [vmem:[%s2 + $0x1b8] sm:$0xff] %v481
    %559 = vst [vmem:[%s2 + $0x1c0] sm:$0xff] %v484
    %560 = vst [vmem:[%s2 + $0x1c8] sm:$0xff] %v486
    %561 = vst [vmem:[%s2 + $0x1d0] sm:$0xff] %v489
    %562 = vst [vmem:[%s2 + $0x1d8] sm:$0xff] %v491
    %563 = vst [vmem:[%s2 + $0x1e0] sm:$0xff] %v494
    %564 = vst [vmem:[%s2 + $0x1e8] sm:$0xff] %v496
    %565 = vst [vmem:[%s2 + $0x1f0] sm:$0xff] %v499
    %566 = vst [vmem:[%s2 + $0x1f8] sm:$0xff] %v501
    %567 = vst [vmem:[#allocation2] sm:$0xff] 0.0
    %v568 = vadd.f32 %v344, %v346
    %v569 = vadd.f32 %v568, %v349
    %v570 = vadd.f32 %v569, %v351
    %v571 = vadd.f32 %v570, %v354
    %v572 = vadd.f32 %v571, %v356
    %v573 = vadd.f32 %v572, %v359
    %v574 = vadd.f32 %v573, %v361
    %v575 = vadd.f32 %v574, %v364
    %v576 = vadd.f32 %v575, %v366
    %v577 = vadd.f32 %v576, %v369
    %v578 = vadd.f32 %v577, %v371
    %v579 = vadd.f32 %v578, %v374
    %v580 = vadd.f32 %v579, %v376
    %v581 = vadd.f32 %v580, %v379
    %v582 = vadd.f32 %v581, %v381
    %v583 = vadd.f32 %v582, %v384
    %v584 = vadd.f32 %v583, %v386
    %v585 = vadd.f32 %v584, %v389
    %v586 = vadd.f32 %v585, %v391
    %v587 = vadd.f32 %v586, %v394
    %v588 = vadd.f32 %v587, %v396
    %v589 = vadd.f32 %v588, %v399
    %v590 = vadd.f32 %v589, %v401
    %v591 = vadd.f32 %v590, %v404
    %v592 = vadd.f32 %v591, %v406
    %v593 = vadd.f32 %v592, %v409
    %v594 = vadd.f32 %v593, %v411
    %v595 = vadd.f32 %v594, %v414
    %v596 = vadd.f32 %v595, %v416
    %v597 = vadd.f32 %v596, %v419
    %v598 = vadd.f32 %v597, %v421
    %v599 = vadd.f32 %v598, %v424
    %v600 = vadd.f32 %v599, %v426
    %v601 = vadd.f32 %v600, %v429
    %v602 = vadd.f32 %v601, %v431
    %v603 = vadd.f32 %v602, %v434
    %v604 = vadd.f32 %v603, %v436
    %v605 = vadd.f32 %v604, %v439
    %v606 = vadd.f32 %v605, %v441
    %v607 = vadd.f32 %v606, %v444
    %v608 = vadd.f32 %v607, %v446
    %v609 = vadd.f32 %v608, %v449
    %v610 = vadd.f32 %v609, %v451
    %v611 = vadd.f32 %v610, %v454
    %v612 = vadd.f32 %v611, %v456
    %v613 = vadd.f32 %v612, %v459
    %v614 = vadd.f32 %v613, %v461
    %v615 = vadd.f32 %v614, %v464
    %v616 = vadd.f32 %v615, %v466
    %v617 = vadd.f32 %v616, %v469
    %v618 = vadd.f32 %v617, %v471
    %v619 = vadd.f32 %v618, %v474
    %v620 = vadd.f32 %v619, %v476
    %v621 = vadd.f32 %v620, %v479
    %v622 = vadd.f32 %v621, %v481
    %v623 = vadd.f32 %v622, %v484
    %v624 = vadd.f32 %v623, %v486
    %v625 = vadd.f32 %v624, %v489
    %v626 = vadd.f32 %v625, %v491
    %v627 = vadd.f32 %v626, %v494
    %v628 = vadd.f32 %v627, %v496
    %v629 = vadd.f32 %v628, %v499
    %v630 = vadd.f32 %v629, %v501
    %v631 = vrot.slane %v630, 4
    %v632 = vadd.f32 %v630, %v631
    %v633 = vrot.slane %v632, 2
    %v634 = vadd.f32 %v632, %v633
    %v635 = vrot.slane %v634, 1
    %v636 = vadd.f32 %v634, %v635
    %637 = vst [vmem:[#allocation2] sm:$0x1] %v636
    %v638 = vmul.f32 %v344, %v344
    %v639 = vmul.f32 %v346, %v346
    %v640 = vmul.f32 %v349, %v349
    %v641 = vmul.f32 %v351, %v351
    %v642 = vmul.f32 %v354, %v354
    %v643 = vmul.f32 %v356, %v356
    %v644 = vmul.f32 %v359, %v359
    %v645 = vmul.f32 %v361, %v361
    %v646 = vmul.f32 %v364, %v364
    %v647 = vmul.f32 %v366, %v366
    %v648 = vmul.f32 %v369, %v369
    %v649 = vmul.f32 %v371, %v371
    %v650 = vmul.f32 %v374, %v374
    %v651 = vmul.f32 %v376, %v376
    %v652 = vmul.f32 %v379, %v379
    %v653 = vmul.f32 %v381, %v381
    %v654 = vmul.f32 %v384, %v384
    %v655 = vmul.f32 %v386, %v386
    %v656 = vmul.f32 %v389, %v389
    %v657 = vmul.f32 %v391, %v391
    %v658 = vmul.f32 %v394, %v394
    %v659 = vmul.f32 %v396, %v396
    %v660 = vmul.f32 %v399, %v399
    %v661 = vmul.f32 %v401, %v401
    %v662 = vmul.f32 %v404, %v404
    %v663 = vmul.f32 %v406, %v406
    %v664 = vmul.f32 %v409, %v409
    %v665 = vmul.f32 %v411, %v411
    %v666 = vmul.f32 %v414, %v414
    %v667 = vmul.f32 %v416, %v416
    %v668 = vmul.f32 %v419, %v419
    %v669 = vmul.f32 %v421, %v421
    %v670 = vmul.f32 %v424, %v424
    %v671 = vmul.f32 %v426, %v426
    %v672 = vmul.f32 %v429, %v429
    %v673 = vmul.f32 %v431, %v431
    %v674 = vmul.f32 %v434, %v434
    %v675 = vmul.f32 %v436, %v436
    %v676 = vmul.f32 %v439, %v439
    %v677 = vmul.f32 %v441, %v441
    %v678 = vmul.f32 %v444, %v444
    %v679 = vmul.f32 %v446, %v446
    %v680 = vmul.f32 %v449, %v449
    %v681 = vmul.f32 %v451, %v451
    %v682 = vmul.f32 %v454, %v454
    %v683 = vmul.f32 %v456, %v456
    %v684 = vmul.f32 %v459, %v459
    %v685 = vmul.f32 %v461, %v461
    %v686 = vmul.f32 %v464, %v464
    %v687 = vmul.f32 %v466, %v466
    %v688 = vmul.f32 %v469, %v469
    %v689 = vmul.f32 %v471, %v471
    %v690 = vmul.f32 %v474, %v474
    %v691 = vmul.f32 %v476, %v476
    %v692 = vmul.f32 %v479, %v479
    %v693 = vmul.f32 %v481, %v481
    %v694 = vmul.f32 %v484, %v484
    %v695 = vmul.f32 %v486, %v486
    %v696 = vmul.f32 %v489, %v489
    %v697 = vmul.f32 %v491, %v491
    %v698 = vmul.f32 %v494, %v494
    %v699 = vmul.f32 %v496, %v496
    %v700 = vmul.f32 %v499, %v499
    %v701 = vmul.f32 %v501, %v501
    %v702 = vadd.f32 %v638, %v639
    %v703 = vadd.f32 %v702, %v640
    %v704 = vadd.f32 %v703, %v641
    %v705 = vadd.f32 %v704, %v642
    %v706 = vadd.f32 %v705, %v643
    %v707 = vadd.f32 %v706, %v644
    %v708 = vadd.f32 %v707, %v645
    %v709 = vadd.f32 %v708, %v646
    %v710 = vadd.f32 %v709, %v647
    %v711 = vadd.f32 %v710, %v648
    %v712 = vadd.f32 %v711, %v649
    %v713 = vadd.f32 %v712, %v650
    %v714 = vadd.f32 %v713, %v651
    %v715 = vadd.f32 %v714, %v652
    %v716 = vadd.f32 %v715, %v653
    %v717 = vadd.f32 %v716, %v654
    %v718 = vadd.f32 %v717, %v655
    %v719 = vadd.f32 %v718, %v656
    %v720 = vadd.f32 %v719, %v657
    %v721 = vadd.f32 %v720, %v658
    %v722 = vadd.f32 %v721, %v659
    %v723 = vadd.f32 %v722, %v660
    %v724 = vadd.f32 %v723, %v661
    %v725 = vadd.f32 %v724, %v662
    %v726 = vadd.f32 %v725, %v663
    %v727 = vadd.f32 %v726, %v664
    %v728 = vadd.f32 %v727, %v665
    %v729 = vadd.f32 %v728, %v666
    %v730 = vadd.f32 %v729, %v667
    %v731 = vadd.f32 %v730, %v668
    %v732 = vadd.f32 %v731, %v669
    %v733 = vadd.f32 %v732, %v670
    %v734 = vadd.f32 %v733, %v671
    %v735 = vadd.f32 %v734, %v672
    %v736 = vadd.f32 %v735, %v673
    %v737 = vadd.f32 %v736, %v674
    %v738 = vadd.f32 %v737, %v675
    %v739 = vadd.f32 %v738, %v676
    %v740 = vadd.f32 %v739, %v677
    %v741 = vadd.f32 %v740, %v678
    %v742 = vadd.f32 %v741, %v679
    %v743 = vadd.f32 %v742, %v680
    %v744 = vadd.f32 %v743, %v681
    %v745 = vadd.f32 %v744, %v682
    %v746 = vadd.f32 %v745, %v683
    %v747 = vadd.f32 %v746, %v684
    %v748 = vadd.f32 %v747, %v685
    %v749 = vadd.f32 %v748, %v686
    %v750 = vadd.f32 %v749, %v687
    %v751 = vadd.f32 %v750, %v688
    %v752 = vadd.f32 %v751, %v689
    %v753 = vadd.f32 %v752, %v690
    %v754 = vadd.f32 %v753, %v691
    %v755 = vadd.f32 %v754, %v692
    %v756 = vadd.f32 %v755, %v693
    %v757 = vadd.f32 %v756, %v694
    %v758 = vadd.f32 %v757, %v695
    %v759 = vadd.f32 %v758, %v696
    %v760 = vadd.f32 %v759, %v697
    %v761 = vadd.f32 %v760, %v698
    %v762 = vadd.f32 %v761, %v699
    %v763 = vadd.f32 %v762, %v700
    %v764 = vadd.f32 %v763, %v701
    %v765 = vrot.slane %v764, 4
    %v766 = vadd.f32 %v764, %v765
    %v767 = vrot.slane %v766, 2
    %v768 = vadd.f32 %v766, %v767
    %v769 = vrot.slane %v768, 1
    %v770 = vadd.f32 %v768, %v769
    %771 = vst [vmem:[#allocation2 + $0x1] sm:$0x1] %v770
    // Predicated region
    $region10: #{forward.12} parent=1 // pred_check
      _
    $region11: #{forward.12} parent=1 // pred_check_branch
      %773 = sbr.rel (0) target = $region13
    $region12: #{forward.12} parent=1 // pred_region
      _
    $region13: #{forward.12} parent=1 // pred_fallthru
      _
    // Predicated region
    $region14: #{forward.12} parent=1 // pred_check
      _
    $region15: #{forward.12} parent=1 // pred_check_branch
      %775 = sbr.rel (0) target = $region17
    $region16: #{forward.12} parent=1 // pred_region
      %777 = vsyncadd [#allocation3], 0
      %s779 = sshll.u32 [#allocation2], 4
      %s780 = int_to_ptr.vmem [resolvable:$true] %s779
      %s781 = sshll.u32 %s3, 4
      %s782 = int_to_ptr.hbm [resolvable:$true] %s781
      %784 = dma.vmem_to_hbm [thread:$0]  %s780, 128, %s782, [#allocation3]
    $region17: #{forward.12} parent=1 // pred_fallthru
      _
    // Predicated region
    $region18: #{forward.12} parent=1 // pred_check
      _
    $region19: #{forward.12} parent=1 // pred_check_branch
      %786 = sbr.rel (0) target = $region21
    $region20: #{forward.12} parent=1 // pred_region
      _
    $region21: #{forward.12} parent=1 // pred_fallthru
      _
    // Predicated region
    $region22: #{forward.12} parent=1 // pred_check
      _
    $region23: #{forward.12} parent=1 // pred_check_branch
      %788 = sbr.rel (0) target = $region25
    $region24: #{forward.12} parent=1 // pred_region
      %790 = dma.done [#allocation3], 128
    $region25: #{forward.12} parent=1 // pred_fallthru
      _
    %791 = vsyncpa [#allocation3], 1

// kernel: forward.13
$region0: #{forward.13}
  #allocation0 [shape = 'u32[]', space=smem, size = 0x4, offset = 0x4, fixed_abs, tag = 'smem constant byte address 0x4 - core index']
  #allocation1 [shape = 'u32[72,128]{1,0:T(1,128)}', space=vmem, size = 0x9000, scoped, tag = 'internal scratch']
  %s0 = inlined_call_operand.vmem [shape: bf16[128,256], index: 0, kind: input, shape index: {}]
  %s1 = inlined_call_operand.vmem [shape: bf16[256,128], index: 1, kind: input, shape index: {}]
  %s2 = inlined_call_operand.vmem [shape: f32[128,128], index: 2, kind: output, shape index: {0}]
  %s3 = inlined_call_operand.vmem [shape: f32[8,128], index: 3, kind: output, shape index: {1}]
  %4 = xla_tuple %s2, %s3
  %s5 = sld [smem:[#allocation0]]
  $region26: #{forward.13} parent=0
    _
  %s7 = ssub.s32 1, %s5
  %s8 = scalar_select 0, %s7, %s5
  // Predicated region
  $region2: #{forward.13} parent=0 // pred_check
    _
  $region3: #{forward.13} parent=0 // pred_check_branch
    %10 = sbr.rel (0) target = $region5
  $region4: #{forward.13} parent=0 // pred_region
    _
  $region5: #{forward.13} parent=0 // pred_fallthru
    _
  // Predicated region
  $region6: #{forward.13} parent=0 // pred_check
    _
  $region7: #{forward.13} parent=0 // pred_check_branch
    %12 = sbr.rel (0) target = $region9
  $region8: #{forward.13} parent=0 // pred_region
    _
  $region9: #{forward.13} parent=0 // pred_fallthru
    _
  %v13 = vld [vmem:[%s0] sm:$0xff]
  %v14 = vld [vmem:[%s0 + $0x8] sm:$0xff]
  %v15 = vld [vmem:[%s0 + $0x10] sm:$0xff]
  %v16 = vld [vmem:[%s0 + $0x18] sm:$0xff]
  %v17 = vld [vmem:[%s0 + $0x20] sm:$0xff]
  %v18 = vld [vmem:[%s0 + $0x28] sm:$0xff]
  %v19 = vld [vmem:[%s0 + $0x30] sm:$0xff]
  %v20 = vld [vmem:[%s0 + $0x38] sm:$0xff]
  %v21 = vld [vmem:[%s0 + $0x40] sm:$0xff]
  %v22 = vld [vmem:[%s0 + $0x48] sm:$0xff]
  %v23 = vld [vmem:[%s0 + $0x50] sm:$0xff]
  %v24 = vld [vmem:[%s0 + $0x58] sm:$0xff]
  %v25 = vld [vmem:[%s0 + $0x60] sm:$0xff]
  %v26 = vld [vmem:[%s0 + $0x68] sm:$0xff]
  %v27 = vld [vmem:[%s0 + $0x70] sm:$0xff]
  %v28 = vld [vmem:[%s0 + $0x78] sm:$0xff]
  %v29 = vld [vmem:[%s1] sm:$0xf]
  %v30 = vld [vmem:[%s1 + $0x4] sm:$0xf]
  %v31 = vld [vmem:[%s1 + $0x8] sm:$0xf]
  %v32 = vld [vmem:[%s1 + $0xc] sm:$0xf]
  %v33 = vld [vmem:[%s1 + $0x10] sm:$0xf]
  %v34 = vld [vmem:[%s1 + $0x14] sm:$0xf]
  %v35 = vld [vmem:[%s1 + $0x18] sm:$0xf]
  %v36 = vld [vmem:[%s1 + $0x1c] sm:$0xf]
  %v37 = vld [vmem:[%s1 + $0x20] sm:$0xf]
  %v38 = vld [vmem:[%s1 + $0x24] sm:$0xf]
  %v39 = vld [vmem:[%s1 + $0x28] sm:$0xf]
  %v40 = vld [vmem:[%s1 + $0x2c] sm:$0xf]
  %v41 = vld [vmem:[%s1 + $0x30] sm:$0xf]
  %v42 = vld [vmem:[%s1 + $0x34] sm:$0xf]
  %v43 = vld [vmem:[%s1 + $0x38] sm:$0xf]
  %v44 = vld [vmem:[%s1 + $0x3c] sm:$0xf]
  %v45 = vld [vmem:[%s1 + $0x40] sm:$0xf]
  %v46 = vld [vmem:[%s1 + $0x44] sm:$0xf]
  %v47 = vld [vmem:[%s1 + $0x48] sm:$0xf]
  %v48 = vld [vmem:[%s1 + $0x4c] sm:$0xf]
  %v49 = vld [vmem:[%s1 + $0x50] sm:$0xf]
  %v50 = vld [vmem:[%s1 + $0x54] sm:$0xf]
  %v51 = vld [vmem:[%s1 + $0x58] sm:$0xf]
  %v52 = vld [vmem:[%s1 + $0x5c] sm:$0xf]
  %v53 = vld [vmem:[%s1 + $0x60] sm:$0xf]
  %v54 = vld [vmem:[%s1 + $0x64] sm:$0xf]
  %v55 = vld [vmem:[%s1 + $0x68] sm:$0xf]
  %v56 = vld [vmem:[%s1 + $0x6c] sm:$0xf]
  %v57 = vld [vmem:[%s1 + $0x70] sm:$0xf]
  %v58 = vld [vmem:[%s1 + $0x74] sm:$0xf]
  %v59 = vld [vmem:[%s1 + $0x78] sm:$0xf]
  %v60 = vld [vmem:[%s1 + $0x7c] sm:$0xf]
  %v77 = vunpack.c.l.b16 %v13
  %v78 = vunpack.c.h.b16 %v13
  %v79 = vunpack.c.l.b16 %v14
  %v80 = vunpack.c.h.b16 %v14
  %v81 = vunpack.c.l.b16 %v15
  %v82 = vunpack.c.h.b16 %v15
  %v83 = vunpack.c.l.b16 %v16
  %v84 = vunpack.c.h.b16 %v16
  %v85 = vunpack.c.l.b16 %v17
  %v86 = vunpack.c.h.b16 %v17
  %v87 = vunpack.c.l.b16 %v18
  %v88 = vunpack.c.h.b16 %v18
  %v89 = vunpack.c.l.b16 %v19
  %v90 = vunpack.c.h.b16 %v19
  %v91 = vunpack.c.l.b16 %v20
  %v92 = vunpack.c.h.b16 %v20
  %v93 = vunpack.c.l.b16 %v21
  %v94 = vunpack.c.h.b16 %v21
  %v95 = vunpack.c.l.b16 %v22
  %v96 = vunpack.c.h.b16 %v22
  %v97 = vunpack.c.l.b16 %v23
  %v98 = vunpack.c.h.b16 %v23
  %v99 = vunpack.c.l.b16 %v24
  %v100 = vunpack.c.h.b16 %v24
  %v101 = vunpack.c.l.b16 %v25
  %v102 = vunpack.c.h.b16 %v25
  %v103 = vunpack.c.l.b16 %v26
  %v104 = vunpack.c.h.b16 %v26
  %v105 = vunpack.c.l.b16 %v27
  %v106 = vunpack.c.h.b16 %v27
  %v107 = vunpack.c.l.b16 %v28
  %v108 = vunpack.c.h.b16 %v28
  %v109 = vpack.c.b16 %v79, %v77
  %v110 = vpack.c.b16 %v80, %v78
  %v111 = vpack.c.b16 %v83, %v81
  %v112 = vpack.c.b16 %v84, %v82
  %v113 = vpack.c.b16 %v87, %v85
  %v114 = vpack.c.b16 %v88, %v86
  %v115 = vpack.c.b16 %v91, %v89
  %v116 = vpack.c.b16 %v92, %v90
  %v117 = vpack.c.b16 %v95, %v93
  %v118 = vpack.c.b16 %v96, %v94
  %v119 = vpack.c.b16 %v99, %v97
  %v120 = vpack.c.b16 %v100, %v98
  %v121 = vpack.c.b16 %v103, %v101
  %v122 = vpack.c.b16 %v104, %v102
  %v123 = vpack.c.b16 %v107, %v105
  %v124 = vpack.c.b16 %v108, %v106
  %v173 = vunpack.c.l.b16 %v29
  %v174 = vunpack.c.l.b16 %v30
  %v175 = vunpack.c.l.b16 %v31
  %v176 = vunpack.c.l.b16 %v32
  %v177 = vunpack.c.l.b16 %v33
  %v178 = vunpack.c.l.b16 %v34
  %v179 = vunpack.c.l.b16 %v35
  %v180 = vunpack.c.l.b16 %v36
  %v181 = vunpack.c.l.b16 %v37
  %v182 = vunpack.c.l.b16 %v38
  %v183 = vunpack.c.l.b16 %v39
  %v184 = vunpack.c.l.b16 %v40
  %v185 = vunpack.c.l.b16 %v41
  %v186 = vunpack.c.l.b16 %v42
  %v187 = vunpack.c.l.b16 %v43
  %v188 = vunpack.c.l.b16 %v44
  %v189 = vunpack.c.l.b16 %v45
  %v190 = vunpack.c.l.b16 %v46
  %v191 = vunpack.c.l.b16 %v47
  %v192 = vunpack.c.l.b16 %v48
  %v193 = vunpack.c.l.b16 %v49
  %v194 = vunpack.c.l.b16 %v50
  %v195 = vunpack.c.l.b16 %v51
  %v196 = vunpack.c.l.b16 %v52
  %v197 = vunpack.c.l.b16 %v53
  %v198 = vunpack.c.l.b16 %v54
  %v199 = vunpack.c.l.b16 %v55
  %v200 = vunpack.c.l.b16 %v56
  %v201 = vunpack.c.l.b16 %v57
  %v202 = vunpack.c.l.b16 %v58
  %v203 = vunpack.c.l.b16 %v59
  %v204 = vunpack.c.l.b16 %v60
  %v205 = vpack.c.b16 %v174, %v173
  %v206 = vpack.c.b16 %v176, %v175
  %v207 = vpack.c.b16 %v178, %v177
  %v208 = vpack.c.b16 %v180, %v179
  %v209 = vpack.c.b16 %v182, %v181
  %v210 = vpack.c.b16 %v184, %v183
  %v211 = vpack.c.b16 %v186, %v185
  %v212 = vpack.c.b16 %v188, %v187
  %v213 = vpack.c.b16 %v190, %v189
  %v214 = vpack.c.b16 %v192, %v191
  %v215 = vpack.c.b16 %v194, %v193
  %v216 = vpack.c.b16 %v196, %v195
  %v217 = vpack.c.b16 %v198, %v197
  %v218 = vpack.c.b16 %v200, %v199
  %v219 = vpack.c.b16 %v202, %v201
  %v220 = vpack.c.b16 %v204, %v203
  %237 = vmatpush.bf16.msra.mxu0 %v212
  %238 = vmatpush.bf16.msra.mxu0 %v211
  %239 = vmatpush.bf16.msra.mxu0 %v210
  %240 = vmatpush.bf16.msra.mxu0 %v209
  %241 = vmatpush.bf16.msra.mxu0 %v208
  %242 = vmatpush.bf16.msra.mxu0 %v207
  %243 = vmatpush.bf16.msra.mxu0 %v206
  %244 = vmatpush.bf16.msra.mxu0 %v205
  %245 = vmatmul.bf16.gmra.mxu0 %v109
  %v246 = vpop.f32.mrf.mxu0
  %v247 = vadd.f32 0.0, %v246
  %v248 = vpop.f32.mrf.mxu0
  %v249 = vadd.f32 0.0, %v248
  %250 = vmatmul.bf16.gmra.mxu0 %v111
  %v251 = vpop.f32.mrf.mxu0
  %v252 = vadd.f32 0.0, %v251
  %v253 = vpop.f32.mrf.mxu0
  %v254 = vadd.f32 0.0, %v253
  %255 = vmatmul.bf16.gmra.mxu0 %v113
  %v256 = vpop.f32.mrf.mxu0
  %v257 = vadd.f32 0.0, %v256
  %v258 = vpop.f32.mrf.mxu0
  %v259 = vadd.f32 0.0, %v258
  %260 = vmatmul.bf16.gmra.mxu0 %v115
  %v261 = vpop.f32.mrf.mxu0
  %v262 = vadd.f32 0.0, %v261
  %v263 = vpop.f32.mrf.mxu0
  %v264 = vadd.f32 0.0, %v263
  %265 = vmatmul.bf16.gmra.mxu0 %v117
  %v266 = vpop.f32.mrf.mxu0
  %v267 = vadd.f32 0.0, %v266
  %v268 = vpop.f32.mrf.mxu0
  %v269 = vadd.f32 0.0, %v268
  %270 = vmatmul.bf16.gmra.mxu0 %v119
  %v271 = vpop.f32.mrf.mxu0
  %v272 = vadd.f32 0.0, %v271
  %v273 = vpop.f32.mrf.mxu0
  %v274 = vadd.f32 0.0, %v273
  %275 = vmatmul.bf16.gmra.mxu0 %v121
  %v276 = vpop.f32.mrf.mxu0
  %v277 = vadd.f32 0.0, %v276
  %v278 = vpop.f32.mrf.mxu0
  %v279 = vadd.f32 0.0, %v278
  %280 = vmatmul.bf16.gmra.mxu0 %v123
  %v281 = vpop.f32.mrf.mxu0
  %v282 = vadd.f32 0.0, %v281
  %v283 = vpop.f32.mrf.mxu0
  %v284 = vadd.f32 0.0, %v283
  %285 = vdwg.mxu0
  %286 = vmatpush.bf16.msra.mxu0 %v220
  %287 = vmatpush.bf16.msra.mxu0 %v219
  %288 = vmatpush.bf16.msra.mxu0 %v218
  %289 = vmatpush.bf16.msra.mxu0 %v217
  %290 = vmatpush.bf16.msra.mxu0 %v216
  %291 = vmatpush.bf16.msra.mxu0 %v215
  %292 = vmatpush.bf16.msra.mxu0 %v214
  %293 = vmatpush.bf16.msra.mxu0 %v213
  %294 = vmatmul.bf16.gmra.mxu0 %v110
  %v295 = vpop.f32.mrf.mxu0
  %v296 = vadd.f32 %v247, %v295
  %v297 = vpop.f32.mrf.mxu0
  %v298 = vadd.f32 %v249, %v297
  %299 = vmatmul.bf16.gmra.mxu0 %v112
  %v300 = vpop.f32.mrf.mxu0
  %v301 = vadd.f32 %v252, %v300
  %v302 = vpop.f32.mrf.mxu0
  %v303 = vadd.f32 %v254, %v302
  %304 = vmatmul.bf16.gmra.mxu0 %v114
  %v305 = vpop.f32.mrf.mxu0
  %v306 = vadd.f32 %v257, %v305
  %v307 = vpop.f32.mrf.mxu0
  %v308 = vadd.f32 %v259, %v307
  %309 = vmatmul.bf16.gmra.mxu0 %v116
  %v310 = vpop.f32.mrf.mxu0
  %v311 = vadd.f32 %v262, %v310
  %v312 = vpop.f32.mrf.mxu0
  %v313 = vadd.f32 %v264, %v312
  %314 = vmatmul.bf16.gmra.mxu0 %v118
  %v315 = vpop.f32.mrf.mxu0
  %v316 = vadd.f32 %v267, %v315
  %v317 = vpop.f32.mrf.mxu0
  %v318 = vadd.f32 %v269, %v317
  %319 = vmatmul.bf16.gmra.mxu0 %v120
  %v320 = vpop.f32.mrf.mxu0
  %v321 = vadd.f32 %v272, %v320
  %v322 = vpop.f32.mrf.mxu0
  %v323 = vadd.f32 %v274, %v322
  %324 = vmatmul.bf16.gmra.mxu0 %v122
  %v325 = vpop.f32.mrf.mxu0
  %v326 = vadd.f32 %v277, %v325
  %v327 = vpop.f32.mrf.mxu0
  %v328 = vadd.f32 %v279, %v327
  %329 = vmatmul.bf16.gmra.mxu0 %v124
  %v330 = vpop.f32.mrf.mxu0
  %v331 = vadd.f32 %v282, %v330
  %v332 = vpop.f32.mrf.mxu0
  %v333 = vadd.f32 %v284, %v332
  %334 = vdwg.mxu0
  %335 = vst [vmem:[%s2] sm:$0xff] %v296
  %336 = vst [vmem:[%s2 + $0x8] sm:$0xff] %v298
  %337 = vst [vmem:[%s2 + $0x10] sm:$0xff] %v301
  %338 = vst [vmem:[%s2 + $0x18] sm:$0xff] %v303
  %339 = vst [vmem:[%s2 + $0x20] sm:$0xff] %v306
  %340 = vst [vmem:[%s2 + $0x28] sm:$0xff] %v308
  %341 = vst [vmem:[%s2 + $0x30] sm:$0xff] %v311
  %342 = vst [vmem:[%s2 + $0x38] sm:$0xff] %v313
  %343 = vst [vmem:[%s2 + $0x40] sm:$0xff] %v316
  %344 = vst [vmem:[%s2 + $0x48] sm:$0xff] %v318
  %345 = vst [vmem:[%s2 + $0x50] sm:$0xff] %v321
  %346 = vst [vmem:[%s2 + $0x58] sm:$0xff] %v323
  %347 = vst [vmem:[%s2 + $0x60] sm:$0xff] %v326
  %348 = vst [vmem:[%s2 + $0x68] sm:$0xff] %v328
  %349 = vst [vmem:[%s2 + $0x70] sm:$0xff] %v331
  %350 = vst [vmem:[%s2 + $0x78] sm:$0xff] %v333
  %351 = vst [vmem:[%s3] sm:$0xff] 0.0
  %v352 = vadd.f32 %v296, %v298
  %v353 = vadd.f32 %v352, %v301
  %v354 = vadd.f32 %v353, %v303
  %v355 = vadd.f32 %v354, %v306
  %v356 = vadd.f32 %v355, %v308
  %v357 = vadd.f32 %v356, %v311
  %v358 = vadd.f32 %v357, %v313
  %v359 = vadd.f32 %v358, %v316
  %v360 = vadd.f32 %v359, %v318
  %v361 = vadd.f32 %v360, %v321
  %v362 = vadd.f32 %v361, %v323
  %v363 = vadd.f32 %v362, %v326
  %v364 = vadd.f32 %v363, %v328
  %v365 = vadd.f32 %v364, %v331
  %v366 = vadd.f32 %v365, %v333
  %v367 = vrot.slane %v366, 4
  %v368 = vadd.f32 %v366, %v367
  %v369 = vrot.slane %v368, 2
  %v370 = vadd.f32 %v368, %v369
  %v371 = vrot.slane %v370, 1
  %v372 = vadd.f32 %v370, %v371
  %373 = vst [vmem:[%s3] sm:$0x1] %v372
  %v374 = vmul.f32 %v296, %v296
  %v375 = vmul.f32 %v298, %v298
  %v376 = vmul.f32 %v301, %v301
  %v377 = vmul.f32 %v303, %v303
  %v378 = vmul.f32 %v306, %v306
  %v379 = vmul.f32 %v308, %v308
  %v380 = vmul.f32 %v311, %v311
  %v381 = vmul.f32 %v313, %v313
  %v382 = vmul.f32 %v316, %v316
  %v383 = vmul.f32 %v318, %v318
  %v384 = vmul.f32 %v321, %v321
  %v385 = vmul.f32 %v323, %v323
  %v386 = vmul.f32 %v326, %v326
  %v387 = vmul.f32 %v328, %v328
  %v388 = vmul.f32 %v331, %v331
  %v389 = vmul.f32 %v333, %v333
  %v390 = vadd.f32 %v374, %v375
  %v391 = vadd.f32 %v390, %v376
  %v392 = vadd.f32 %v391, %v377
  %v393 = vadd.f32 %v392, %v378
  %v394 = vadd.f32 %v393, %v379
  %v395 = vadd.f32 %v394, %v380
  %v396 = vadd.f32 %v395, %v381
  %v397 = vadd.f32 %v396, %v382
  %v398 = vadd.f32 %v397, %v383
  %v399 = vadd.f32 %v398, %v384
  %v400 = vadd.f32 %v399, %v385
  %v401 = vadd.f32 %v400, %v386
  %v402 = vadd.f32 %v401, %v387
  %v403 = vadd.f32 %v402, %v388
  %v404 = vadd.f32 %v403, %v389
  %v405 = vrot.slane %v404, 4
  %v406 = vadd.f32 %v404, %v405
  %v407 = vrot.slane %v406, 2
  %v408 = vadd.f32 %v406, %v407
  %v409 = vrot.slane %v408, 1
  %v410 = vadd.f32 %v408, %v409
  %411 = vst [vmem:[%s3 + $0x1] sm:$0x1] %v410
  // Predicated region
  $region10: #{forward.13} parent=0 // pred_check
    _
  $region11: #{forward.13} parent=0 // pred_check_branch
    %413 = sbr.rel (0) target = $region13
  $region12: #{forward.13} parent=0 // pred_region
    _
  $region13: #{forward.13} parent=0 // pred_fallthru
    _
  // Predicated region
  $region14: #{forward.13} parent=0 // pred_check
    _
  $region15: #{forward.13} parent=0 // pred_check_branch
    %415 = sbr.rel (0) target = $region17
  $region16: #{forward.13} parent=0 // pred_region
    _
  $region17: #{forward.13} parent=0 // pred_fallthru
    _
  // Predicated region
  $region18: #{forward.13} parent=0 // pred_check
    _
  $region19: #{forward.13} parent=0 // pred_check_branch
    %417 = sbr.rel (0) target = $region21
  $region20: #{forward.13} parent=0 // pred_region
    _
  $region21: #{forward.13} parent=0 // pred_fallthru
    _
  // Predicated region
  $region22: #{forward.13} parent=0 // pred_check
    _
  $region23: #{forward.13} parent=0 // pred_check_branch
    %419 = sbr.rel (0) target = $region25
  $region24: #{forward.13} parent=0 // pred_region
    _
  $region25: #{forward.13} parent=0 // pred_fallthru
    _

// kernel: forward.14
$region0: #{forward.14}
  #allocation0 [shape = 'u32[]', space=smem, size = 0x4, offset = 0x4, fixed_abs, tag = 'smem constant byte address 0x4 - core index']
  #allocation1 [shape = 'u32[72,128]{1,0:T(1,128)}', space=vmem, size = 0x9000, scoped, tag = 'internal scratch']
  %s0 = inlined_call_operand.vmem [shape: f32[128,128], index: 0, kind: input, shape index: {}]
  %s1 = inlined_call_operand.vmem [shape: f32[2,128], index: 1, kind: input, shape index: {}]
  %s2 = inlined_call_operand.vmem [shape: f32[128,128], index: 2, kind: output, shape index: {}]
  %s3 = sld [smem:[#allocation0]]
  $region18: #{forward.14} parent=0
    _
  %s5 = ssub.s32 1, %s3
  %s6 = scalar_select 0, %s5, %s3
  // Predicated region
  $region2: #{forward.14} parent=0 // pred_check
    _
  $region3: #{forward.14} parent=0 // pred_check_branch
    %8 = sbr.rel (0) target = $region5
  $region4: #{forward.14} parent=0 // pred_region
    _
  $region5: #{forward.14} parent=0 // pred_fallthru
    _
  // Predicated region
  $region6: #{forward.14} parent=0 // pred_check
    _
  $region7: #{forward.14} parent=0 // pred_check_branch
    %10 = sbr.rel (0) target = $region9
  $region8: #{forward.14} parent=0 // pred_region
    _
  $region9: #{forward.14} parent=0 // pred_fallthru
    _
  %v11 = vld [vmem:[%s0] sm:$0xff]
  %v12 = vld [vmem:[%s0 + $0x8] sm:$0xff]
  %v13 = vld [vmem:[%s0 + $0x10] sm:$0xff]
  %v14 = vld [vmem:[%s0 + $0x18] sm:$0xff]
  %v15 = vld [vmem:[%s0 + $0x20] sm:$0xff]
  %v16 = vld [vmem:[%s0 + $0x28] sm:$0xff]
  %v17 = vld [vmem:[%s0 + $0x30] sm:$0xff]
  %v18 = vld [vmem:[%s0 + $0x38] sm:$0xff]
  %v19 = vld [vmem:[%s0 + $0x40] sm:$0xff]
  %v20 = vld [vmem:[%s0 + $0x48] sm:$0xff]
  %v21 = vld [vmem:[%s0 + $0x50] sm:$0xff]
  %v22 = vld [vmem:[%s0 + $0x58] sm:$0xff]
  %v23 = vld [vmem:[%s0 + $0x60] sm:$0xff]
  %v24 = vld [vmem:[%s0 + $0x68] sm:$0xff]
  %v25 = vld [vmem:[%s0 + $0x70] sm:$0xff]
  %v26 = vld [vmem:[%s0 + $0x78] sm:$0xff]
  %v27 = vld [vmem:[%s1] sm:$0x1]
  %v28 = vperm.slane %v27, 0
  %v29 = vmul.f32 %v11, %v28
  %v30 = vmul.f32 %v12, %v28
  %v31 = vmul.f32 %v13, %v28
  %v32 = vmul.f32 %v14, %v28
  %v33 = vmul.f32 %v15, %v28
  %v34 = vmul.f32 %v16, %v28
  %v35 = vmul.f32 %v17, %v28
  %v36 = vmul.f32 %v18, %v28
  %v37 = vmul.f32 %v19, %v28
  %v38 = vmul.f32 %v20, %v28
  %v39 = vmul.f32 %v21, %v28
  %v40 = vmul.f32 %v22, %v28
  %v41 = vmul.f32 %v23, %v28
  %v42 = vmul.f32 %v24, %v28
  %v43 = vmul.f32 %v25, %v28
  %v44 = vmul.f32 %v26, %v28
  %v45 = vld [vmem:[%s1 + $0x1] sm:$0x1]
  %v46 = vperm.slane %v45, 0
  %v47 = vadd.f32 %v29, %v46
  %v48 = vadd.f32 %v30, %v46
  %v49 = vadd.f32 %v31, %v46
  %v50 = vadd.f32 %v32, %v46
  %v51 = vadd.f32 %v33, %v46
  %v52 = vadd.f32 %v34, %v46
  %v53 = vadd.f32 %v35, %v46
  %v54 = vadd.f32 %v36, %v46
  %v55 = vadd.f32 %v37, %v46
  %v56 = vadd.f32 %v38, %v46
  %v57 = vadd.f32 %v39, %v46
  %v58 = vadd.f32 %v40, %v46
  %v59 = vadd.f32 %v41, %v46
  %v60 = vadd.f32 %v42, %v46
  %v61 = vadd.f32 %v43, %v46
  %v62 = vadd.f32 %v44, %v46
  %vm63 = vcmp.ge.f32.partialorder %v47, 0.0
  %vm64 = vcmp.ge.f32.partialorder %v48, 0.0
  %vm65 = vcmp.ge.f32.partialorder %v49, 0.0
  %vm66 = vcmp.ge.f32.partialorder %v50, 0.0
  %vm67 = vcmp.ge.f32.partialorder %v51, 0.0
  %vm68 = vcmp.ge.f32.partialorder %v52, 0.0
  %vm69 = vcmp.ge.f32.partialorder %v53, 0.0
  %vm70 = vcmp.ge.f32.partialorder %v54, 0.0
  %vm71 = vcmp.ge.f32.partialorder %v55, 0.0
  %vm72 = vcmp.ge.f32.partialorder %v56, 0.0
  %vm73 = vcmp.ge.f32.partialorder %v57, 0.0
  %vm74 = vcmp.ge.f32.partialorder %v58, 0.0
  %vm75 = vcmp.ge.f32.partialorder %v59, 0.0
  %vm76 = vcmp.ge.f32.partialorder %v60, 0.0
  %vm77 = vcmp.ge.f32.partialorder %v61, 0.0
  %vm78 = vcmp.ge.f32.partialorder %v62, 0.0
  %v79 = vmul.f32 %v47, 0.01
  %v80 = vmul.f32 %v48, 0.01
  %v81 = vmul.f32 %v49, 0.01
  %v82 = vmul.f32 %v50, 0.01
  %v83 = vmul.f32 %v51, 0.01
  %v84 = vmul.f32 %v52, 0.01
  %v85 = vmul.f32 %v53, 0.01
  %v86 = vmul.f32 %v54, 0.01
  %v87 = vmul.f32 %v55, 0.01
  %v88 = vmul.f32 %v56, 0.01
  %v89 = vmul.f32 %v57, 0.01
  %v90 = vmul.f32 %v58, 0.01
  %v91 = vmul.f32 %v59, 0.01
  %v92 = vmul.f32 %v60, 0.01
  %v93 = vmul.f32 %v61, 0.01
  %v94 = vmul.f32 %v62, 0.01
  %v95 = vsel %vm63, %v47, %v79
  %v96 = vsel %vm64, %v48, %v80
  %v97 = vsel %vm65, %v49, %v81
  %v98 = vsel %vm66, %v50, %v82
  %v99 = vsel %vm67, %v51, %v83
  %v100 = vsel %vm68, %v52, %v84
  %v101 = vsel %vm69, %v53, %v85
  %v102 = vsel %vm70, %v54, %v86
  %v103 = vsel %vm71, %v55, %v87
  %v104 = vsel %vm72, %v56, %v88
  %v105 = vsel %vm73, %v57, %v89
  %v106 = vsel %vm74, %v58, %v90
  %v107 = vsel %vm75, %v59, %v91
  %v108 = vsel %vm76, %v60, %v92
  %v109 = vsel %vm77, %v61, %v93
  %v110 = vsel %vm78, %v62, %v94
  %111 = vst [vmem:[%s2] sm:$0xff] %v95
  %112 = vst [vmem:[%s2 + $0x8] sm:$0xff] %v96
  %113 = vst [vmem:[%s2 + $0x10] sm:$0xff] %v97
  %114 = vst [vmem:[%s2 + $0x18] sm:$0xff] %v98
  %115 = vst [vmem:[%s2 + $0x20] sm:$0xff] %v99
  %116 = vst [vmem:[%s2 + $0x28] sm:$0xff] %v100
  %117 = vst [vmem:[%s2 + $0x30] sm:$0xff] %v101
  %118 = vst [vmem:[%s2 + $0x38] sm:$0xff] %v102
  %119 = vst [vmem:[%s2 + $0x40] sm:$0xff] %v103
  %120 = vst [vmem:[%s2 + $0x48] sm:$0xff] %v104
  %121 = vst [vmem:[%s2 + $0x50] sm:$0xff] %v105
  %122 = vst [vmem:[%s2 + $0x58] sm:$0xff] %v106
  %123 = vst [vmem:[%s2 + $0x60] sm:$0xff] %v107
  %124 = vst [vmem:[%s2 + $0x68] sm:$0xff] %v108
  %125 = vst [vmem:[%s2 + $0x70] sm:$0xff] %v109
  %126 = vst [vmem:[%s2 + $0x78] sm:$0xff] %v110
  // Predicated region
  $region10: #{forward.14} parent=0 // pred_check
    _
  $region11: #{forward.14} parent=0 // pred_check_branch
    %128 = sbr.rel (0) target = $region13
  $region12: #{forward.14} parent=0 // pred_region
    _
  $region13: #{forward.14} parent=0 // pred_fallthru
    _
  // Predicated region
  $region14: #{forward.14} parent=0 // pred_check
    _
  $region15: #{forward.14} parent=0 // pred_check_branch
    %130 = sbr.rel (0) target = $region17
  $region16: #{forward.14} parent=0 // pred_region
    _
  $region17: #{forward.14} parent=0 // pred_fallthru
    _

// kernel: forward.15
$region0: #{forward.15}
  #allocation0 [shape = 'u32[]', space=smem, size = 0x4, offset = 0x4, fixed_abs, tag = 'smem constant byte address 0x4 - core index']
  #allocation1 [shape = 'u32[72,128]{1,0:T(1,128)}', space=vmem, size = 0x9000, scoped, tag = 'internal scratch']
  %s0 = inlined_call_operand.vmem [shape: bf16[32,384], index: 0, kind: input, shape index: {}]
  %s1 = inlined_call_operand.vmem [shape: bf16[384,128], index: 1, kind: input, shape index: {}]
  %s2 = inlined_call_operand.vmem [shape: f32[32,128], index: 2, kind: output, shape index: {0}]
  %s3 = inlined_call_operand.vmem [shape: f32[8,128], index: 3, kind: output, shape index: {1}]
  %4 = xla_tuple %s2, %s3
  %s5 = sld [smem:[#allocation0]]
  $region26: #{forward.15} parent=0
    _
  %s7 = ssub.s32 1, %s5
  %s8 = scalar_select 0, %s7, %s5
  // Predicated region
  $region2: #{forward.15} parent=0 // pred_check
    _
  $region3: #{forward.15} parent=0 // pred_check_branch
    %10 = sbr.rel (0) target = $region5
  $region4: #{forward.15} parent=0 // pred_region
    _
  $region5: #{forward.15} parent=0 // pred_fallthru
    _
  // Predicated region
  $region6: #{forward.15} parent=0 // pred_check
    _
  $region7: #{forward.15} parent=0 // pred_check_branch
    %12 = sbr.rel (0) target = $region9
  $region8: #{forward.15} parent=0 // pred_region
    _
  $region9: #{forward.15} parent=0 // pred_fallthru
    _
  %v13 = vld [vmem:[%s0] sm:$0xff]
  %v14 = vld [vmem:[%s0 + $0x8] sm:$0xf]
  %v15 = vld [vmem:[%s0 + $0xc] sm:$0xff]
  %v16 = vld [vmem:[%s0 + $0x14] sm:$0xf]
  %v17 = vld [vmem:[%s0 + $0x18] sm:$0xff]
  %v18 = vld [vmem:[%s0 + $0x20] sm:$0xf]
  %v19 = vld [vmem:[%s0 + $0x24] sm:$0xff]
  %v20 = vld [vmem:[%s0 + $0x2c] sm:$0xf]
  %v21 = vld [vmem:[%s1] sm:$0xf]
  %v22 = vld [vmem:[%s1 + $0x4] sm:$0xf]
  %v23 = vld [vmem:[%s1 + $0x8] sm:$0xf]
  %v24 = vld [vmem:[%s1 + $0xc] sm:$0xf]
  %v25 = vld [vmem:[%s1 + $0x10] sm:$0xf]
  %v26 = vld [vmem:[%s1 + $0x14] sm:$0xf]
  %v27 = vld [vmem:[%s1 + $0x18] sm:$0xf]
  %v28 = vld [vmem:[%s1 + $0x1c] sm:$0xf]
  %v29 = vld [vmem:[%s1 + $0x20] sm:$0xf]
  %v30 = vld [vmem:[%s1 + $0x24] sm:$0xf]
  %v31 = vld [vmem:[%s1 + $0x28] sm:$0xf]
  %v32 = vld [vmem:[%s1 + $0x2c] sm:$0xf]
  %v33 = vld [vmem:[%s1 + $0x30] sm:$0xf]
  %v34 = vld [vmem:[%s1 + $0x34] sm:$0xf]
  %v35 = vld [vmem:[%s1 + $0x38] sm:$0xf]
  %v36 = vld [vmem:[%s1 + $0x3c] sm:$0xf]
  %v37 = vld [vmem:[%s1 + $0x40] sm:$0xf]
  %v38 = vld [vmem:[%s1 + $0x44] sm:$0xf]
  %v39 = vld [vmem:[%s1 + $0x48] sm:$0xf]
  %v40 = vld [vmem:[%s1 + $0x4c] sm:$0xf]
  %v41 = vld [vmem:[%s1 + $0x50] sm:$0xf]
  %v42 = vld [vmem:[%s1 + $0x54] sm:$0xf]
  %v43 = vld [vmem:[%s1 + $0x58] sm:$0xf]
  %v44 = vld [vmem:[%s1 + $0x5c] sm:$0xf]
  %v45 = vld [vmem:[%s1 + $0x60] sm:$0xf]
  %v46 = vld [vmem:[%s1 + $0x64] sm:$0xf]
  %v47 = vld [vmem:[%s1 + $0x68] sm:$0xf]
  %v48 = vld [vmem:[%s1 + $0x6c] sm:$0xf]
  %v49 = vld [vmem:[%s1 + $0x70] sm:$0xf]
  %v50 = vld [vmem:[%s1 + $0x74] sm:$0xf]
  %v51 = vld [vmem:[%s1 + $0x78] sm:$0xf]
  %v52 = vld [vmem:[%s1 + $0x7c] sm:$0xf]
  %v53 = vld [vmem:[%s1 + $0x80] sm:$0xf]
  %v54 = vld [vmem:[%s1 + $0x84] sm:$0xf]
  %v55 = vld [vmem:[%s1 + $0x88] sm:$0xf]
  %v56 = vld [vmem:[%s1 + $0x8c] sm:$0xf]
  %v57 = vld [vmem:[%s1 + $0x90] sm:$0xf]
  %v58 = vld [vmem:[%s1 + $0x94] sm:$0xf]
  %v59 = vld [vmem:[%s1 + $0x98] sm:$0xf]
  %v60 = vld [vmem:[%s1 + $0x9c] sm:$0xf]
  %v61 = vld [vmem:[%s1 + $0xa0] sm:$0xf]
  %v62 = vld [vmem:[%s1 + $0xa4] sm:$0xf]
  %v63 = vld [vmem:[%s1 + $0xa8] sm:$0xf]
  %v64 = vld [vmem:[%s1 + $0xac] sm:$0xf]
  %v65 = vld [vmem:[%s1 + $0xb0] sm:$0xf]
  %v66 = vld [vmem:[%s1 + $0xb4] sm:$0xf]
  %v67 = vld [vmem:[%s1 + $0xb8] sm:$0xf]
  %v68 = vld [vmem:[%s1 + $0xbc] sm:$0xf]
  %v77 = vunpack.c.l.b16 %v13
  %v78 = vunpack.c.h.b16 %v13
  %v79 = vunpack.c.l.b16 %v14
  %v80 = vunpack.c.l.b16 %v15
  %v81 = vunpack.c.h.b16 %v15
  %v82 = vunpack.c.l.b16 %v16
  %v83 = vunpack.c.l.b16 %v17
  %v84 = vunpack.c.h.b16 %v17
  %v85 = vunpack.c.l.b16 %v18
  %v86 = vunpack.c.l.b16 %v19
  %v87 = vunpack.c.h.b16 %v19
  %v88 = vunpack.c.l.b16 %v20
  %v89 = vpack.c.b16 %v80, %v77
  %v90 = vpack.c.b16 %v81, %v78
  %v91 = vpack.c.b16 %v82, %v79
  %v92 = vpack.c.b16 %v86, %v83
  %v93 = vpack.c.b16 %v87, %v84
  %v94 = vpack.c.b16 %v88, %v85
  %v149 = vunpack.c.l.b16 %v21
  %v150 = vunpack.c.l.b16 %v22
  %v151 = vunpack.c.l.b16 %v23
  %v152 = vunpack.c.l.b16 %v24
  %v153 = vunpack.c.l.b16 %v25
  %v154 = vunpack.c.l.b16 %v26
  %v155 = vunpack.c.l.b16 %v27
  %v156 = vunpack.c.l.b16 %v28
  %v157 = vunpack.c.l.b16 %v29
  %v158 = vunpack.c.l.b16 %v30
  %v159 = vunpack.c.l.b16 %v31
  %v160 = vunpack.c.l.b16 %v32
  %v161 = vunpack.c.l.b16 %v33
  %v162 = vunpack.c.l.b16 %v34
  %v163 = vunpack.c.l.b16 %v35
  %v164 = vunpack.c.l.b16 %v36
  %v165 = vunpack.c.l.b16 %v37
  %v166 = vunpack.c.l.b16 %v38
  %v167 = vunpack.c.l.b16 %v39
  %v168 = vunpack.c.l.b16 %v40
  %v169 = vunpack.c.l.b16 %v41
  %v170 = vunpack.c.l.b16 %v42
  %v171 = vunpack.c.l.b16 %v43
  %v172 = vunpack.c.l.b16 %v44
  %v173 = vunpack.c.l.b16 %v45
  %v174 = vunpack.c.l.b16 %v46
  %v175 = vunpack.c.l.b16 %v47
  %v176 = vunpack.c.l.b16 %v48
  %v177 = vunpack.c.l.b16 %v49
  %v178 = vunpack.c.l.b16 %v50
  %v179 = vunpack.c.l.b16 %v51
  %v180 = vunpack.c.l.b16 %v52
  %v181 = vunpack.c.l.b16 %v53
  %v182 = vunpack.c.l.b16 %v54
  %v183 = vunpack.c.l.b16 %v55
  %v184 = vunpack.c.l.b16 %v56
  %v185 = vunpack.c.l.b16 %v57
  %v186 = vunpack.c.l.b16 %v58
  %v187 = vunpack.c.l.b16 %v59
  %v188 = vunpack.c.l.b16 %v60
  %v189 = vunpack.c.l.b16 %v61
  %v190 = vunpack.c.l.b16 %v62
  %v191 = vunpack.c.l.b16 %v63
  %v192 = vunpack.c.l.b16 %v64
  %v193 = vunpack.c.l.b16 %v65
  %v194 = vunpack.c.l.b16 %v66
  %v195 = vunpack.c.l.b16 %v67
  %v196 = vunpack.c.l.b16 %v68
  %v197 = vpack.c.b16 %v150, %v149
  %v198 = vpack.c.b16 %v152, %v151
  %v199 = vpack.c.b16 %v154, %v153
  %v200 = vpack.c.b16 %v156, %v155
  %v201 = vpack.c.b16 %v158, %v157
  %v202 = vpack.c.b16 %v160, %v159
  %v203 = vpack.c.b16 %v162, %v161
  %v204 = vpack.c.b16 %v164, %v163
  %v205 = vpack.c.b16 %v166, %v165
  %v206 = vpack.c.b16 %v168, %v167
  %v207 = vpack.c.b16 %v170, %v169
  %v208 = vpack.c.b16 %v172, %v171
  %v209 = vpack.c.b16 %v174, %v173
  %v210 = vpack.c.b16 %v176, %v175
  %v211 = vpack.c.b16 %v178, %v177
  %v212 = vpack.c.b16 %v180, %v179
  %v213 = vpack.c.b16 %v182, %v181
  %v214 = vpack.c.b16 %v184, %v183
  %v215 = vpack.c.b16 %v186, %v185
  %v216 = vpack.c.b16 %v188, %v187
  %v217 = vpack.c.b16 %v190, %v189
  %v218 = vpack.c.b16 %v192, %v191
  %v219 = vpack.c.b16 %v194, %v193
  %v220 = vpack.c.b16 %v196, %v195
  %245 = vmatpush.bf16.msra.mxu0 %v204
  %246 = vmatpush.bf16.msra.mxu0 %v203
  %247 = vmatpush.bf16.msra.mxu0 %v202
  %248 = vmatpush.bf16.msra.mxu0 %v201
  %249 = vmatpush.bf16.msra.mxu0 %v200
  %250 = vmatpush.bf16.msra.mxu0 %v199
  %251 = vmatpush.bf16.msra.mxu0 %v198
  %252 = vmatpush.bf16.msra.mxu0 %v197
  %253 = vmatmul.bf16.gmra.mxu0 %v89
  %v254 = vpop.f32.mrf.mxu0
  %v255 = vadd.f32 0.0, %v254
  %v256 = vpop.f32.mrf.mxu0
  %v257 = vadd.f32 0.0, %v256
  %258 = vmatmul.bf16.gmra.mxu0 %v92
  %v259 = vpop.f32.mrf.mxu0
  %v260 = vadd.f32 0.0, %v259
  %v261 = vpop.f32.mrf.mxu0
  %v262 = vadd.f32 0.0, %v261
  %263 = vdwg.mxu0
  %264 = vmatpush.bf16.msra.mxu0 %v212
  %265 = vmatpush.bf16.msra.mxu0 %v211
  %266 = vmatpush.bf16.msra.mxu0 %v210
  %267 = vmatpush.bf16.msra.mxu0 %v209
  %268 = vmatpush.bf16.msra.mxu0 %v208
  %269 = vmatpush.bf16.msra.mxu0 %v207
  %270 = vmatpush.bf16.msra.mxu0 %v206
  %271 = vmatpush.bf16.msra.mxu0 %v205
  %272 = vmatmul.bf16.gmra.mxu0 %v90
  %v273 = vpop.f32.mrf.mxu0
  %v274 = vadd.f32 %v255, %v273
  %v275 = vpop.f32.mrf.mxu0
  %v276 = vadd.f32 %v257, %v275
  %277 = vmatmul.bf16.gmra.mxu0 %v93
  %v278 = vpop.f32.mrf.mxu0
  %v279 = vadd.f32 %v260, %v278
  %v280 = vpop.f32.mrf.mxu0
  %v281 = vadd.f32 %v262, %v280
  %282 = vdwg.mxu0
  %283 = vmatpush.bf16.msra.mxu0 %v220
  %284 = vmatpush.bf16.msra.mxu0 %v219
  %285 = vmatpush.bf16.msra.mxu0 %v218
  %286 = vmatpush.bf16.msra.mxu0 %v217
  %287 = vmatpush.bf16.msra.mxu0 %v216
  %288 = vmatpush.bf16.msra.mxu0 %v215
  %289 = vmatpush.bf16.msra.mxu0 %v214
  %290 = vmatpush.bf16.msra.mxu0 %v213
  %291 = vmatmul.bf16.gmra.mxu0 %v91
  %v292 = vpop.f32.mrf.mxu0
  %v293 = vadd.f32 %v274, %v292
  %v294 = vpop.f32.mrf.mxu0
  %v295 = vadd.f32 %v276, %v294
  %296 = vmatmul.bf16.gmra.mxu0 %v94
  %v297 = vpop.f32.mrf.mxu0
  %v298 = vadd.f32 %v279, %v297
  %v299 = vpop.f32.mrf.mxu0
  %v300 = vadd.f32 %v281, %v299
  %301 = vdwg.mxu0
  %302 = vst [vmem:[%s2] sm:$0xff] %v293
  %303 = vst [vmem:[%s2 + $0x8] sm:$0xff] %v295
  %304 = vst [vmem:[%s2 + $0x10] sm:$0xff] %v298
  %305 = vst [vmem:[%s2 + $0x18] sm:$0xff] %v300
  %306 = vst [vmem:[%s3] sm:$0xff] 0.0
  %v307 = vadd.f32 %v293, %v295
  %v308 = vadd.f32 %v307, %v298
  %v309 = vadd.f32 %v308, %v300
  %v310 = vrot.slane %v309, 4
  %v311 = vadd.f32 %v309, %v310
  %v312 = vrot.slane %v311, 2
  %v313 = vadd.f32 %v311, %v312
  %v314 = vrot.slane %v313, 1
  %v315 = vadd.f32 %v313, %v314
  %316 = vst [vmem:[%s3] sm:$0x1] %v315
  %v317 = vmul.f32 %v293, %v293
  %v318 = vmul.f32 %v295, %v295
  %v319 = vmul.f32 %v298, %v298
  %v320 = vmul.f32 %v300, %v300
  %v321 = vadd.f32 %v317, %v318
  %v322 = vadd.f32 %v321, %v319
  %v323 = vadd.f32 %v322, %v320
  %v324 = vrot.slane %v323, 4
  %v325 = vadd.f32 %v323, %v324
  %v326 = vrot.slane %v325, 2
  %v327 = vadd.f32 %v325, %v326
  %v328 = vrot.slane %v327, 1
  %v329 = vadd.f32 %v327, %v328
  %330 = vst [vmem:[%s3 + $0x1] sm:$0x1] %v329
  // Predicated region
  $region10: #{forward.15} parent=0 // pred_check
    _
  $region11: #{forward.15} parent=0 // pred_check_branch
    %332 = sbr.rel (0) target = $region13
  $region12: #{forward.15} parent=0 // pred_region
    _
  $region13: #{forward.15} parent=0 // pred_fallthru
    _
  // Predicated region
  $region14: #{forward.15} parent=0 // pred_check
    _
  $region15: #{forward.15} parent=0 // pred_check_branch
    %334 = sbr.rel (0) target = $region17
  $region16: #{forward.15} parent=0 // pred_region
    _
  $region17: #{forward.15} parent=0 // pred_fallthru
    _
  // Predicated region
  $region18: #{forward.15} parent=0 // pred_check
    _
  $region19: #{forward.15} parent=0 // pred_check_branch
    %336 = sbr.rel (0) target = $region21
  $region20: #{forward.15} parent=0 // pred_region
    _
  $region21: #{forward.15} parent=0 // pred_fallthru
    _
  // Predicated region
  $region22: #{forward.15} parent=0 // pred_check
    _
  $region23: #{forward.15} parent=0 // pred_check_branch
    %338 = sbr.rel (0) target = $region25
  $region24: #{forward.15} parent=0 // pred_region
    _
  $region25: #{forward.15} parent=0 // pred_fallthru
    _

// kernel: forward.11
$region0: #{forward.11}
  #allocation0 [shape = 'u32[]', space=smem, size = 0x4, offset = 0x4, fixed_abs, tag = 'smem constant byte address 0x4 - core index']
  #allocation1 [shape = 'u32[72,128]{1,0:T(1,128)}', space=vmem, size = 0x9000, scoped, tag = 'internal scratch']
  %s0 = inlined_call_operand.vmem [shape: bf16[32,256], index: 0, kind: input, shape index: {}]
  %s1 = inlined_call_operand.vmem [shape: bf16[256,128], index: 1, kind: input, shape index: {}]
  %s2 = inlined_call_operand.vmem [shape: f32[32,128], index: 2, kind: output, shape index: {0}]
  %s3 = inlined_call_operand.vmem [shape: f32[8,128], index: 3, kind: output, shape index: {1}]
  %4 = xla_tuple %s2, %s3
  %s5 = sld [smem:[#allocation0]]
  $region26: #{forward.11} parent=0
    _
  %s7 = ssub.s32 1, %s5
  %s8 = scalar_select 0, %s7, %s5
  // Predicated region
  $region2: #{forward.11} parent=0 // pred_check
    _
  $region3: #{forward.11} parent=0 // pred_check_branch
    %10 = sbr.rel (0) target = $region5
  $region4: #{forward.11} parent=0 // pred_region
    _
  $region5: #{forward.11} parent=0 // pred_fallthru
    _
  // Predicated region
  $region6: #{forward.11} parent=0 // pred_check
    _
  $region7: #{forward.11} parent=0 // pred_check_branch
    %12 = sbr.rel (0) target = $region9
  $region8: #{forward.11} parent=0 // pred_region
    _
  $region9: #{forward.11} parent=0 // pred_fallthru
    _
  %v13 = vld [vmem:[%s0] sm:$0xff]
  %v14 = vld [vmem:[%s0 + $0x8] sm:$0xff]
  %v15 = vld [vmem:[%s0 + $0x10] sm:$0xff]
  %v16 = vld [vmem:[%s0 + $0x18] sm:$0xff]
  %v17 = vld [vmem:[%s1] sm:$0xf]
  %v18 = vld [vmem:[%s1 + $0x4] sm:$0xf]
  %v19 = vld [vmem:[%s1 + $0x8] sm:$0xf]
  %v20 = vld [vmem:[%s1 + $0xc] sm:$0xf]
  %v21 = vld [vmem:[%s1 + $0x10] sm:$0xf]
  %v22 = vld [vmem:[%s1 + $0x14] sm:$0xf]
  %v23 = vld [vmem:[%s1 + $0x18] sm:$0xf]
  %v24 = vld [vmem:[%s1 + $0x1c] sm:$0xf]
  %v25 = vld [vmem:[%s1 + $0x20] sm:$0xf]
  %v26 = vld [vmem:[%s1 + $0x24] sm:$0xf]
  %v27 = vld [vmem:[%s1 + $0x28] sm:$0xf]
  %v28 = vld [vmem:[%s1 + $0x2c] sm:$0xf]
  %v29 = vld [vmem:[%s1 + $0x30] sm:$0xf]
  %v30 = vld [vmem:[%s1 + $0x34] sm:$0xf]
  %v31 = vld [vmem:[%s1 + $0x38] sm:$0xf]
  %v32 = vld [vmem:[%s1 + $0x3c] sm:$0xf]
  %v33 = vld [vmem:[%s1 + $0x40] sm:$0xf]
  %v34 = vld [vmem:[%s1 + $0x44] sm:$0xf]
  %v35 = vld [vmem:[%s1 + $0x48] sm:$0xf]
  %v36 = vld [vmem:[%s1 + $0x4c] sm:$0xf]
  %v37 = vld [vmem:[%s1 + $0x50] sm:$0xf]
  %v38 = vld [vmem:[%s1 + $0x54] sm:$0xf]
  %v39 = vld [vmem:[%s1 + $0x58] sm:$0xf]
  %v40 = vld [vmem:[%s1 + $0x5c] sm:$0xf]
  %v41 = vld [vmem:[%s1 + $0x60] sm:$0xf]
  %v42 = vld [vmem:[%s1 + $0x64] sm:$0xf]
  %v43 = vld [vmem:[%s1 + $0x68] sm:$0xf]
  %v44 = vld [vmem:[%s1 + $0x6c] sm:$0xf]
  %v45 = vld [vmem:[%s1 + $0x70] sm:$0xf]
  %v46 = vld [vmem:[%s1 + $0x74] sm:$0xf]
  %v47 = vld [vmem:[%s1 + $0x78] sm:$0xf]
  %v48 = vld [vmem:[%s1 + $0x7c] sm:$0xf]
  %v53 = vunpack.c.l.b16 %v13
  %v54 = vunpack.c.h.b16 %v13
  %v55 = vunpack.c.l.b16 %v14
  %v56 = vunpack.c.h.b16 %v14
  %v57 = vunpack.c.l.b16 %v15
  %v58 = vunpack.c.h.b16 %v15
  %v59 = vunpack.c.l.b16 %v16
  %v60 = vunpack.c.h.b16 %v16
  %v61 = vpack.c.b16 %v55, %v53
  %v62 = vpack.c.b16 %v56, %v54
  %v63 = vpack.c.b16 %v59, %v57
  %v64 = vpack.c.b16 %v60, %v58
  %v101 = vunpack.c.l.b16 %v17
  %v102 = vunpack.c.l.b16 %v18
  %v103 = vunpack.c.l.b16 %v19
  %v104 = vunpack.c.l.b16 %v20
  %v105 = vunpack.c.l.b16 %v21
  %v106 = vunpack.c.l.b16 %v22
  %v107 = vunpack.c.l.b16 %v23
  %v108 = vunpack.c.l.b16 %v24
  %v109 = vunpack.c.l.b16 %v25
  %v110 = vunpack.c.l.b16 %v26
  %v111 = vunpack.c.l.b16 %v27
  %v112 = vunpack.c.l.b16 %v28
  %v113 = vunpack.c.l.b16 %v29
  %v114 = vunpack.c.l.b16 %v30
  %v115 = vunpack.c.l.b16 %v31
  %v116 = vunpack.c.l.b16 %v32
  %v117 = vunpack.c.l.b16 %v33
  %v118 = vunpack.c.l.b16 %v34
  %v119 = vunpack.c.l.b16 %v35
  %v120 = vunpack.c.l.b16 %v36
  %v121 = vunpack.c.l.b16 %v37
  %v122 = vunpack.c.l.b16 %v38
  %v123 = vunpack.c.l.b16 %v39
  %v124 = vunpack.c.l.b16 %v40
  %v125 = vunpack.c.l.b16 %v41
  %v126 = vunpack.c.l.b16 %v42
  %v127 = vunpack.c.l.b16 %v43
  %v128 = vunpack.c.l.b16 %v44
  %v129 = vunpack.c.l.b16 %v45
  %v130 = vunpack.c.l.b16 %v46
  %v131 = vunpack.c.l.b16 %v47
  %v132 = vunpack.c.l.b16 %v48
  %v133 = vpack.c.b16 %v102, %v101
  %v134 = vpack.c.b16 %v104, %v103
  %v135 = vpack.c.b16 %v106, %v105
  %v136 = vpack.c.b16 %v108, %v107
  %v137 = vpack.c.b16 %v110, %v109
  %v138 = vpack.c.b16 %v112, %v111
  %v139 = vpack.c.b16 %v114, %v113
  %v140 = vpack.c.b16 %v116, %v115
  %v141 = vpack.c.b16 %v118, %v117
  %v142 = vpack.c.b16 %v120, %v119
  %v143 = vpack.c.b16 %v122, %v121
  %v144 = vpack.c.b16 %v124, %v123
  %v145 = vpack.c.b16 %v126, %v125
  %v146 = vpack.c.b16 %v128, %v127
  %v147 = vpack.c.b16 %v130, %v129
  %v148 = vpack.c.b16 %v132, %v131
  %165 = vmatpush.bf16.msra.mxu0 %v140
  %166 = vmatpush.bf16.msra.mxu0 %v139
  %167 = vmatpush.bf16.msra.mxu0 %v138
  %168 = vmatpush.bf16.msra.mxu0 %v137
  %169 = vmatpush.bf16.msra.mxu0 %v136
  %170 = vmatpush.bf16.msra.mxu0 %v135
  %171 = vmatpush.bf16.msra.mxu0 %v134
  %172 = vmatpush.bf16.msra.mxu0 %v133
  %173 = vmatmul.bf16.gmra.mxu0 %v61
  %v174 = vpop.f32.mrf.mxu0
  %v175 = vadd.f32 0.0, %v174
  %v176 = vpop.f32.mrf.mxu0
  %v177 = vadd.f32 0.0, %v176
  %178 = vmatmul.bf16.gmra.mxu0 %v63
  %v179 = vpop.f32.mrf.mxu0
  %v180 = vadd.f32 0.0, %v179
  %v181 = vpop.f32.mrf.mxu0
  %v182 = vadd.f32 0.0, %v181
  %183 = vdwg.mxu0
  %184 = vmatpush.bf16.msra.mxu0 %v148
  %185 = vmatpush.bf16.msra.mxu0 %v147
  %186 = vmatpush.bf16.msra.mxu0 %v146
  %187 = vmatpush.bf16.msra.mxu0 %v145
  %188 = vmatpush.bf16.msra.mxu0 %v144
  %189 = vmatpush.bf16.msra.mxu0 %v143
  %190 = vmatpush.bf16.msra.mxu0 %v142
  %191 = vmatpush.bf16.msra.mxu0 %v141
  %192 = vmatmul.bf16.gmra.mxu0 %v62
  %v193 = vpop.f32.mrf.mxu0
  %v194 = vadd.f32 %v175, %v193
  %v195 = vpop.f32.mrf.mxu0
  %v196 = vadd.f32 %v177, %v195
  %197 = vmatmul.bf16.gmra.mxu0 %v64
  %v198 = vpop.f32.mrf.mxu0
  %v199 = vadd.f32 %v180, %v198
  %v200 = vpop.f32.mrf.mxu0
  %v201 = vadd.f32 %v182, %v200
  %202 = vdwg.mxu0
  %203 = vst [vmem:[%s2] sm:$0xff] %v194
  %204 = vst [vmem:[%s2 + $0x8] sm:$0xff] %v196
  %205 = vst [vmem:[%s2 + $0x10] sm:$0xff] %v199
  %206 = vst [vmem:[%s2 + $0x18] sm:$0xff] %v201
  %207 = vst [vmem:[%s3] sm:$0xff] 0.0
  %v208 = vadd.f32 %v194, %v196
  %v209 = vadd.f32 %v208, %v199
  %v210 = vadd.f32 %v209, %v201
  %v211 = vrot.slane %v210, 4
  %v212 = vadd.f32 %v210, %v211
  %v213 = vrot.slane %v212, 2
  %v214 = vadd.f32 %v212, %v213
  %v215 = vrot.slane %v214, 1
  %v216 = vadd.f32 %v214, %v215
  %217 = vst [vmem:[%s3] sm:$0x1] %v216
  %v218 = vmul.f32 %v194, %v194
  %v219 = vmul.f32 %v196, %v196
  %v220 = vmul.f32 %v199, %v199
  %v221 = vmul.f32 %v201, %v201
  %v222 = vadd.f32 %v218, %v219
  %v223 = vadd.f32 %v222, %v220
  %v224 = vadd.f32 %v223, %v221
  %v225 = vrot.slane %v224, 4
  %v226 = vadd.f32 %v224, %v225
  %v227 = vrot.slane %v226, 2
  %v228 = vadd.f32 %v226, %v227
  %v229 = vrot.slane %v228, 1
  %v230 = vadd.f32 %v228, %v229
  %231 = vst [vmem:[%s3 + $0x1] sm:$0x1] %v230
  // Predicated region
  $region10: #{forward.11} parent=0 // pred_check
    _
  $region11: #{forward.11} parent=0 // pred_check_branch
    %233 = sbr.rel (0) target = $region13
  $region12: #{forward.11} parent=0 // pred_region
    _
  $region13: #{forward.11} parent=0 // pred_fallthru
    _
  // Predicated region
  $region14: #{forward.11} parent=0 // pred_check
    _
  $region15: #{forward.11} parent=0 // pred_check_branch
    %235 = sbr.rel (0) target = $region17
  $region16: #{forward.11} parent=0 // pred_region
    _
  $region17: #{forward.11} parent=0 // pred_fallthru
    _
  // Predicated region
  $region18: #{forward.11} parent=0 // pred_check
    _
  $region19: #{forward.11} parent=0 // pred_check_branch
    %237 = sbr.rel (0) target = $region21
  $region20: #{forward.11} parent=0 // pred_region
    _
  $region21: #{forward.11} parent=0 // pred_fallthru
    _
  // Predicated region
  $region22: #{forward.11} parent=0 // pred_check
    _
  $region23: #{forward.11} parent=0 // pred_check_branch
    %239 = sbr.rel (0) target = $region25
  $region24: #{forward.11} parent=0 // pred_region
    _
  $region25: #{forward.11} parent=0 // pred_fallthru
    _

// kernel: forward.16
$region0: #{forward.16}
  #allocation0 [shape = 'u32[]', space=smem, size = 0x4, offset = 0x4, fixed_abs, tag = 'smem constant byte address 0x4 - core index']
  #allocation1 [shape = 'u32[72,128]{1,0:T(1,128)}', space=vmem, size = 0x9000, scoped, tag = 'internal scratch']
  %s0 = inlined_call_operand.vmem [shape: f32[32,128], index: 0, kind: input, shape index: {}]
  %s1 = inlined_call_operand.vmem [shape: f32[2,128], index: 1, kind: input, shape index: {}]
  %s2 = inlined_call_operand.vmem [shape: f32[32,128], index: 2, kind: output, shape index: {}]
  %s3 = sld [smem:[#allocation0]]
  $region18: #{forward.16} parent=0
    _
  %s5 = ssub.s32 1, %s3
  %s6 = scalar_select 0, %s5, %s3
  // Predicated region
  $region2: #{forward.16} parent=0 // pred_check
    _
  $region3: #{forward.16} parent=0 // pred_check_branch
    %8 = sbr.rel (0) target = $region5
  $region4: #{forward.16} parent=0 // pred_region
    _
  $region5: #{forward.16} parent=0 // pred_fallthru
    _
  // Predicated region
  $region6: #{forward.16} parent=0 // pred_check
    _
  $region7: #{forward.16} parent=0 // pred_check_branch
    %10 = sbr.rel (0) target = $region9
  $region8: #{forward.16} parent=0 // pred_region
    _
  $region9: #{forward.16} parent=0 // pred_fallthru
    _
  %v11 = vld [vmem:[%s0] sm:$0xff]
  %v12 = vld [vmem:[%s0 + $0x8] sm:$0xff]
  %v13 = vld [vmem:[%s0 + $0x10] sm:$0xff]
  %v14 = vld [vmem:[%s0 + $0x18] sm:$0xff]
  %v15 = vld [vmem:[%s1] sm:$0x1]
  %v16 = vperm.slane %v15, 0
  %v17 = vmul.f32 %v11, %v16
  %v18 = vmul.f32 %v12, %v16
  %v19 = vmul.f32 %v13, %v16
  %v20 = vmul.f32 %v14, %v16
  %v21 = vld [vmem:[%s1 + $0x1] sm:$0x1]
  %v22 = vperm.slane %v21, 0
  %v23 = vadd.f32 %v17, %v22
  %v24 = vadd.f32 %v18, %v22
  %v25 = vadd.f32 %v19, %v22
  %v26 = vadd.f32 %v20, %v22
  %vm27 = vcmp.ge.f32.partialorder %v23, 0.0
  %vm28 = vcmp.ge.f32.partialorder %v24, 0.0
  %vm29 = vcmp.ge.f32.partialorder %v25, 0.0
  %vm30 = vcmp.ge.f32.partialorder %v26, 0.0
  %v31 = vmul.f32 %v23, 0.01
  %v32 = vmul.f32 %v24, 0.01
  %v33 = vmul.f32 %v25, 0.01
  %v34 = vmul.f32 %v26, 0.01
  %v35 = vsel %vm27, %v23, %v31
  %v36 = vsel %vm28, %v24, %v32
  %v37 = vsel %vm29, %v25, %v33
  %v38 = vsel %vm30, %v26, %v34
  %39 = vst [vmem:[%s2] sm:$0xff] %v35
  %40 = vst [vmem:[%s2 + $0x8] sm:$0xff] %v36
  %41 = vst [vmem:[%s2 + $0x10] sm:$0xff] %v37
  %42 = vst [vmem:[%s2 + $0x18] sm:$0xff] %v38
  // Predicated region
  $region10: #{forward.16} parent=0 // pred_check
    _
  $region11: #{forward.16} parent=0 // pred_check_branch
    %44 = sbr.rel (0) target = $region13
  $region12: #{forward.16} parent=0 // pred_region
    _
  $region13: #{forward.16} parent=0 // pred_fallthru
    _
  // Predicated region
  $region14: #{forward.16} parent=0 // pred_check
    _
  $region15: #{forward.16} parent=0 // pred_check_branch
    %46 = sbr.rel (0) target = $region17
  $region16: #{forward.16} parent=0 // pred_region
    _
  $region17: #{forward.16} parent=0 // pred_fallthru
    _

// kernel: forward.17
$region0: #{forward.17}
  #allocation0 [shape = 'u32[]', space=smem, size = 0x4, offset = 0x4, fixed_abs, tag = 'smem constant byte address 0x4 - core index']
  #allocation1 [shape = 'u32[72,128]{1,0:T(1,128)}', space=vmem, size = 0x9000, scoped, tag = 'internal scratch']
  %s0 = inlined_call_operand.vmem [shape: bf16[32,640], index: 0, kind: input, shape index: {}]
  %s1 = inlined_call_operand.vmem [shape: bf16[640,128], index: 1, kind: input, shape index: {}]
  %s2 = inlined_call_operand.vmem [shape: f32[32,128], index: 2, kind: output, shape index: {0}]
  %s3 = inlined_call_operand.vmem [shape: f32[8,128], index: 3, kind: output, shape index: {1}]
  %4 = xla_tuple %s2, %s3
  %s5 = sld [smem:[#allocation0]]
  $region26: #{forward.17} parent=0
    _
  %s7 = ssub.s32 1, %s5
  %s8 = scalar_select 0, %s7, %s5
  // Predicated region
  $region2: #{forward.17} parent=0 // pred_check
    _
  $region3: #{forward.17} parent=0 // pred_check_branch
    %10 = sbr.rel (0) target = $region5
  $region4: #{forward.17} parent=0 // pred_region
    _
  $region5: #{forward.17} parent=0 // pred_fallthru
    _
  // Predicated region
  $region6: #{forward.17} parent=0 // pred_check
    _
  $region7: #{forward.17} parent=0 // pred_check_branch
    %12 = sbr.rel (0) target = $region9
  $region8: #{forward.17} parent=0 // pred_region
    _
  $region9: #{forward.17} parent=0 // pred_fallthru
    _
  %v13 = vld [vmem:[%s0] sm:$0xff]
  %v14 = vld [vmem:[%s0 + $0x8] sm:$0xff]
  %v15 = vld [vmem:[%s0 + $0x10] sm:$0xf]
  %v16 = vld [vmem:[%s0 + $0x14] sm:$0xff]
  %v17 = vld [vmem:[%s0 + $0x1c] sm:$0xff]
  %v18 = vld [vmem:[%s0 + $0x24] sm:$0xf]
  %v19 = vld [vmem:[%s0 + $0x28] sm:$0xff]
  %v20 = vld [vmem:[%s0 + $0x30] sm:$0xff]
  %v21 = vld [vmem:[%s0 + $0x38] sm:$0xf]
  %v22 = vld [vmem:[%s0 + $0x3c] sm:$0xff]
  %v23 = vld [vmem:[%s0 + $0x44] sm:$0xff]
  %v24 = vld [vmem:[%s0 + $0x4c] sm:$0xf]
  %v25 = vld [vmem:[%s1] sm:$0xf]
  %v26 = vld [vmem:[%s1 + $0x4] sm:$0xf]
  %v27 = vld [vmem:[%s1 + $0x8] sm:$0xf]
  %v28 = vld [vmem:[%s1 + $0xc] sm:$0xf]
  %v29 = vld [vmem:[%s1 + $0x10] sm:$0xf]
  %v30 = vld [vmem:[%s1 + $0x14] sm:$0xf]
  %v31 = vld [vmem:[%s1 + $0x18] sm:$0xf]
  %v32 = vld [vmem:[%s1 + $0x1c] sm:$0xf]
  %v33 = vld [vmem:[%s1 + $0x20] sm:$0xf]
  %v34 = vld [vmem:[%s1 + $0x24] sm:$0xf]
  %v35 = vld [vmem:[%s1 + $0x28] sm:$0xf]
  %v36 = vld [vmem:[%s1 + $0x2c] sm:$0xf]
  %v37 = vld [vmem:[%s1 + $0x30] sm:$0xf]
  %v38 = vld [vmem:[%s1 + $0x34] sm:$0xf]
  %v39 = vld [vmem:[%s1 + $0x38] sm:$0xf]
  %v40 = vld [vmem:[%s1 + $0x3c] sm:$0xf]
  %v41 = vld [vmem:[%s1 + $0x40] sm:$0xf]
  %v42 = vld [vmem:[%s1 + $0x44] sm:$0xf]
  %v43 = vld [vmem:[%s1 + $0x48] sm:$0xf]
  %v44 = vld [vmem:[%s1 + $0x4c] sm:$0xf]
  %v45 = vld [vmem:[%s1 + $0x50] sm:$0xf]
  %v46 = vld [vmem:[%s1 + $0x54] sm:$0xf]
  %v47 = vld [vmem:[%s1 + $0x58] sm:$0xf]
  %v48 = vld [vmem:[%s1 + $0x5c] sm:$0xf]
  %v49 = vld [vmem:[%s1 + $0x60] sm:$0xf]
  %v50 = vld [vmem:[%s1 + $0x64] sm:$0xf]
  %v51 = vld [vmem:[%s1 + $0x68] sm:$0xf]
  %v52 = vld [vmem:[%s1 + $0x6c] sm:$0xf]
  %v53 = vld [vmem:[%s1 + $0x70] sm:$0xf]
  %v54 = vld [vmem:[%s1 + $0x74] sm:$0xf]
  %v55 = vld [vmem:[%s1 + $0x78] sm:$0xf]
  %v56 = vld [vmem:[%s1 + $0x7c] sm:$0xf]
  %v57 = vld [vmem:[%s1 + $0x80] sm:$0xf]
  %v58 = vld [vmem:[%s1 + $0x84] sm:$0xf]
  %v59 = vld [vmem:[%s1 + $0x88] sm:$0xf]
  %v60 = vld [vmem:[%s1 + $0x8c] sm:$0xf]
  %v61 = vld [vmem:[%s1 + $0x90] sm:$0xf]
  %v62 = vld [vmem:[%s1 + $0x94] sm:$0xf]
  %v63 = vld [vmem:[%s1 + $0x98] sm:$0xf]
  %v64 = vld [vmem:[%s1 + $0x9c] sm:$0xf]
  %v65 = vld [vmem:[%s1 + $0xa0] sm:$0xf]
  %v66 = vld [vmem:[%s1 + $0xa4] sm:$0xf]
  %v67 = vld [vmem:[%s1 + $0xa8] sm:$0xf]
  %v68 = vld [vmem:[%s1 + $0xac] sm:$0xf]
  %v69 = vld [vmem:[%s1 + $0xb0] sm:$0xf]
  %v70 = vld [vmem:[%s1 + $0xb4] sm:$0xf]
  %v71 = vld [vmem:[%s1 + $0xb8] sm:$0xf]
  %v72 = vld [vmem:[%s1 + $0xbc] sm:$0xf]
  %v73 = vld [vmem:[%s1 + $0xc0] sm:$0xf]
  %v74 = vld [vmem:[%s1 + $0xc4] sm:$0xf]
  %v75 = vld [vmem:[%s1 + $0xc8] sm:$0xf]
  %v76 = vld [vmem:[%s1 + $0xcc] sm:$0xf]
  %v77 = vld [vmem:[%s1 + $0xd0] sm:$0xf]
  %v78 = vld [vmem:[%s1 + $0xd4] sm:$0xf]
  %v79 = vld [vmem:[%s1 + $0xd8] sm:$0xf]
  %v80 = vld [vmem:[%s1 + $0xdc] sm:$0xf]
  %v81 = vld [vmem:[%s1 + $0xe0] sm:$0xf]
  %v82 = vld [vmem:[%s1 + $0xe4] sm:$0xf]
  %v83 = vld [vmem:[%s1 + $0xe8] sm:$0xf]
  %v84 = vld [vmem:[%s1 + $0xec] sm:$0xf]
  %v85 = vld [vmem:[%s1 + $0xf0] sm:$0xf]
  %v86 = vld [vmem:[%s1 + $0xf4] sm:$0xf]
  %v87 = vld [vmem:[%s1 + $0xf8] sm:$0xf]
  %v88 = vld [vmem:[%s1 + $0xfc] sm:$0xf]
  %v89 = vld [vmem:[%s1 + $0x100] sm:$0xf]
  %v90 = vld [vmem:[%s1 + $0x104] sm:$0xf]
  %v91 = vld [vmem:[%s1 + $0x108] sm:$0xf]
  %v92 = vld [vmem:[%s1 + $0x10c] sm:$0xf]
  %v93 = vld [vmem:[%s1 + $0x110] sm:$0xf]
  %v94 = vld [vmem:[%s1 + $0x114] sm:$0xf]
  %v95 = vld [vmem:[%s1 + $0x118] sm:$0xf]
  %v96 = vld [vmem:[%s1 + $0x11c] sm:$0xf]
  %v97 = vld [vmem:[%s1 + $0x120] sm:$0xf]
  %v98 = vld [vmem:[%s1 + $0x124] sm:$0xf]
  %v99 = vld [vmem:[%s1 + $0x128] sm:$0xf]
  %v100 = vld [vmem:[%s1 + $0x12c] sm:$0xf]
  %v101 = vld [vmem:[%s1 + $0x130] sm:$0xf]
  %v102 = vld [vmem:[%s1 + $0x134] sm:$0xf]
  %v103 = vld [vmem:[%s1 + $0x138] sm:$0xf]
  %v104 = vld [vmem:[%s1 + $0x13c] sm:$0xf]
  %v117 = vunpack.c.l.b16 %v13
  %v118 = vunpack.c.h.b16 %v13
  %v119 = vunpack.c.l.b16 %v14
  %v120 = vunpack.c.h.b16 %v14
  %v121 = vunpack.c.l.b16 %v15
  %v122 = vunpack.c.l.b16 %v16
  %v123 = vunpack.c.h.b16 %v16
  %v124 = vunpack.c.l.b16 %v17
  %v125 = vunpack.c.h.b16 %v17
  %v126 = vunpack.c.l.b16 %v18
  %v127 = vunpack.c.l.b16 %v19
  %v128 = vunpack.c.h.b16 %v19
  %v129 = vunpack.c.l.b16 %v20
  %v130 = vunpack.c.h.b16 %v20
  %v131 = vunpack.c.l.b16 %v21
  %v132 = vunpack.c.l.b16 %v22
  %v133 = vunpack.c.h.b16 %v22
  %v134 = vunpack.c.l.b16 %v23
  %v135 = vunpack.c.h.b16 %v23
  %v136 = vunpack.c.l.b16 %v24
  %v137 = vpack.c.b16 %v122, %v117
  %v138 = vpack.c.b16 %v123, %v118
  %v139 = vpack.c.b16 %v124, %v119
  %v140 = vpack.c.b16 %v125, %v120
  %v141 = vpack.c.b16 %v126, %v121
  %v142 = vpack.c.b16 %v132, %v127
  %v143 = vpack.c.b16 %v133, %v128
  %v144 = vpack.c.b16 %v134, %v129
  %v145 = vpack.c.b16 %v135, %v130
  %v146 = vpack.c.b16 %v136, %v131
  %v237 = vunpack.c.l.b16 %v25
  %v238 = vunpack.c.l.b16 %v26
  %v239 = vunpack.c.l.b16 %v27
  %v240 = vunpack.c.l.b16 %v28
  %v241 = vunpack.c.l.b16 %v29
  %v242 = vunpack.c.l.b16 %v30
  %v243 = vunpack.c.l.b16 %v31
  %v244 = vunpack.c.l.b16 %v32
  %v245 = vunpack.c.l.b16 %v33
  %v246 = vunpack.c.l.b16 %v34
  %v247 = vunpack.c.l.b16 %v35
  %v248 = vunpack.c.l.b16 %v36
  %v249 = vunpack.c.l.b16 %v37
  %v250 = vunpack.c.l.b16 %v38
  %v251 = vunpack.c.l.b16 %v39
  %v252 = vunpack.c.l.b16 %v40
  %v253 = vunpack.c.l.b16 %v41
  %v254 = vunpack.c.l.b16 %v42
  %v255 = vunpack.c.l.b16 %v43
  %v256 = vunpack.c.l.b16 %v44
  %v257 = vunpack.c.l.b16 %v45
  %v258 = vunpack.c.l.b16 %v46
  %v259 = vunpack.c.l.b16 %v47
  %v260 = vunpack.c.l.b16 %v48
  %v261 = vunpack.c.l.b16 %v49
  %v262 = vunpack.c.l.b16 %v50
  %v263 = vunpack.c.l.b16 %v51
  %v264 = vunpack.c.l.b16 %v52
  %v265 = vunpack.c.l.b16 %v53
  %v266 = vunpack.c.l.b16 %v54
  %v267 = vunpack.c.l.b16 %v55
  %v268 = vunpack.c.l.b16 %v56
  %v269 = vunpack.c.l.b16 %v57
  %v270 = vunpack.c.l.b16 %v58
  %v271 = vunpack.c.l.b16 %v59
  %v272 = vunpack.c.l.b16 %v60
  %v273 = vunpack.c.l.b16 %v61
  %v274 = vunpack.c.l.b16 %v62
  %v275 = vunpack.c.l.b16 %v63
  %v276 = vunpack.c.l.b16 %v64
  %v277 = vunpack.c.l.b16 %v65
  %v278 = vunpack.c.l.b16 %v66
  %v279 = vunpack.c.l.b16 %v67
  %v280 = vunpack.c.l.b16 %v68
  %v281 = vunpack.c.l.b16 %v69
  %v282 = vunpack.c.l.b16 %v70
  %v283 = vunpack.c.l.b16 %v71
  %v284 = vunpack.c.l.b16 %v72
  %v285 = vunpack.c.l.b16 %v73
  %v286 = vunpack.c.l.b16 %v74
  %v287 = vunpack.c.l.b16 %v75
  %v288 = vunpack.c.l.b16 %v76
  %v289 = vunpack.c.l.b16 %v77
  %v290 = vunpack.c.l.b16 %v78
  %v291 = vunpack.c.l.b16 %v79
  %v292 = vunpack.c.l.b16 %v80
  %v293 = vunpack.c.l.b16 %v81
  %v294 = vunpack.c.l.b16 %v82
  %v295 = vunpack.c.l.b16 %v83
  %v296 = vunpack.c.l.b16 %v84
  %v297 = vunpack.c.l.b16 %v85
  %v298 = vunpack.c.l.b16 %v86
  %v299 = vunpack.c.l.b16 %v87
  %v300 = vunpack.c.l.b16 %v88
  %v301 = vunpack.c.l.b16 %v89
  %v302 = vunpack.c.l.b16 %v90
  %v303 = vunpack.c.l.b16 %v91
  %v304 = vunpack.c.l.b16 %v92
  %v305 = vunpack.c.l.b16 %v93
  %v306 = vunpack.c.l.b16 %v94
  %v307 = vunpack.c.l.b16 %v95
  %v308 = vunpack.c.l.b16 %v96
  %v309 = vunpack.c.l.b16 %v97
  %v310 = vunpack.c.l.b16 %v98
  %v311 = vunpack.c.l.b16 %v99
  %v312 = vunpack.c.l.b16 %v100
  %v313 = vunpack.c.l.b16 %v101
  %v314 = vunpack.c.l.b16 %v102
  %v315 = vunpack.c.l.b16 %v103
  %v316 = vunpack.c.l.b16 %v104
  %v317 = vpack.c.b16 %v238, %v237
  %v318 = vpack.c.b16 %v240, %v239
  %v319 = vpack.c.b16 %v242, %v241
  %v320 = vpack.c.b16 %v244, %v243
  %v321 = vpack.c.b16 %v246, %v245
  %v322 = vpack.c.b16 %v248, %v247
  %v323 = vpack.c.b16 %v250, %v249
  %v324 = vpack.c.b16 %v252, %v251
  %v325 = vpack.c.b16 %v254, %v253
  %v326 = vpack.c.b16 %v256, %v255
  %v327 = vpack.c.b16 %v258, %v257
  %v328 = vpack.c.b16 %v260, %v259
  %v329 = vpack.c.b16 %v262, %v261
  %v330 = vpack.c.b16 %v264, %v263
  %v331 = vpack.c.b16 %v266, %v265
  %v332 = vpack.c.b16 %v268, %v267
  %v333 = vpack.c.b16 %v270, %v269
  %v334 = vpack.c.b16 %v272, %v271
  %v335 = vpack.c.b16 %v274, %v273
  %v336 = vpack.c.b16 %v276, %v275
  %v337 = vpack.c.b16 %v278, %v277
  %v338 = vpack.c.b16 %v280, %v279
  %v339 = vpack.c.b16 %v282, %v281
  %v340 = vpack.c.b16 %v284, %v283
  %v341 = vpack.c.b16 %v286, %v285
  %v342 = vpack.c.b16 %v288, %v287
  %v343 = vpack.c.b16 %v290, %v289
  %v344 = vpack.c.b16 %v292, %v291
  %v345 = vpack.c.b16 %v294, %v293
  %v346 = vpack.c.b16 %v296, %v295
  %v347 = vpack.c.b16 %v298, %v297
  %v348 = vpack.c.b16 %v300, %v299
  %v349 = vpack.c.b16 %v302, %v301
  %v350 = vpack.c.b16 %v304, %v303
  %v351 = vpack.c.b16 %v306, %v305
  %v352 = vpack.c.b16 %v308, %v307
  %v353 = vpack.c.b16 %v310, %v309
  %v354 = vpack.c.b16 %v312, %v311
  %v355 = vpack.c.b16 %v314, %v313
  %v356 = vpack.c.b16 %v316, %v315
  %397 = vmatpush.bf16.msra.mxu0 %v324
  %398 = vmatpush.bf16.msra.mxu0 %v323
  %399 = vmatpush.bf16.msra.mxu0 %v322
  %400 = vmatpush.bf16.msra.mxu0 %v321
  %401 = vmatpush.bf16.msra.mxu0 %v320
  %402 = vmatpush.bf16.msra.mxu0 %v319
  %403 = vmatpush.bf16.msra.mxu0 %v318
  %404 = vmatpush.bf16.msra.mxu0 %v317
  %405 = vmatmul.bf16.gmra.mxu0 %v137
  %v406 = vpop.f32.mrf.mxu0
  %v407 = vadd.f32 0.0, %v406
  %v408 = vpop.f32.mrf.mxu0
  %v409 = vadd.f32 0.0, %v408
  %410 = vmatmul.bf16.gmra.mxu0 %v142
  %v411 = vpop.f32.mrf.mxu0
  %v412 = vadd.f32 0.0, %v411
  %v413 = vpop.f32.mrf.mxu0
  %v414 = vadd.f32 0.0, %v413
  %415 = vdwg.mxu0
  %416 = vmatpush.bf16.msra.mxu0 %v332
  %417 = vmatpush.bf16.msra.mxu0 %v331
  %418 = vmatpush.bf16.msra.mxu0 %v330
  %419 = vmatpush.bf16.msra.mxu0 %v329
  %420 = vmatpush.bf16.msra.mxu0 %v328
  %421 = vmatpush.bf16.msra.mxu0 %v327
  %422 = vmatpush.bf16.msra.mxu0 %v326
  %423 = vmatpush.bf16.msra.mxu0 %v325
  %424 = vmatmul.bf16.gmra.mxu0 %v138
  %v425 = vpop.f32.mrf.mxu0
  %v426 = vadd.f32 %v407, %v425
  %v427 = vpop.f32.mrf.mxu0
  %v428 = vadd.f32 %v409, %v427
  %429 = vmatmul.bf16.gmra.mxu0 %v143
  %v430 = vpop.f32.mrf.mxu0
  %v431 = vadd.f32 %v412, %v430
  %v432 = vpop.f32.mrf.mxu0
  %v433 = vadd.f32 %v414, %v432
  %434 = vdwg.mxu0
  %435 = vmatpush.bf16.msra.mxu0 %v340
  %436 = vmatpush.bf16.msra.mxu0 %v339
  %437 = vmatpush.bf16.msra.mxu0 %v338
  %438 = vmatpush.bf16.msra.mxu0 %v337
  %439 = vmatpush.bf16.msra.mxu0 %v336
  %440 = vmatpush.bf16.msra.mxu0 %v335
  %441 = vmatpush.bf16.msra.mxu0 %v334
  %442 = vmatpush.bf16.msra.mxu0 %v333
  %443 = vmatmul.bf16.gmra.mxu0 %v139
  %v444 = vpop.f32.mrf.mxu0
  %v445 = vadd.f32 %v426, %v444
  %v446 = vpop.f32.mrf.mxu0
  %v447 = vadd.f32 %v428, %v446
  %448 = vmatmul.bf16.gmra.mxu0 %v144
  %v449 = vpop.f32.mrf.mxu0
  %v450 = vadd.f32 %v431, %v449
  %v451 = vpop.f32.mrf.mxu0
  %v452 = vadd.f32 %v433, %v451
  %453 = vdwg.mxu0
  %454 = vmatpush.bf16.msra.mxu0 %v348
  %455 = vmatpush.bf16.msra.mxu0 %v347
  %456 = vmatpush.bf16.msra.mxu0 %v346
  %457 = vmatpush.bf16.msra.mxu0 %v345
  %458 = vmatpush.bf16.msra.mxu0 %v344
  %459 = vmatpush.bf16.msra.mxu0 %v343
  %460 = vmatpush.bf16.msra.mxu0 %v342
  %461 = vmatpush.bf16.msra.mxu0 %v341
  %462 = vmatmul.bf16.gmra.mxu0 %v140
  %v463 = vpop.f32.mrf.mxu0
  %v464 = vadd.f32 %v445, %v463
  %v465 = vpop.f32.mrf.mxu0
  %v466 = vadd.f32 %v447, %v465
  %467 = vmatmul.bf16.gmra.mxu0 %v145
  %v468 = vpop.f32.mrf.mxu0
  %v469 = vadd.f32 %v450, %v468
  %v470 = vpop.f32.mrf.mxu0
  %v471 = vadd.f32 %v452, %v470
  %472 = vdwg.mxu0
  %473 = vmatpush.bf16.msra.mxu0 %v356
  %474 = vmatpush.bf16.msra.mxu0 %v355
  %475 = vmatpush.bf16.msra.mxu0 %v354
  %476 = vmatpush.bf16.msra.mxu0 %v353
  %477 = vmatpush.bf16.msra.mxu0 %v352
  %478 = vmatpush.bf16.msra.mxu0 %v351
  %479 = vmatpush.bf16.msra.mxu0 %v350
  %480 = vmatpush.bf16.msra.mxu0 %v349
  %481 = vmatmul.bf16.gmra.mxu0 %v141
  %v482 = vpop.f32.mrf.mxu0
  %v483 = vadd.f32 %v464, %v482
  %v484 = vpop.f32.mrf.mxu0
  %v485 = vadd.f32 %v466, %v484
  %486 = vmatmul.bf16.gmra.mxu0 %v146
  %v487 = vpop.f32.mrf.mxu0
  %v488 = vadd.f32 %v469, %v487
  %v489 = vpop.f32.mrf.mxu0
  %v490 = vadd.f32 %v471, %v489
  %491 = vdwg.mxu0
  %492 = vst [vmem:[%s2] sm:$0xff] %v483
  %493 = vst [vmem:[%s2 + $0x8] sm:$0xff] %v485
  %494 = vst [vmem:[%s2 + $0x10] sm:$0xff] %v488
  %495 = vst [vmem:[%s2 + $0x18] sm:$0xff] %v490
  %496 = vst [vmem:[%s3] sm:$0xff] 0.0
  %v497 = vadd.f32 %v483, %v485
  %v498 = vadd.f32 %v497, %v488
  %v499 = vadd.f32 %v498, %v490
  %v500 = vrot.slane %v499, 4
  %v501 = vadd.f32 %v499, %v500
  %v502 = vrot.slane %v501, 2
  %v503 = vadd.f32 %v501, %v502
  %v504 = vrot.slane %v503, 1
  %v505 = vadd.f32 %v503, %v504
  %506 = vst [vmem:[%s3] sm:$0x1] %v505
  %v507 = vmul.f32 %v483, %v483
  %v508 = vmul.f32 %v485, %v485
  %v509 = vmul.f32 %v488, %v488
  %v510 = vmul.f32 %v490, %v490
  %v511 = vadd.f32 %v507, %v508
  %v512 = vadd.f32 %v511, %v509
  %v513 = vadd.f32 %v512, %v510
  %v514 = vrot.slane %v513, 4
  %v515 = vadd.f32 %v513, %v514
  %v516 = vrot.slane %v515, 2
  %v517 = vadd.f32 %v515, %v516
  %v518 = vrot.slane %v517, 1
  %v519 = vadd.f32 %v517, %v518
  %520 = vst [vmem:[%s3 + $0x1] sm:$0x1] %v519
  // Predicated region
  $region10: #{forward.17} parent=0 // pred_check
    _
  $region11: #{forward.17} parent=0 // pred_check_branch
    %522 = sbr.rel (0) target = $region13
  $region12: #{forward.17} parent=0 // pred_region
    _
  $region13: #{forward.17} parent=0 // pred_fallthru
    _
  // Predicated region
  $region14: #{forward.17} parent=0 // pred_check
    _
  $region15: #{forward.17} parent=0 // pred_check_branch
    %524 = sbr.rel (0) target = $region17
  $region16: #{forward.17} parent=0 // pred_region
    _
  $region17: #{forward.17} parent=0 // pred_fallthru
    _
  // Predicated region
  $region18: #{forward.17} parent=0 // pred_check
    _
  $region19: #{forward.17} parent=0 // pred_check_branch
    %526 = sbr.rel (0) target = $region21
  $region20: #{forward.17} parent=0 // pred_region
    _
  $region21: #{forward.17} parent=0 // pred_fallthru
    _
  // Predicated region
  $region22: #{forward.17} parent=0 // pred_check
    _
  $region23: #{forward.17} parent=0 // pred_check_branch
    %528 = sbr.rel (0) target = $region25
  $region24: #{forward.17} parent=0 // pred_region
    _
  $region25: #{forward.17} parent=0 // pred_fallthru
    _

// kernel: forward.19
$region0: #{forward.19}
  #allocation0 [shape = 'u32[]', space=smem, size = 0x4, offset = 0x4, fixed_abs, tag = 'smem constant byte address 0x4 - core index']
  #allocation1 [shape = 'u32[72,128]{1,0:T(1,128)}', space=vmem, size = 0x9000, scoped, tag = 'internal scratch']
  %s0 = inlined_call_operand.vmem [shape: bf16[32,1152], index: 0, kind: input, shape index: {}]
  %s1 = inlined_call_operand.vmem [shape: bf16[1152,128], index: 1, kind: input, shape index: {}]
  %s2 = inlined_call_operand.vmem [shape: f32[32,128], index: 2, kind: output, shape index: {0}]
  %s3 = inlined_call_operand.vmem [shape: f32[8,128], index: 3, kind: output, shape index: {1}]
  %4 = xla_tuple %s2, %s3
  %s5 = sld [smem:[#allocation0]]
  $region26: #{forward.19} parent=0
    _
  %s7 = ssub.s32 1, %s5
  %s8 = scalar_select 0, %s7, %s5
  // Predicated region
  $region2: #{forward.19} parent=0 // pred_check
    _
  $region3: #{forward.19} parent=0 // pred_check_branch
    %10 = sbr.rel (0) target = $region5
  $region4: #{forward.19} parent=0 // pred_region
    _
  $region5: #{forward.19} parent=0 // pred_fallthru
    _
  // Predicated region
  $region6: #{forward.19} parent=0 // pred_check
    _
  $region7: #{forward.19} parent=0 // pred_check_branch
    %12 = sbr.rel (0) target = $region9
  $region8: #{forward.19} parent=0 // pred_region
    _
  $region9: #{forward.19} parent=0 // pred_fallthru
    _
  %v13 = vld [vmem:[%s0] sm:$0xff]
  %v14 = vld [vmem:[%s0 + $0x8] sm:$0xff]
  %v15 = vld [vmem:[%s0 + $0x10] sm:$0xff]
  %v16 = vld [vmem:[%s0 + $0x18] sm:$0xff]
  %v17 = vld [vmem:[%s0 + $0x20] sm:$0xf]
  %v18 = vld [vmem:[%s0 + $0x24] sm:$0xff]
  %v19 = vld [vmem:[%s0 + $0x2c] sm:$0xff]
  %v20 = vld [vmem:[%s0 + $0x34] sm:$0xff]
  %v21 = vld [vmem:[%s0 + $0x3c] sm:$0xff]
  %v22 = vld [vmem:[%s0 + $0x44] sm:$0xf]
  %v23 = vld [vmem:[%s0 + $0x48] sm:$0xff]
  %v24 = vld [vmem:[%s0 + $0x50] sm:$0xff]
  %v25 = vld [vmem:[%s0 + $0x58] sm:$0xff]
  %v26 = vld [vmem:[%s0 + $0x60] sm:$0xff]
  %v27 = vld [vmem:[%s0 + $0x68] sm:$0xf]
  %v28 = vld [vmem:[%s0 + $0x6c] sm:$0xff]
  %v29 = vld [vmem:[%s0 + $0x74] sm:$0xff]
  %v30 = vld [vmem:[%s0 + $0x7c] sm:$0xff]
  %v31 = vld [vmem:[%s0 + $0x84] sm:$0xff]
  %v32 = vld [vmem:[%s0 + $0x8c] sm:$0xf]
  %v33 = vld [vmem:[%s1] sm:$0xf]
  %v34 = vld [vmem:[%s1 + $0x4] sm:$0xf]
  %v35 = vld [vmem:[%s1 + $0x8] sm:$0xf]
  %v36 = vld [vmem:[%s1 + $0xc] sm:$0xf]
  %v37 = vld [vmem:[%s1 + $0x10] sm:$0xf]
  %v38 = vld [vmem:[%s1 + $0x14] sm:$0xf]
  %v39 = vld [vmem:[%s1 + $0x18] sm:$0xf]
  %v40 = vld [vmem:[%s1 + $0x1c] sm:$0xf]
  %v41 = vld [vmem:[%s1 + $0x20] sm:$0xf]
  %v42 = vld [vmem:[%s1 + $0x24] sm:$0xf]
  %v43 = vld [vmem:[%s1 + $0x28] sm:$0xf]
  %v44 = vld [vmem:[%s1 + $0x2c] sm:$0xf]
  %v45 = vld [vmem:[%s1 + $0x30] sm:$0xf]
  %v46 = vld [vmem:[%s1 + $0x34] sm:$0xf]
  %v47 = vld [vmem:[%s1 + $0x38] sm:$0xf]
  %v48 = vld [vmem:[%s1 + $0x3c] sm:$0xf]
  %v49 = vld [vmem:[%s1 + $0x40] sm:$0xf]
  %v50 = vld [vmem:[%s1 + $0x44] sm:$0xf]
  %v51 = vld [vmem:[%s1 + $0x48] sm:$0xf]
  %v52 = vld [vmem:[%s1 + $0x4c] sm:$0xf]
  %v53 = vld [vmem:[%s1 + $0x50] sm:$0xf]
  %v54 = vld [vmem:[%s1 + $0x54] sm:$0xf]
  %v55 = vld [vmem:[%s1 + $0x58] sm:$0xf]
  %v56 = vld [vmem:[%s1 + $0x5c] sm:$0xf]
  %v57 = vld [vmem:[%s1 + $0x60] sm:$0xf]
  %v58 = vld [vmem:[%s1 + $0x64] sm:$0xf]
  %v59 = vld [vmem:[%s1 + $0x68] sm:$0xf]
  %v60 = vld [vmem:[%s1 + $0x6c] sm:$0xf]
  %v61 = vld [vmem:[%s1 + $0x70] sm:$0xf]
  %v62 = vld [vmem:[%s1 + $0x74] sm:$0xf]
  %v63 = vld [vmem:[%s1 + $0x78] sm:$0xf]
  %v64 = vld [vmem:[%s1 + $0x7c] sm:$0xf]
  %v65 = vld [vmem:[%s1 + $0x80] sm:$0xf]
  %v66 = vld [vmem:[%s1 + $0x84] sm:$0xf]
  %v67 = vld [vmem:[%s1 + $0x88] sm:$0xf]
  %v68 = vld [vmem:[%s1 + $0x8c] sm:$0xf]
  %v69 = vld [vmem:[%s1 + $0x90] sm:$0xf]
  %v70 = vld [vmem:[%s1 + $0x94] sm:$0xf]
  %v71 = vld [vmem:[%s1 + $0x98] sm:$0xf]
  %v72 = vld [vmem:[%s1 + $0x9c] sm:$0xf]
  %v73 = vld [vmem:[%s1 + $0xa0] sm:$0xf]
  %v74 = vld [vmem:[%s1 + $0xa4] sm:$0xf]
  %v75 = vld [vmem:[%s1 + $0xa8] sm:$0xf]
  %v76 = vld [vmem:[%s1 + $0xac] sm:$0xf]
  %v77 = vld [vmem:[%s1 + $0xb0] sm:$0xf]
  %v78 = vld [vmem:[%s1 + $0xb4] sm:$0xf]
  %v79 = vld [vmem:[%s1 + $0xb8] sm:$0xf]
  %v80 = vld [vmem:[%s1 + $0xbc] sm:$0xf]
  %v81 = vld [vmem:[%s1 + $0xc0] sm:$0xf]
  %v82 = vld [vmem:[%s1 + $0xc4] sm:$0xf]
  %v83 = vld [vmem:[%s1 + $0xc8] sm:$0xf]
  %v84 = vld [vmem:[%s1 + $0xcc] sm:$0xf]
  %v85 = vld [vmem:[%s1 + $0xd0] sm:$0xf]
  %v86 = vld [vmem:[%s1 + $0xd4] sm:$0xf]
  %v87 = vld [vmem:[%s1 + $0xd8] sm:$0xf]
  %v88 = vld [vmem:[%s1 + $0xdc] sm:$0xf]
  %v89 = vld [vmem:[%s1 + $0xe0] sm:$0xf]
  %v90 = vld [vmem:[%s1 + $0xe4] sm:$0xf]
  %v91 = vld [vmem:[%s1 + $0xe8] sm:$0xf]
  %v92 = vld [vmem:[%s1 + $0xec] sm:$0xf]
  %v93 = vld [vmem:[%s1 + $0xf0] sm:$0xf]
  %v94 = vld [vmem:[%s1 + $0xf4] sm:$0xf]
  %v95 = vld [vmem:[%s1 + $0xf8] sm:$0xf]
  %v96 = vld [vmem:[%s1 + $0xfc] sm:$0xf]
  %v97 = vld [vmem:[%s1 + $0x100] sm:$0xf]
  %v98 = vld [vmem:[%s1 + $0x104] sm:$0xf]
  %v99 = vld [vmem:[%s1 + $0x108] sm:$0xf]
  %v100 = vld [vmem:[%s1 + $0x10c] sm:$0xf]
  %v101 = vld [vmem:[%s1 + $0x110] sm:$0xf]
  %v102 = vld [vmem:[%s1 + $0x114] sm:$0xf]
  %v103 = vld [vmem:[%s1 + $0x118] sm:$0xf]
  %v104 = vld [vmem:[%s1 + $0x11c] sm:$0xf]
  %v105 = vld [vmem:[%s1 + $0x120] sm:$0xf]
  %v106 = vld [vmem:[%s1 + $0x124] sm:$0xf]
  %v107 = vld [vmem:[%s1 + $0x128] sm:$0xf]
  %v108 = vld [vmem:[%s1 + $0x12c] sm:$0xf]
  %v109 = vld [vmem:[%s1 + $0x130] sm:$0xf]
  %v110 = vld [vmem:[%s1 + $0x134] sm:$0xf]
  %v111 = vld [vmem:[%s1 + $0x138] sm:$0xf]
  %v112 = vld [vmem:[%s1 + $0x13c] sm:$0xf]
  %v113 = vld [vmem:[%s1 + $0x140] sm:$0xf]
  %v114 = vld [vmem:[%s1 + $0x144] sm:$0xf]
  %v115 = vld [vmem:[%s1 + $0x148] sm:$0xf]
  %v116 = vld [vmem:[%s1 + $0x14c] sm:$0xf]
  %v117 = vld [vmem:[%s1 + $0x150] sm:$0xf]
  %v118 = vld [vmem:[%s1 + $0x154] sm:$0xf]
  %v119 = vld [vmem:[%s1 + $0x158] sm:$0xf]
  %v120 = vld [vmem:[%s1 + $0x15c] sm:$0xf]
  %v121 = vld [vmem:[%s1 + $0x160] sm:$0xf]
  %v122 = vld [vmem:[%s1 + $0x164] sm:$0xf]
  %v123 = vld [vmem:[%s1 + $0x168] sm:$0xf]
  %v124 = vld [vmem:[%s1 + $0x16c] sm:$0xf]
  %v125 = vld [vmem:[%s1 + $0x170] sm:$0xf]
  %v126 = vld [vmem:[%s1 + $0x174] sm:$0xf]
  %v127 = vld [vmem:[%s1 + $0x178] sm:$0xf]
  %v128 = vld [vmem:[%s1 + $0x17c] sm:$0xf]
  %v129 = vld [vmem:[%s1 + $0x180] sm:$0xf]
  %v130 = vld [vmem:[%s1 + $0x184] sm:$0xf]
  %v131 = vld [vmem:[%s1 + $0x188] sm:$0xf]
  %v132 = vld [vmem:[%s1 + $0x18c] sm:$0xf]
  %v133 = vld [vmem:[%s1 + $0x190] sm:$0xf]
  %v134 = vld [vmem:[%s1 + $0x194] sm:$0xf]
  %v135 = vld [vmem:[%s1 + $0x198] sm:$0xf]
  %v136 = vld [vmem:[%s1 + $0x19c] sm:$0xf]
  %v137 = vld [vmem:[%s1 + $0x1a0] sm:$0xf]
  %v138 = vld [vmem:[%s1 + $0x1a4] sm:$0xf]
  %v139 = vld [vmem:[%s1 + $0x1a8] sm:$0xf]
  %v140 = vld [vmem:[%s1 + $0x1ac] sm:$0xf]
  %v141 = vld [vmem:[%s1 + $0x1b0] sm:$0xf]
  %v142 = vld [vmem:[%s1 + $0x1b4] sm:$0xf]
  %v143 = vld [vmem:[%s1 + $0x1b8] sm:$0xf]
  %v144 = vld [vmem:[%s1 + $0x1bc] sm:$0xf]
  %v145 = vld [vmem:[%s1 + $0x1c0] sm:$0xf]
  %v146 = vld [vmem:[%s1 + $0x1c4] sm:$0xf]
  %v147 = vld [vmem:[%s1 + $0x1c8] sm:$0xf]
  %v148 = vld [vmem:[%s1 + $0x1cc] sm:$0xf]
  %v149 = vld [vmem:[%s1 + $0x1d0] sm:$0xf]
  %v150 = vld [vmem:[%s1 + $0x1d4] sm:$0xf]
  %v151 = vld [vmem:[%s1 + $0x1d8] sm:$0xf]
  %v152 = vld [vmem:[%s1 + $0x1dc] sm:$0xf]
  %v153 = vld [vmem:[%s1 + $0x1e0] sm:$0xf]
  %v154 = vld [vmem:[%s1 + $0x1e4] sm:$0xf]
  %v155 = vld [vmem:[%s1 + $0x1e8] sm:$0xf]
  %v156 = vld [vmem:[%s1 + $0x1ec] sm:$0xf]
  %v157 = vld [vmem:[%s1 + $0x1f0] sm:$0xf]
  %v158 = vld [vmem:[%s1 + $0x1f4] sm:$0xf]
  %v159 = vld [vmem:[%s1 + $0x1f8] sm:$0xf]
  %v160 = vld [vmem:[%s1 + $0x1fc] sm:$0xf]
  %v161 = vld [vmem:[%s1 + $0x200] sm:$0xf]
  %v162 = vld [vmem:[%s1 + $0x204] sm:$0xf]
  %v163 = vld [vmem:[%s1 + $0x208] sm:$0xf]
  %v164 = vld [vmem:[%s1 + $0x20c] sm:$0xf]
  %v165 = vld [vmem:[%s1 + $0x210] sm:$0xf]
  %v166 = vld [vmem:[%s1 + $0x214] sm:$0xf]
  %v167 = vld [vmem:[%s1 + $0x218] sm:$0xf]
  %v168 = vld [vmem:[%s1 + $0x21c] sm:$0xf]
  %v169 = vld [vmem:[%s1 + $0x220] sm:$0xf]
  %v170 = vld [vmem:[%s1 + $0x224] sm:$0xf]
  %v171 = vld [vmem:[%s1 + $0x228] sm:$0xf]
  %v172 = vld [vmem:[%s1 + $0x22c] sm:$0xf]
  %v173 = vld [vmem:[%s1 + $0x230] sm:$0xf]
  %v174 = vld [vmem:[%s1 + $0x234] sm:$0xf]
  %v175 = vld [vmem:[%s1 + $0x238] sm:$0xf]
  %v176 = vld [vmem:[%s1 + $0x23c] sm:$0xf]
  %v197 = vunpack.c.l.b16 %v13
  %v198 = vunpack.c.h.b16 %v13
  %v199 = vunpack.c.l.b16 %v14
  %v200 = vunpack.c.h.b16 %v14
  %v201 = vunpack.c.l.b16 %v15
  %v202 = vunpack.c.h.b16 %v15
  %v203 = vunpack.c.l.b16 %v16
  %v204 = vunpack.c.h.b16 %v16
  %v205 = vunpack.c.l.b16 %v17
  %v206 = vunpack.c.l.b16 %v18
  %v207 = vunpack.c.h.b16 %v18
  %v208 = vunpack.c.l.b16 %v19
  %v209 = vunpack.c.h.b16 %v19
  %v210 = vunpack.c.l.b16 %v20
  %v211 = vunpack.c.h.b16 %v20
  %v212 = vunpack.c.l.b16 %v21
  %v213 = vunpack.c.h.b16 %v21
  %v214 = vunpack.c.l.b16 %v22
  %v215 = vunpack.c.l.b16 %v23
  %v216 = vunpack.c.h.b16 %v23
  %v217 = vunpack.c.l.b16 %v24
  %v218 = vunpack.c.h.b16 %v24
  %v219 = vunpack.c.l.b16 %v25
  %v220 = vunpack.c.h.b16 %v25
  %v221 = vunpack.c.l.b16 %v26
  %v222 = vunpack.c.h.b16 %v26
  %v223 = vunpack.c.l.b16 %v27
  %v224 = vunpack.c.l.b16 %v28
  %v225 = vunpack.c.h.b16 %v28
  %v226 = vunpack.c.l.b16 %v29
  %v227 = vunpack.c.h.b16 %v29
  %v228 = vunpack.c.l.b16 %v30
  %v229 = vunpack.c.h.b16 %v30
  %v230 = vunpack.c.l.b16 %v31
  %v231 = vunpack.c.h.b16 %v31
  %v232 = vunpack.c.l.b16 %v32
  %v233 = vpack.c.b16 %v206, %v197
  %v234 = vpack.c.b16 %v207, %v198
  %v235 = vpack.c.b16 %v208, %v199
  %v236 = vpack.c.b16 %v209, %v200
  %v237 = vpack.c.b16 %v210, %v201
  %v238 = vpack.c.b16 %v211, %v202
  %v239 = vpack.c.b16 %v212, %v203
  %v240 = vpack.c.b16 %v213, %v204
  %v241 = vpack.c.b16 %v214, %v205
  %v242 = vpack.c.b16 %v224, %v215
  %v243 = vpack.c.b16 %v225, %v216
  %v244 = vpack.c.b16 %v226, %v217
  %v245 = vpack.c.b16 %v227, %v218
  %v246 = vpack.c.b16 %v228, %v219
  %v247 = vpack.c.b16 %v229, %v220
  %v248 = vpack.c.b16 %v230, %v221
  %v249 = vpack.c.b16 %v231, %v222
  %v250 = vpack.c.b16 %v232, %v223
  %v413 = vunpack.c.l.b16 %v33
  %v414 = vunpack.c.l.b16 %v34
  %v415 = vunpack.c.l.b16 %v35
  %v416 = vunpack.c.l.b16 %v36
  %v417 = vunpack.c.l.b16 %v37
  %v418 = vunpack.c.l.b16 %v38
  %v419 = vunpack.c.l.b16 %v39
  %v420 = vunpack.c.l.b16 %v40
  %v421 = vunpack.c.l.b16 %v41
  %v422 = vunpack.c.l.b16 %v42
  %v423 = vunpack.c.l.b16 %v43
  %v424 = vunpack.c.l.b16 %v44
  %v425 = vunpack.c.l.b16 %v45
  %v426 = vunpack.c.l.b16 %v46
  %v427 = vunpack.c.l.b16 %v47
  %v428 = vunpack.c.l.b16 %v48
  %v429 = vunpack.c.l.b16 %v49
  %v430 = vunpack.c.l.b16 %v50
  %v431 = vunpack.c.l.b16 %v51
  %v432 = vunpack.c.l.b16 %v52
  %v433 = vunpack.c.l.b16 %v53
  %v434 = vunpack.c.l.b16 %v54
  %v435 = vunpack.c.l.b16 %v55
  %v436 = vunpack.c.l.b16 %v56
  %v437 = vunpack.c.l.b16 %v57
  %v438 = vunpack.c.l.b16 %v58
  %v439 = vunpack.c.l.b16 %v59
  %v440 = vunpack.c.l.b16 %v60
  %v441 = vunpack.c.l.b16 %v61
  %v442 = vunpack.c.l.b16 %v62
  %v443 = vunpack.c.l.b16 %v63
  %v444 = vunpack.c.l.b16 %v64
  %v445 = vunpack.c.l.b16 %v65
  %v446 = vunpack.c.l.b16 %v66
  %v447 = vunpack.c.l.b16 %v67
  %v448 = vunpack.c.l.b16 %v68
  %v449 = vunpack.c.l.b16 %v69
  %v450 = vunpack.c.l.b16 %v70
  %v451 = vunpack.c.l.b16 %v71
  %v452 = vunpack.c.l.b16 %v72
  %v453 = vunpack.c.l.b16 %v73
  %v454 = vunpack.c.l.b16 %v74
  %v455 = vunpack.c.l.b16 %v75
  %v456 = vunpack.c.l.b16 %v76
  %v457 = vunpack.c.l.b16 %v77
  %v458 = vunpack.c.l.b16 %v78
  %v459 = vunpack.c.l.b16 %v79
  %v460 = vunpack.c.l.b16 %v80
  %v461 = vunpack.c.l.b16 %v81
  %v462 = vunpack.c.l.b16 %v82
  %v463 = vunpack.c.l.b16 %v83
  %v464 = vunpack.c.l.b16 %v84
  %v465 = vunpack.c.l.b16 %v85
  %v466 = vunpack.c.l.b16 %v86
  %v467 = vunpack.c.l.b16 %v87
  %v468 = vunpack.c.l.b16 %v88
  %v469 = vunpack.c.l.b16 %v89
  %v470 = vunpack.c.l.b16 %v90
  %v471 = vunpack.c.l.b16 %v91
  %v472 = vunpack.c.l.b16 %v92
  %v473 = vunpack.c.l.b16 %v93
  %v474 = vunpack.c.l.b16 %v94
  %v475 = vunpack.c.l.b16 %v95
  %v476 = vunpack.c.l.b16 %v96
  %v477 = vunpack.c.l.b16 %v97
  %v478 = vunpack.c.l.b16 %v98
  %v479 = vunpack.c.l.b16 %v99
  %v480 = vunpack.c.l.b16 %v100
  %v481 = vunpack.c.l.b16 %v101
  %v482 = vunpack.c.l.b16 %v102
  %v483 = vunpack.c.l.b16 %v103
  %v484 = vunpack.c.l.b16 %v104
  %v485 = vunpack.c.l.b16 %v105
  %v486 = vunpack.c.l.b16 %v106
  %v487 = vunpack.c.l.b16 %v107
  %v488 = vunpack.c.l.b16 %v108
  %v489 = vunpack.c.l.b16 %v109
  %v490 = vunpack.c.l.b16 %v110
  %v491 = vunpack.c.l.b16 %v111
  %v492 = vunpack.c.l.b16 %v112
  %v493 = vunpack.c.l.b16 %v113
  %v494 = vunpack.c.l.b16 %v114
  %v495 = vunpack.c.l.b16 %v115
  %v496 = vunpack.c.l.b16 %v116
  %v497 = vunpack.c.l.b16 %v117
  %v498 = vunpack.c.l.b16 %v118
  %v499 = vunpack.c.l.b16 %v119
  %v500 = vunpack.c.l.b16 %v120
  %v501 = vunpack.c.l.b16 %v121
  %v502 = vunpack.c.l.b16 %v122
  %v503 = vunpack.c.l.b16 %v123
  %v504 = vunpack.c.l.b16 %v124
  %v505 = vunpack.c.l.b16 %v125
  %v506 = vunpack.c.l.b16 %v126
  %v507 = vunpack.c.l.b16 %v127
  %v508 = vunpack.c.l.b16 %v128
  %v509 = vunpack.c.l.b16 %v129
  %v510 = vunpack.c.l.b16 %v130
  %v511 = vunpack.c.l.b16 %v131
  %v512 = vunpack.c.l.b16 %v132
  %v513 = vunpack.c.l.b16 %v133
  %v514 = vunpack.c.l.b16 %v134
  %v515 = vunpack.c.l.b16 %v135
  %v516 = vunpack.c.l.b16 %v136
  %v517 = vunpack.c.l.b16 %v137
  %v518 = vunpack.c.l.b16 %v138
  %v519 = vunpack.c.l.b16 %v139
  %v520 = vunpack.c.l.b16 %v140
  %v521 = vunpack.c.l.b16 %v141
  %v522 = vunpack.c.l.b16 %v142
  %v523 = vunpack.c.l.b16 %v143
  %v524 = vunpack.c.l.b16 %v144
  %v525 = vunpack.c.l.b16 %v145
  %v526 = vunpack.c.l.b16 %v146
  %v527 = vunpack.c.l.b16 %v147
  %v528 = vunpack.c.l.b16 %v148
  %v529 = vunpack.c.l.b16 %v149
  %v530 = vunpack.c.l.b16 %v150
  %v531 = vunpack.c.l.b16 %v151
  %v532 = vunpack.c.l.b16 %v152
  %v533 = vunpack.c.l.b16 %v153
  %v534 = vunpack.c.l.b16 %v154
  %v535 = vunpack.c.l.b16 %v155
  %v536 = vunpack.c.l.b16 %v156
  %v537 = vunpack.c.l.b16 %v157
  %v538 = vunpack.c.l.b16 %v158
  %v539 = vunpack.c.l.b16 %v159
  %v540 = vunpack.c.l.b16 %v160
  %v541 = vunpack.c.l.b16 %v161
  %v542 = vunpack.c.l.b16 %v162
  %v543 = vunpack.c.l.b16 %v163
  %v544 = vunpack.c.l.b16 %v164
  %v545 = vunpack.c.l.b16 %v165
  %v546 = vunpack.c.l.b16 %v166
  %v547 = vunpack.c.l.b16 %v167
  %v548 = vunpack.c.l.b16 %v168
  %v549 = vunpack.c.l.b16 %v169
  %v550 = vunpack.c.l.b16 %v170
  %v551 = vunpack.c.l.b16 %v171
  %v552 = vunpack.c.l.b16 %v172
  %v553 = vunpack.c.l.b16 %v173
  %v554 = vunpack.c.l.b16 %v174
  %v555 = vunpack.c.l.b16 %v175
  %v556 = vunpack.c.l.b16 %v176
  %v557 = vpack.c.b16 %v414, %v413
  %v558 = vpack.c.b16 %v416, %v415
  %v559 = vpack.c.b16 %v418, %v417
  %v560 = vpack.c.b16 %v420, %v419
  %v561 = vpack.c.b16 %v422, %v421
  %v562 = vpack.c.b16 %v424, %v423
  %v563 = vpack.c.b16 %v426, %v425
  %v564 = vpack.c.b16 %v428, %v427
  %v565 = vpack.c.b16 %v430, %v429
  %v566 = vpack.c.b16 %v432, %v431
  %v567 = vpack.c.b16 %v434, %v433
  %v568 = vpack.c.b16 %v436, %v435
  %v569 = vpack.c.b16 %v438, %v437
  %v570 = vpack.c.b16 %v440, %v439
  %v571 = vpack.c.b16 %v442, %v441
  %v572 = vpack.c.b16 %v444, %v443
  %v573 = vpack.c.b16 %v446, %v445
  %v574 = vpack.c.b16 %v448, %v447
  %v575 = vpack.c.b16 %v450, %v449
  %v576 = vpack.c.b16 %v452, %v451
  %v577 = vpack.c.b16 %v454, %v453
  %v578 = vpack.c.b16 %v456, %v455
  %v579 = vpack.c.b16 %v458, %v457
  %v580 = vpack.c.b16 %v460, %v459
  %v581 = vpack.c.b16 %v462, %v461
  %v582 = vpack.c.b16 %v464, %v463
  %v583 = vpack.c.b16 %v466, %v465
  %v584 = vpack.c.b16 %v468, %v467
  %v585 = vpack.c.b16 %v470, %v469
  %v586 = vpack.c.b16 %v472, %v471
  %v587 = vpack.c.b16 %v474, %v473
  %v588 = vpack.c.b16 %v476, %v475
  %v589 = vpack.c.b16 %v478, %v477
  %v590 = vpack.c.b16 %v480, %v479
  %v591 = vpack.c.b16 %v482, %v481
  %v592 = vpack.c.b16 %v484, %v483
  %v593 = vpack.c.b16 %v486, %v485
  %v594 = vpack.c.b16 %v488, %v487
  %v595 = vpack.c.b16 %v490, %v489
  %v596 = vpack.c.b16 %v492, %v491
  %v597 = vpack.c.b16 %v494, %v493
  %v598 = vpack.c.b16 %v496, %v495
  %v599 = vpack.c.b16 %v498, %v497
  %v600 = vpack.c.b16 %v500, %v499
  %v601 = vpack.c.b16 %v502, %v501
  %v602 = vpack.c.b16 %v504, %v503
  %v603 = vpack.c.b16 %v506, %v505
  %v604 = vpack.c.b16 %v508, %v507
  %v605 = vpack.c.b16 %v510, %v509
  %v606 = vpack.c.b16 %v512, %v511
  %v607 = vpack.c.b16 %v514, %v513
  %v608 = vpack.c.b16 %v516, %v515
  %v609 = vpack.c.b16 %v518, %v517
  %v610 = vpack.c.b16 %v520, %v519
  %v611 = vpack.c.b16 %v522, %v521
  %v612 = vpack.c.b16 %v524, %v523
  %v613 = vpack.c.b16 %v526, %v525
  %v614 = vpack.c.b16 %v528, %v527
  %v615 = vpack.c.b16 %v530, %v529
  %v616 = vpack.c.b16 %v532, %v531
  %v617 = vpack.c.b16 %v534, %v533
  %v618 = vpack.c.b16 %v536, %v535
  %v619 = vpack.c.b16 %v538, %v537
  %v620 = vpack.c.b16 %v540, %v539
  %v621 = vpack.c.b16 %v542, %v541
  %v622 = vpack.c.b16 %v544, %v543
  %v623 = vpack.c.b16 %v546, %v545
  %v624 = vpack.c.b16 %v548, %v547
  %v625 = vpack.c.b16 %v550, %v549
  %v626 = vpack.c.b16 %v552, %v551
  %v627 = vpack.c.b16 %v554, %v553
  %v628 = vpack.c.b16 %v556, %v555
  %701 = vmatpush.bf16.msra.mxu0 %v564
  %702 = vmatpush.bf16.msra.mxu0 %v563
  %703 = vmatpush.bf16.msra.mxu0 %v562
  %704 = vmatpush.bf16.msra.mxu0 %v561
  %705 = vmatpush.bf16.msra.mxu0 %v560
  %706 = vmatpush.bf16.msra.mxu0 %v559
  %707 = vmatpush.bf16.msra.mxu0 %v558
  %708 = vmatpush.bf16.msra.mxu0 %v557
  %709 = vmatmul.bf16.gmra.mxu0 %v233
  %v710 = vpop.f32.mrf.mxu0
  %v711 = vadd.f32 0.0, %v710
  %v712 = vpop.f32.mrf.mxu0
  %v713 = vadd.f32 0.0, %v712
  %714 = vmatmul.bf16.gmra.mxu0 %v242
  %v715 = vpop.f32.mrf.mxu0
  %v716 = vadd.f32 0.0, %v715
  %v717 = vpop.f32.mrf.mxu0
  %v718 = vadd.f32 0.0, %v717
  %719 = vdwg.mxu0
  %720 = vmatpush.bf16.msra.mxu0 %v572
  %721 = vmatpush.bf16.msra.mxu0 %v571
  %722 = vmatpush.bf16.msra.mxu0 %v570
  %723 = vmatpush.bf16.msra.mxu0 %v569
  %724 = vmatpush.bf16.msra.mxu0 %v568
  %725 = vmatpush.bf16.msra.mxu0 %v567
  %726 = vmatpush.bf16.msra.mxu0 %v566
  %727 = vmatpush.bf16.msra.mxu0 %v565
  %728 = vmatmul.bf16.gmra.mxu0 %v234
  %v729 = vpop.f32.mrf.mxu0
  %v730 = vadd.f32 %v711, %v729
  %v731 = vpop.f32.mrf.mxu0
  %v732 = vadd.f32 %v713, %v731
  %733 = vmatmul.bf16.gmra.mxu0 %v243
  %v734 = vpop.f32.mrf.mxu0
  %v735 = vadd.f32 %v716, %v734
  %v736 = vpop.f32.mrf.mxu0
  %v737 = vadd.f32 %v718, %v736
  %738 = vdwg.mxu0
  %739 = vmatpush.bf16.msra.mxu0 %v580
  %740 = vmatpush.bf16.msra.mxu0 %v579
  %741 = vmatpush.bf16.msra.mxu0 %v578
  %742 = vmatpush.bf16.msra.mxu0 %v577
  %743 = vmatpush.bf16.msra.mxu0 %v576
  %744 = vmatpush.bf16.msra.mxu0 %v575
  %745 = vmatpush.bf16.msra.mxu0 %v574
  %746 = vmatpush.bf16.msra.mxu0 %v573
  %747 = vmatmul.bf16.gmra.mxu0 %v235
  %v748 = vpop.f32.mrf.mxu0
  %v749 = vadd.f32 %v730, %v748
  %v750 = vpop.f32.mrf.mxu0
  %v751 = vadd.f32 %v732, %v750
  %752 = vmatmul.bf16.gmra.mxu0 %v244
  %v753 = vpop.f32.mrf.mxu0
  %v754 = vadd.f32 %v735, %v753
  %v755 = vpop.f32.mrf.mxu0
  %v756 = vadd.f32 %v737, %v755
  %757 = vdwg.mxu0
  %758 = vmatpush.bf16.msra.mxu0 %v588
  %759 = vmatpush.bf16.msra.mxu0 %v587
  %760 = vmatpush.bf16.msra.mxu0 %v586
  %761 = vmatpush.bf16.msra.mxu0 %v585
  %762 = vmatpush.bf16.msra.mxu0 %v584
  %763 = vmatpush.bf16.msra.mxu0 %v583
  %764 = vmatpush.bf16.msra.mxu0 %v582
  %765 = vmatpush.bf16.msra.mxu0 %v581
  %766 = vmatmul.bf16.gmra.mxu0 %v236
  %v767 = vpop.f32.mrf.mxu0
  %v768 = vadd.f32 %v749, %v767
  %v769 = vpop.f32.mrf.mxu0
  %v770 = vadd.f32 %v751, %v769
  %771 = vmatmul.bf16.gmra.mxu0 %v245
  %v772 = vpop.f32.mrf.mxu0
  %v773 = vadd.f32 %v754, %v772
  %v774 = vpop.f32.mrf.mxu0
  %v775 = vadd.f32 %v756, %v774
  %776 = vdwg.mxu0
  %777 = vmatpush.bf16.msra.mxu0 %v596
  %778 = vmatpush.bf16.msra.mxu0 %v595
  %779 = vmatpush.bf16.msra.mxu0 %v594
  %780 = vmatpush.bf16.msra.mxu0 %v593
  %781 = vmatpush.bf16.msra.mxu0 %v592
  %782 = vmatpush.bf16.msra.mxu0 %v591
  %783 = vmatpush.bf16.msra.mxu0 %v590
  %784 = vmatpush.bf16.msra.mxu0 %v589
  %785 = vmatmul.bf16.gmra.mxu0 %v237
  %v786 = vpop.f32.mrf.mxu0
  %v787 = vadd.f32 %v768, %v786
  %v788 = vpop.f32.mrf.mxu0
  %v789 = vadd.f32 %v770, %v788
  %790 = vmatmul.bf16.gmra.mxu0 %v246
  %v791 = vpop.f32.mrf.mxu0
  %v792 = vadd.f32 %v773, %v791
  %v793 = vpop.f32.mrf.mxu0
  %v794 = vadd.f32 %v775, %v793
  %795 = vdwg.mxu0
  %796 = vmatpush.bf16.msra.mxu0 %v604
  %797 = vmatpush.bf16.msra.mxu0 %v603
  %798 = vmatpush.bf16.msra.mxu0 %v602
  %799 = vmatpush.bf16.msra.mxu0 %v601
  %800 = vmatpush.bf16.msra.mxu0 %v600
  %801 = vmatpush.bf16.msra.mxu0 %v599
  %802 = vmatpush.bf16.msra.mxu0 %v598
  %803 = vmatpush.bf16.msra.mxu0 %v597
  %804 = vmatmul.bf16.gmra.mxu0 %v238
  %v805 = vpop.f32.mrf.mxu0
  %v806 = vadd.f32 %v787, %v805
  %v807 = vpop.f32.mrf.mxu0
  %v808 = vadd.f32 %v789, %v807
  %809 = vmatmul.bf16.gmra.mxu0 %v247
  %v810 = vpop.f32.mrf.mxu0
  %v811 = vadd.f32 %v792, %v810
  %v812 = vpop.f32.mrf.mxu0
  %v813 = vadd.f32 %v794, %v812
  %814 = vdwg.mxu0
  %815 = vmatpush.bf16.msra.mxu0 %v612
  %816 = vmatpush.bf16.msra.mxu0 %v611
  %817 = vmatpush.bf16.msra.mxu0 %v610
  %818 = vmatpush.bf16.msra.mxu0 %v609
  %819 = vmatpush.bf16.msra.mxu0 %v608
  %820 = vmatpush.bf16.msra.mxu0 %v607
  %821 = vmatpush.bf16.msra.mxu0 %v606
  %822 = vmatpush.bf16.msra.mxu0 %v605
  %823 = vmatmul.bf16.gmra.mxu0 %v239
  %v824 = vpop.f32.mrf.mxu0
  %v825 = vadd.f32 %v806, %v824
  %v826 = vpop.f32.mrf.mxu0
  %v827 = vadd.f32 %v808, %v826
  %828 = vmatmul.bf16.gmra.mxu0 %v248
  %v829 = vpop.f32.mrf.mxu0
  %v830 = vadd.f32 %v811, %v829
  %v831 = vpop.f32.mrf.mxu0
  %v832 = vadd.f32 %v813, %v831
  %833 = vdwg.mxu0
  %834 = vmatpush.bf16.msra.mxu0 %v620
  %835 = vmatpush.bf16.msra.mxu0 %v619
  %836 = vmatpush.bf16.msra.mxu0 %v618
  %837 = vmatpush.bf16.msra.mxu0 %v617
  %838 = vmatpush.bf16.msra.mxu0 %v616
  %839 = vmatpush.bf16.msra.mxu0 %v615
  %840 = vmatpush.bf16.msra.mxu0 %v614
  %841 = vmatpush.bf16.msra.mxu0 %v613
  %842 = vmatmul.bf16.gmra.mxu0 %v240
  %v843 = vpop.f32.mrf.mxu0
  %v844 = vadd.f32 %v825, %v843
  %v845 = vpop.f32.mrf.mxu0
  %v846 = vadd.f32 %v827, %v845
  %847 = vmatmul.bf16.gmra.mxu0 %v249
  %v848 = vpop.f32.mrf.mxu0
  %v849 = vadd.f32 %v830, %v848
  %v850 = vpop.f32.mrf.mxu0
  %v851 = vadd.f32 %v832, %v850
  %852 = vdwg.mxu0
  %853 = vmatpush.bf16.msra.mxu0 %v628
  %854 = vmatpush.bf16.msra.mxu0 %v627
  %855 = vmatpush.bf16.msra.mxu0 %v626
  %856 = vmatpush.bf16.msra.mxu0 %v625
  %857 = vmatpush.bf16.msra.mxu0 %v624
  %858 = vmatpush.bf16.msra.mxu0 %v623
  %859 = vmatpush.bf16.msra.mxu0 %v622
  %860 = vmatpush.bf16.msra.mxu0 %v621
  %861 = vmatmul.bf16.gmra.mxu0 %v241
  %v862 = vpop.f32.mrf.mxu0
  %v863 = vadd.f32 %v844, %v862
  %v864 = vpop.f32.mrf.mxu0
  %v865 = vadd.f32 %v846, %v864
  %866 = vmatmul.bf16.gmra.mxu0 %v250
  %v867 = vpop.f32.mrf.mxu0
  %v868 = vadd.f32 %v849, %v867
  %v869 = vpop.f32.mrf.mxu0
  %v870 = vadd.f32 %v851, %v869
  %871 = vdwg.mxu0
  %872 = vst [vmem:[%s2] sm:$0xff] %v863
  %873 = vst [vmem:[%s2 + $0x8] sm:$0xff] %v865
  %874 = vst [vmem:[%s2 + $0x10] sm:$0xff] %v868
  %875 = vst [vmem:[%s2 + $0x18] sm:$0xff] %v870
  %876 = vst [vmem:[%s3] sm:$0xff] 0.0
  %v877 = vadd.f32 %v863, %v865
  %v878 = vadd.f32 %v877, %v868
  %v879 = vadd.f32 %v878, %v870
  %v880 = vrot.slane %v879, 4
  %v881 = vadd.f32 %v879, %v880
  %v882 = vrot.slane %v881, 2
  %v883 = vadd.f32 %v881, %v882
  %v884 = vrot.slane %v883, 1
  %v885 = vadd.f32 %v883, %v884
  %886 = vst [vmem:[%s3] sm:$0x1] %v885
  %v887 = vmul.f32 %v863, %v863
  %v888 = vmul.f32 %v865, %v865
  %v889 = vmul.f32 %v868, %v868
  %v890 = vmul.f32 %v870, %v870
  %v891 = vadd.f32 %v887, %v888
  %v892 = vadd.f32 %v891, %v889
  %v893 = vadd.f32 %v892, %v890
  %v894 = vrot.slane %v893, 4
  %v895 = vadd.f32 %v893, %v894
  %v896 = vrot.slane %v895, 2
  %v897 = vadd.f32 %v895, %v896
  %v898 = vrot.slane %v897, 1
  %v899 = vadd.f32 %v897, %v898
  %900 = vst [vmem:[%s3 + $0x1] sm:$0x1] %v899
  // Predicated region
  $region10: #{forward.19} parent=0 // pred_check
    _
  $region11: #{forward.19} parent=0 // pred_check_branch
    %902 = sbr.rel (0) target = $region13
  $region12: #{forward.19} parent=0 // pred_region
    _
  $region13: #{forward.19} parent=0 // pred_fallthru
    _
  // Predicated region
  $region14: #{forward.19} parent=0 // pred_check
    _
  $region15: #{forward.19} parent=0 // pred_check_branch
    %904 = sbr.rel (0) target = $region17
  $region16: #{forward.19} parent=0 // pred_region
    _
  $region17: #{forward.19} parent=0 // pred_fallthru
    _
  // Predicated region
  $region18: #{forward.19} parent=0 // pred_check
    _
  $region19: #{forward.19} parent=0 // pred_check_branch
    %906 = sbr.rel (0) target = $region21
  $region20: #{forward.19} parent=0 // pred_region
    _
  $region21: #{forward.19} parent=0 // pred_fallthru
    _
  // Predicated region
  $region22: #{forward.19} parent=0 // pred_check
    _
  $region23: #{forward.19} parent=0 // pred_check_branch
    %908 = sbr.rel (0) target = $region25
  $region24: #{forward.19} parent=0 // pred_region
    _
  $region25: #{forward.19} parent=0 // pred_fallthru
    _

// kernel: forward.21
$region0: #{forward.21}
  #allocation0 [shape = 'u32[]', space=smem, size = 0x4, offset = 0x4, fixed_abs, tag = 'smem constant byte address 0x4 - core index']
  #allocation1 [shape = 'u32[72,128]{1,0:T(1,128)}', space=vmem, size = 0x9000, scoped, tag = 'internal scratch']
  %s0 = inlined_call_operand.vmem [shape: bf16[8,512], index: 0, kind: input, shape index: {}]
  %s1 = inlined_call_operand.vmem [shape: bf16[512,128], index: 1, kind: input, shape index: {}]
  %s2 = inlined_call_operand.vmem [shape: f32[8,128], index: 2, kind: output, shape index: {0}]
  %s3 = inlined_call_operand.hbm [shape: f32[8,128], index: 3, kind: output, shape index: {1}]
  %4 = xla_tuple %s2, %s3
  %s5 = sld [smem:[#allocation0]]
  $region26: #{forward.21} parent=0
    _
  %s7 = ssub.s32 1, %s5
  %s8 = scalar_select 0, %s7, %s5
  $region1: #{forward.21} parent=0
    #allocation2 [shape = 'u8[4096]{0}', space=vmem, size = 0x1000, scoped, tag = 'output window, operand 1, single buffered']
    #allocation3 [shape = 's32[1]{0}', space=sflag, size = 0x4, scoped, tag = 'scoped memory for forward.21']
    %9 = vsyncpa [#allocation3], 0
    // Predicated region
    $region2: #{forward.21} parent=1 // pred_check
      _
    $region3: #{forward.21} parent=1 // pred_check_branch
      %11 = sbr.rel (0) target = $region5
    $region4: #{forward.21} parent=1 // pred_region
      _
    $region5: #{forward.21} parent=1 // pred_fallthru
      _
    // Predicated region
    $region6: #{forward.21} parent=1 // pred_check
      _
    $region7: #{forward.21} parent=1 // pred_check_branch
      %13 = sbr.rel (0) target = $region9
    $region8: #{forward.21} parent=1 // pred_region
      _
    $region9: #{forward.21} parent=1 // pred_fallthru
      _
    %v14 = vld [vmem:[%s0] sm:$0xff]
    %v15 = vld [vmem:[%s0 + $0x8] sm:$0xff]
    %v16 = vld [vmem:[%s1] sm:$0xf]
    %v17 = vld [vmem:[%s1 + $0x4] sm:$0xf]
    %v18 = vld [vmem:[%s1 + $0x8] sm:$0xf]
    %v19 = vld [vmem:[%s1 + $0xc] sm:$0xf]
    %v20 = vld [vmem:[%s1 + $0x10] sm:$0xf]
    %v21 = vld [vmem:[%s1 + $0x14] sm:$0xf]
    %v22 = vld [vmem:[%s1 + $0x18] sm:$0xf]
    %v23 = vld [vmem:[%s1 + $0x1c] sm:$0xf]
    %v24 = vld [vmem:[%s1 + $0x20] sm:$0xf]
    %v25 = vld [vmem:[%s1 + $0x24] sm:$0xf]
    %v26 = vld [vmem:[%s1 + $0x28] sm:$0xf]
    %v27 = vld [vmem:[%s1 + $0x2c] sm:$0xf]
    %v28 = vld [vmem:[%s1 + $0x30] sm:$0xf]
    %v29 = vld [vmem:[%s1 + $0x34] sm:$0xf]
    %v30 = vld [vmem:[%s1 + $0x38] sm:$0xf]
    %v31 = vld [vmem:[%s1 + $0x3c] sm:$0xf]
    %v32 = vld [vmem:[%s1 + $0x40] sm:$0xf]
    %v33 = vld [vmem:[%s1 + $0x44] sm:$0xf]
    %v34 = vld [vmem:[%s1 + $0x48] sm:$0xf]
    %v35 = vld [vmem:[%s1 + $0x4c] sm:$0xf]
    %v36 = vld [vmem:[%s1 + $0x50] sm:$0xf]
    %v37 = vld [vmem:[%s1 + $0x54] sm:$0xf]
    %v38 = vld [vmem:[%s1 + $0x58] sm:$0xf]
    %v39 = vld [vmem:[%s1 + $0x5c] sm:$0xf]
    %v40 = vld [vmem:[%s1 + $0x60] sm:$0xf]
    %v41 = vld [vmem:[%s1 + $0x64] sm:$0xf]
    %v42 = vld [vmem:[%s1 + $0x68] sm:$0xf]
    %v43 = vld [vmem:[%s1 + $0x6c] sm:$0xf]
    %v44 = vld [vmem:[%s1 + $0x70] sm:$0xf]
    %v45 = vld [vmem:[%s1 + $0x74] sm:$0xf]
    %v46 = vld [vmem:[%s1 + $0x78] sm:$0xf]
    %v47 = vld [vmem:[%s1 + $0x7c] sm:$0xf]
    %v48 = vld [vmem:[%s1 + $0x80] sm:$0xf]
    %v49 = vld [vmem:[%s1 + $0x84] sm:$0xf]
    %v50 = vld [vmem:[%s1 + $0x88] sm:$0xf]
    %v51 = vld [vmem:[%s1 + $0x8c] sm:$0xf]
    %v52 = vld [vmem:[%s1 + $0x90] sm:$0xf]
    %v53 = vld [vmem:[%s1 + $0x94] sm:$0xf]
    %v54 = vld [vmem:[%s1 + $0x98] sm:$0xf]
    %v55 = vld [vmem:[%s1 + $0x9c] sm:$0xf]
    %v56 = vld [vmem:[%s1 + $0xa0] sm:$0xf]
    %v57 = vld [vmem:[%s1 + $0xa4] sm:$0xf]
    %v58 = vld [vmem:[%s1 + $0xa8] sm:$0xf]
    %v59 = vld [vmem:[%s1 + $0xac] sm:$0xf]
    %v60 = vld [vmem:[%s1 + $0xb0] sm:$0xf]
    %v61 = vld [vmem:[%s1 + $0xb4] sm:$0xf]
    %v62 = vld [vmem:[%s1 + $0xb8] sm:$0xf]
    %v63 = vld [vmem:[%s1 + $0xbc] sm:$0xf]
    %v64 = vld [vmem:[%s1 + $0xc0] sm:$0xf]
    %v65 = vld [vmem:[%s1 + $0xc4] sm:$0xf]
    %v66 = vld [vmem:[%s1 + $0xc8] sm:$0xf]
    %v67 = vld [vmem:[%s1 + $0xcc] sm:$0xf]
    %v68 = vld [vmem:[%s1 + $0xd0] sm:$0xf]
    %v69 = vld [vmem:[%s1 + $0xd4] sm:$0xf]
    %v70 = vld [vmem:[%s1 + $0xd8] sm:$0xf]
    %v71 = vld [vmem:[%s1 + $0xdc] sm:$0xf]
    %v72 = vld [vmem:[%s1 + $0xe0] sm:$0xf]
    %v73 = vld [vmem:[%s1 + $0xe4] sm:$0xf]
    %v74 = vld [vmem:[%s1 + $0xe8] sm:$0xf]
    %v75 = vld [vmem:[%s1 + $0xec] sm:$0xf]
    %v76 = vld [vmem:[%s1 + $0xf0] sm:$0xf]
    %v77 = vld [vmem:[%s1 + $0xf4] sm:$0xf]
    %v78 = vld [vmem:[%s1 + $0xf8] sm:$0xf]
    %v79 = vld [vmem:[%s1 + $0xfc] sm:$0xf]
    %v82 = vunpack.c.l.b16 %v14
    %v83 = vunpack.c.h.b16 %v14
    %v84 = vunpack.c.l.b16 %v15
    %v85 = vunpack.c.h.b16 %v15
    %v86 = vpack.c.b16 %v82, %v82
    %v87 = vpack.c.b16 %v83, %v83
    %v88 = vpack.c.b16 %v84, %v84
    %v89 = vpack.c.b16 %v85, %v85
    %v158 = vunpack.c.l.b16 %v16
    %v159 = vunpack.c.l.b16 %v17
    %v160 = vunpack.c.l.b16 %v18
    %v161 = vunpack.c.l.b16 %v19
    %v162 = vunpack.c.l.b16 %v20
    %v163 = vunpack.c.l.b16 %v21
    %v164 = vunpack.c.l.b16 %v22
    %v165 = vunpack.c.l.b16 %v23
    %v166 = vunpack.c.l.b16 %v24
    %v167 = vunpack.c.l.b16 %v25
    %v168 = vunpack.c.l.b16 %v26
    %v169 = vunpack.c.l.b16 %v27
    %v170 = vunpack.c.l.b16 %v28
    %v171 = vunpack.c.l.b16 %v29
    %v172 = vunpack.c.l.b16 %v30
    %v173 = vunpack.c.l.b16 %v31
    %v174 = vunpack.c.l.b16 %v32
    %v175 = vunpack.c.l.b16 %v33
    %v176 = vunpack.c.l.b16 %v34
    %v177 = vunpack.c.l.b16 %v35
    %v178 = vunpack.c.l.b16 %v36
    %v179 = vunpack.c.l.b16 %v37
    %v180 = vunpack.c.l.b16 %v38
    %v181 = vunpack.c.l.b16 %v39
    %v182 = vunpack.c.l.b16 %v40
    %v183 = vunpack.c.l.b16 %v41
    %v184 = vunpack.c.l.b16 %v42
    %v185 = vunpack.c.l.b16 %v43
    %v186 = vunpack.c.l.b16 %v44
    %v187 = vunpack.c.l.b16 %v45
    %v188 = vunpack.c.l.b16 %v46
    %v189 = vunpack.c.l.b16 %v47
    %v190 = vunpack.c.l.b16 %v48
    %v191 = vunpack.c.l.b16 %v49
    %v192 = vunpack.c.l.b16 %v50
    %v193 = vunpack.c.l.b16 %v51
    %v194 = vunpack.c.l.b16 %v52
    %v195 = vunpack.c.l.b16 %v53
    %v196 = vunpack.c.l.b16 %v54
    %v197 = vunpack.c.l.b16 %v55
    %v198 = vunpack.c.l.b16 %v56
    %v199 = vunpack.c.l.b16 %v57
    %v200 = vunpack.c.l.b16 %v58
    %v201 = vunpack.c.l.b16 %v59
    %v202 = vunpack.c.l.b16 %v60
    %v203 = vunpack.c.l.b16 %v61
    %v204 = vunpack.c.l.b16 %v62
    %v205 = vunpack.c.l.b16 %v63
    %v206 = vunpack.c.l.b16 %v64
    %v207 = vunpack.c.l.b16 %v65
    %v208 = vunpack.c.l.b16 %v66
    %v209 = vunpack.c.l.b16 %v67
    %v210 = vunpack.c.l.b16 %v68
    %v211 = vunpack.c.l.b16 %v69
    %v212 = vunpack.c.l.b16 %v70
    %v213 = vunpack.c.l.b16 %v71
    %v214 = vunpack.c.l.b16 %v72
    %v215 = vunpack.c.l.b16 %v73
    %v216 = vunpack.c.l.b16 %v74
    %v217 = vunpack.c.l.b16 %v75
    %v218 = vunpack.c.l.b16 %v76
    %v219 = vunpack.c.l.b16 %v77
    %v220 = vunpack.c.l.b16 %v78
    %v221 = vunpack.c.l.b16 %v79
    %v222 = vpack.c.b16 %v159, %v158
    %v223 = vpack.c.b16 %v161, %v160
    %v224 = vpack.c.b16 %v163, %v162
    %v225 = vpack.c.b16 %v165, %v164
    %v226 = vpack.c.b16 %v167, %v166
    %v227 = vpack.c.b16 %v169, %v168
    %v228 = vpack.c.b16 %v171, %v170
    %v229 = vpack.c.b16 %v173, %v172
    %v230 = vpack.c.b16 %v175, %v174
    %v231 = vpack.c.b16 %v177, %v176
    %v232 = vpack.c.b16 %v179, %v178
    %v233 = vpack.c.b16 %v181, %v180
    %v234 = vpack.c.b16 %v183, %v182
    %v235 = vpack.c.b16 %v185, %v184
    %v236 = vpack.c.b16 %v187, %v186
    %v237 = vpack.c.b16 %v189, %v188
    %v238 = vpack.c.b16 %v191, %v190
    %v239 = vpack.c.b16 %v193, %v192
    %v240 = vpack.c.b16 %v195, %v194
    %v241 = vpack.c.b16 %v197, %v196
    %v242 = vpack.c.b16 %v199, %v198
    %v243 = vpack.c.b16 %v201, %v200
    %v244 = vpack.c.b16 %v203, %v202
    %v245 = vpack.c.b16 %v205, %v204
    %v246 = vpack.c.b16 %v207, %v206
    %v247 = vpack.c.b16 %v209, %v208
    %v248 = vpack.c.b16 %v211, %v210
    %v249 = vpack.c.b16 %v213, %v212
    %v250 = vpack.c.b16 %v215, %v214
    %v251 = vpack.c.b16 %v217, %v216
    %v252 = vpack.c.b16 %v219, %v218
    %v253 = vpack.c.b16 %v221, %v220
    %286 = vmatpush.bf16.msra.mxu0 %v229
    %287 = vmatpush.bf16.msra.mxu0 %v228
    %288 = vmatpush.bf16.msra.mxu0 %v227
    %289 = vmatpush.bf16.msra.mxu0 %v226
    %290 = vmatpush.bf16.msra.mxu0 %v225
    %291 = vmatpush.bf16.msra.mxu0 %v224
    %292 = vmatpush.bf16.msra.mxu0 %v223
    %293 = vmatpush.bf16.msra.mxu0 %v222
    %294 = vmatmul.bf16.gmra.mxu0 %v86
    %v295 = vpop.f32.mrf.mxu0
    %v296 = vadd.f32 0.0, %v295
    %v297 = vpop.f32.mrf.mxu0
    %298 = vdwg.mxu0
    %299 = vmatpush.bf16.msra.mxu0 %v237
    %300 = vmatpush.bf16.msra.mxu0 %v236
    %301 = vmatpush.bf16.msra.mxu0 %v235
    %302 = vmatpush.bf16.msra.mxu0 %v234
    %303 = vmatpush.bf16.msra.mxu0 %v233
    %304 = vmatpush.bf16.msra.mxu0 %v232
    %305 = vmatpush.bf16.msra.mxu0 %v231
    %306 = vmatpush.bf16.msra.mxu0 %v230
    %307 = vmatmul.bf16.gmra.mxu0 %v87
    %v308 = vpop.f32.mrf.mxu0
    %v309 = vadd.f32 %v296, %v308
    %v310 = vpop.f32.mrf.mxu0
    %311 = vdwg.mxu0
    %312 = vmatpush.bf16.msra.mxu0 %v245
    %313 = vmatpush.bf16.msra.mxu0 %v244
    %314 = vmatpush.bf16.msra.mxu0 %v243
    %315 = vmatpush.bf16.msra.mxu0 %v242
    %316 = vmatpush.bf16.msra.mxu0 %v241
    %317 = vmatpush.bf16.msra.mxu0 %v240
    %318 = vmatpush.bf16.msra.mxu0 %v239
    %319 = vmatpush.bf16.msra.mxu0 %v238
    %320 = vmatmul.bf16.gmra.mxu0 %v88
    %v321 = vpop.f32.mrf.mxu0
    %v322 = vadd.f32 %v309, %v321
    %v323 = vpop.f32.mrf.mxu0
    %324 = vdwg.mxu0
    %325 = vmatpush.bf16.msra.mxu0 %v253
    %326 = vmatpush.bf16.msra.mxu0 %v252
    %327 = vmatpush.bf16.msra.mxu0 %v251
    %328 = vmatpush.bf16.msra.mxu0 %v250
    %329 = vmatpush.bf16.msra.mxu0 %v249
    %330 = vmatpush.bf16.msra.mxu0 %v248
    %331 = vmatpush.bf16.msra.mxu0 %v247
    %332 = vmatpush.bf16.msra.mxu0 %v246
    %333 = vmatmul.bf16.gmra.mxu0 %v89
    %v334 = vpop.f32.mrf.mxu0
    %v335 = vadd.f32 %v322, %v334
    %v336 = vpop.f32.mrf.mxu0
    %337 = vdwg.mxu0
    %v338 = vxor.u32 %v335, 2147483648
    %v339 = vmul.f32 %v338, 1.442695
    %v340 = vpow.pop %v339
    %v341 = vadd.f32 %v340, 1.0
    %v342 = vrcp.pop %v341
    %v343 = vmul.f32 %v341, %v342
    %v344 = vsub.f32 1.0, %v343
    %v345 = vmul.f32 %v342, %v344
    %v346 = vadd.f32 %v342, %v345
    %vm347 = vweird.f32 %v341
    %vm348 = vweird.f32 %v342
    %vm349 = vmor %vm347, %vm348
    %v350 = vsel %vm349, %v342, %v346
    %v351 = vand.u32 2147483647, %v341
    %vm352 = vcmp.eq.f32.partialorder %v351, 8.507059e+37
    %v353 = vand.u32 %v341, 2147483648
    %v354 = vor.u32 1.1754944e-38, %v353
    %v355 = vsel %vm352, %v354, %v350
    %v356 = vmul.f32 1.0, %v355
    %357 = vst [vmem:[%s2] sm:$0xff] %v356
    %358 = vst [vmem:[#allocation2] sm:$0xff] 0.0
    %v359 = vrot.slane %v335, 4
    %v360 = vadd.f32 %v335, %v359
    %v361 = vrot.slane %v360, 2
    %v362 = vadd.f32 %v360, %v361
    %v363 = vrot.slane %v362, 1
    %v364 = vadd.f32 %v362, %v363
    %365 = vst [vmem:[#allocation2] sm:$0x1] %v364
    %v366 = vmul.f32 %v335, %v335
    %v367 = vrot.slane %v366, 4
    %v368 = vadd.f32 %v366, %v367
    %v369 = vrot.slane %v368, 2
    %v370 = vadd.f32 %v368, %v369
    %v371 = vrot.slane %v370, 1
    %v372 = vadd.f32 %v370, %v371
    %373 = vst [vmem:[#allocation2 + $0x1] sm:$0x1] %v372
    // Predicated region
    $region10: #{forward.21} parent=1 // pred_check
      _
    $region11: #{forward.21} parent=1 // pred_check_branch
      %375 = sbr.rel (0) target = $region13
    $region12: #{forward.21} parent=1 // pred_region
      _
    $region13: #{forward.21} parent=1 // pred_fallthru
      _
    // Predicated region
    $region14: #{forward.21} parent=1 // pred_check
      _
    $region15: #{forward.21} parent=1 // pred_check_branch
      %377 = sbr.rel (0) target = $region17
    $region16: #{forward.21} parent=1 // pred_region
      %379 = vsyncadd [#allocation3], 0
      %s381 = sshll.u32 [#allocation2], 4
      %s382 = int_to_ptr.vmem [resolvable:$true] %s381
      %s383 = sshll.u32 %s3, 4
      %s384 = int_to_ptr.hbm [resolvable:$true] %s383
      %386 = dma.vmem_to_hbm [thread:$0]  %s382, 128, %s384, [#allocation3]
    $region17: #{forward.21} parent=1 // pred_fallthru
      _
    // Predicated region
    $region18: #{forward.21} parent=1 // pred_check
      _
    $region19: #{forward.21} parent=1 // pred_check_branch
      %388 = sbr.rel (0) target = $region21
    $region20: #{forward.21} parent=1 // pred_region
      _
    $region21: #{forward.21} parent=1 // pred_fallthru
      _
    // Predicated region
    $region22: #{forward.21} parent=1 // pred_check
      _
    $region23: #{forward.21} parent=1 // pred_check_branch
      %390 = sbr.rel (0) target = $region25
    $region24: #{forward.21} parent=1 // pred_region
      %392 = dma.done [#allocation3], 128
    $region25: #{forward.21} parent=1 // pred_fallthru
      _
    %393 = vsyncpa [#allocation3], 1

</llo_original>
